<compile_context>
chip_gen: v6e
topology: v6e:2x2x1
jax: 0.10.0
libtpu: 0.0.40
codegen_flags: <defaults>
</compile_context>

<pallas_src>
import functools

import jax
import jax.numpy as jnp
from jax.experimental import pallas as pl
from jax.experimental.pallas import tpu as pltpu


# --------------------------------------------------------------------------- #
# Kernel 1: coordinate pooling — ONE streamed read of x, both means emitted.   #
# --------------------------------------------------------------------------- #
def _coord_pool_kernel(x_ref, ehT_ref, ewT_ref, mh_ref, mw_ref, *, inv_w, inv_h):
    # x tile: (rows, H*W) lane-dense.  ehT: (H*W, H) one-hot, ewT: (H*W, W) one-hot.
    # HIGHEST precision keeps the sums f32-exact even though the MXU truncates
    # operands by default; the flops are tiny next to the tile's DMA time.
    x = x_ref[...]
    hp = jax.lax.Precision.HIGHEST
    mh_ref[...] = jnp.dot(x, ehT_ref[...], precision=hp,
                          preferred_element_type=jnp.float32) * inv_w
    mw_ref[...] = jnp.dot(x, ewT_ref[...], precision=hp,
                          preferred_element_type=jnp.float32) * inv_h


def _coord_pool_bcast_kernel(x_ref, mh_ref, mw_ref, *, inv_w, inv_h):
    # Fallback for large feature maps (no one-hots): x tile is (rows, H, W).
    x = x_ref[...]
    mh_ref[...] = jnp.sum(x, axis=2) * inv_w        # mean over W -> (rows, H)
    mw_ref[...] = jnp.sum(x, axis=1) * inv_h        # mean over H -> (rows, W)


# --------------------------------------------------------------------------- #
# Kernel 2: tiny gate computation (1x1 convs + BN + HardSwish + sigmoid).      #
# Single-shot, fully VMEM resident (N*(H+W) x C and mip-sized weights only).   #
# --------------------------------------------------------------------------- #
def _gate_kernel(cat_h_ref, cat_w_ref, w1_ref, b1_ref, gamma_ref, beta_ref,
                 wh_ref, bh_ref, ww_ref, bw_ref, a_h_ref, a_w_ref):
    hp = jax.lax.Precision.HIGHEST
    y_h = jnp.dot(cat_h_ref[...], w1_ref[...], precision=hp,
                  preferred_element_type=jnp.float32) + b1_ref[...]
    y_w = jnp.dot(cat_w_ref[...], w1_ref[...], precision=hp,
                  preferred_element_type=jnp.float32) + b1_ref[...]

    # BatchNorm2d with training-mode batch statistics over the concatenated
    # (N, mip, H+W) activations: biased variance, eps = 1e-5.
    n_rows = y_h.shape[0] + y_w.shape[0]
    mu = (jnp.sum(y_h, axis=0, keepdims=True) +
          jnp.sum(y_w, axis=0, keepdims=True)) / n_rows
    var = (jnp.sum((y_h - mu) ** 2, axis=0, keepdims=True) +
           jnp.sum((y_w - mu) ** 2, axis=0, keepdims=True)) / n_rows
    inv = jax.lax.rsqrt(var + 1e-5)

    def bn_hswish(y):
        y = (y - mu) * inv * gamma_ref[...] + beta_ref[...]
        return y * jnp.clip(y + 3.0, 0.0, 6.0) * (1.0 / 6.0)   # HardSwish

    y_h = bn_hswish(y_h)
    y_w = bn_hswish(y_w)

    a_h_ref[...] = jax.nn.sigmoid(
        jnp.dot(y_h, wh_ref[...], precision=hp,
                preferred_element_type=jnp.float32) + bh_ref[...])
    a_w_ref[...] = jax.nn.sigmoid(
        jnp.dot(y_w, ww_ref[...], precision=hp,
                preferred_element_type=jnp.float32) + bw_ref[...])


# --------------------------------------------------------------------------- #
# Kernel 3: streamed, lane-dense gating pass  out = x * a_h * a_w              #
# --------------------------------------------------------------------------- #
def _apply_gate_kernel(x_ref, a_ref, eh_ref, ew_ref, out_ref, *, two_h):
    # x/out tile: (rows, H*W) lane-dense.
    # a tile: (rows, 2H + 2W) bf16 = [a_h_hi | a_h_lo | a_w_hi | a_w_lo].
    # eh: (2H, H*W) bf16 = [one_hot_h ; one_hot_h] -> one accumulating matmul
    # expands a_h (two limbs summed in the f32 accumulator).  Same for ew.
    a = a_ref[...]
    gh = jnp.dot(a[:, :two_h], eh_ref[...], preferred_element_type=jnp.float32)
    gw = jnp.dot(a[:, two_h:], ew_ref[...], preferred_element_type=jnp.float32)
    out_ref[...] = (x_ref[...] * gh * gw).astype(out_ref.dtype)


def _apply_gate_bcast_kernel(x_ref, ah_ref, aw_ref, out_ref):
    # Fallback for large feature maps: pure VPU broadcast, x tile (rows, H, W).
    out_ref[...] = (x_ref[...] *
                    ah_ref[...][:, :, None] *
                    aw_ref[...][:, None, :]).astype(out_ref.dtype)


# --------------------------------------------------------------------------- #
# Tiling helpers                                                               #
# --------------------------------------------------------------------------- #
def _vmem_budget():
    """(streaming tile byte target, scoped-VMEM limit) by TPU generation."""
    vmem_bytes = 128 * 1024 * 1024
    try:
        info = pltpu.get_tpu_info()
        vmem_bytes = int(getattr(info, "vmem_capacity_bytes", vmem_bytes))
    except Exception:
        pass
    if vmem_bytes <= 64 * 1024 * 1024:
        # v7x-class: 64 MiB physical VMEM.  6 MiB tiles -> 2x(in+out) double
        # buffers (~24 MiB) + expansion temporaries (~12 MiB) fit a 48 MiB limit.
        return 6 << 20, 48 * 1024 * 1024
    # v5e / v6e: 128 MiB physical VMEM; bigger tiles amortize per-step overhead.
    return 8 << 20, 64 * 1024 * 1024


def _pick_block_rows(num_rows, row_bytes, target_bytes):
    """Largest ~(8,128)-aligned row block with an input tile of ~target_bytes."""
    rows = max(1, target_bytes // max(int(row_bytes), 1))
    rows = int(min(rows, num_rows))
    if rows == num_rows:
        return num_rows                      # full extent is always a legal block dim
    rows = max(8, (rows // 8) * 8)           # keep sublane-aligned tiles
    return int(min(rows, num_rows))


def _split_bf16(a):
    """Two-limb bf16 split: hi + lo reproduces a to ~2^-16 relative."""
    hi = a.astype(jnp.bfloat16)
    lo = (a - hi.astype(jnp.float32)).astype(jnp.bfloat16)
    return hi, lo


# --------------------------------------------------------------------------- #
# Forward pass                                                                 #
# --------------------------------------------------------------------------- #
@functools.partial(jax.jit, static_argnames=("block_rows", "use_onehot", "donate_x"))
def ca_att_block(x, w1, b1, gamma, beta, wh, bh, ww, bw, *,
                 block_rows=None, use_onehot=None, donate_x=False):
    """CAAttBlock forward.  x: (N, C, H, W) float32 -> (N, C, H, W) float32."""
    N, C, H, W = x.shape
    NC, HW = N * C, H * W
    dtype = x.dtype
    itemsize = int(jnp.dtype(dtype).itemsize)

    target_bytes, vmem_limit = _vmem_budget()
    if block_rows is None:
        block_rows = _pick_block_rows(NC, HW * itemsize, target_bytes)

    # Path selection: the lane-dense one-hot/MXU path keeps H*W in lanes (best
    # when W << 128) but its one-hot operands are O((H+W)*H*W) resident bytes;
    # guard against blowing VMEM on large feature maps (fatal on v7x's 64 MiB).
    if use_onehot is None:
        onehot_bytes = max((H + W) * HW * itemsize,        # pooling one-hots (f32)
                           2 * (H + W) * HW * 2)           # gating one-hots (bf16)
        use_onehot = (W < 128) and (onehot_bytes <= (8 << 20))

    grid = (pl.cdiv(NC, block_rows),)
    cparams = pltpu.CompilerParams(
        dimension_semantics=("parallel",),   # shards the row grid across v7x's 2 TCs
        vmem_limit_bytes=vmem_limit,
    )

    # ---- pass 1: coordinate pooling (ONE streamed read of x) ---------------- #
    if use_onehot:
        x2d = x.reshape(NC, HW)                               # free view, still NCHW
        col = jnp.arange(HW, dtype=jnp.int32)
        row_h = jnp.arange(H, dtype=jnp.int32)
        row_w = jnp.arange(W, dtype=jnp.int32)
        # Pooling one-hots (transposed, f32): sum over W / over H via MXU.
        ehT = (col[:, None] // W == row_h[None, :]).astype(dtype)   # (HW, H)
        ewT = (col[:, None] % W == row_w[None, :]).astype(dtype)    # (HW, W)
        # Gating one-hots (bf16), duplicated along K for the two-limb packing.
        eh = (col[None, :] // W == row_h[:, None]).astype(jnp.bfloat16)   # (H, HW)
        ew = (col[None, :] % W == row_w[:, None]).astype(jnp.bfloat16)    # (W, HW)
        eh_pack = jnp.concatenate([eh, eh], axis=0)                       # (2H, HW)
        ew_pack = jnp.concatenate([ew, ew], axis=0)                       # (2W, HW)

        pool_cost = pl.CostEstimate(
            flops=int(2 * NC * HW * (H + W)),
            transcendentals=0,
            bytes_accessed=int(itemsize * (NC * HW + NC * (H + W) + (H + W) * HW)),
        )
        x_h, x_w = pl.pallas_call(
            functools.partial(_coord_pool_kernel, inv_w=1.0 / W, inv_h=1.0 / H),
            out_shape=(jax.ShapeDtypeStruct((NC, H), jnp.float32),
                       jax.ShapeDtypeStruct((NC, W), jnp.float32)),
            grid_spec=pltpu.PrefetchScalarGridSpec(
                num_scalar_prefetch=0,
                grid=grid,
                in_specs=[
                    pl.BlockSpec((block_rows, HW), lambda i: (i, 0)),   # x (streamed)
                    pl.BlockSpec((HW, H), lambda i: (0, 0)),            # ehT (resident)
                    pl.BlockSpec((HW, W), lambda i: (0, 0)),            # ewT (resident)
                ],
                out_specs=(pl.BlockSpec((block_rows, H), lambda i: (i, 0)),
                           pl.BlockSpec((block_rows, W), lambda i: (i, 0))),
            ),
            compiler_params=cparams,
            cost_estimate=pool_cost,
        )(x2d, ehT, ewT)
    else:
        x3 = x.reshape(NC, H, W)                              # free view, still NCHW
        x_h, x_w = pl.pallas_call(
            functools.partial(_coord_pool_bcast_kernel, inv_w=1.0 / W, inv_h=1.0 / H),
            out_shape=(jax.ShapeDtypeStruct((NC, H), jnp.float32),
                       jax.ShapeDtypeStruct((NC, W), jnp.float32)),
            grid_spec=pltpu.PrefetchScalarGridSpec(
                num_scalar_prefetch=0,
                grid=grid,
                in_specs=[pl.BlockSpec((block_rows, H, W), lambda i: (i, 0, 0))],
                out_specs=(pl.BlockSpec((block_rows, H), lambda i: (i, 0)),
                           pl.BlockSpec((block_rows, W), lambda i: (i, 0))),
            ),
            compiler_params=cparams,
        )(x3)

    # ---- tiny gate branch (hoisted off the streamed hot path) --------------- #
    # Tiny layout plumbing: rows = (n, position), lanes = channels for 1x1 convs.
    cat_h = x_h.reshape(N, C, H).transpose(0, 2, 1).reshape(N * H, C).astype(dtype)
    cat_w = x_w.reshape(N, C, W).transpose(0, 2, 1).reshape(N * W, C).astype(dtype)

    vmem = pl.BlockSpec(memory_space=pltpu.MemorySpace.VMEM)
    a_h_nhc, a_w_nwc = pl.pallas_call(
        _gate_kernel,
        out_shape=(jax.ShapeDtypeStruct((N * H, C), jnp.float32),
                   jax.ShapeDtypeStruct((N * W, C), jnp.float32)),
        in_specs=[vmem] * 10,
        out_specs=(vmem, vmem),
    )(cat_h, cat_w, w1, b1, gamma, beta, wh, bh, ww, bw)

    # Tiny relayout of the gates to the (N*C, ...) row layout of the streamed pass.
    a_h = a_h_nhc.reshape(N, H, C).transpose(0, 2, 1).reshape(NC, H)
    a_w = a_w_nwc.reshape(N, W, C).transpose(0, 2, 1).reshape(NC, W)

    io_alias = {0: 0} if donate_x else {}

    # ---- pass 2: streamed gating  out = x * a_h * a_w ------------------------ #
    if use_onehot:
        # Two-limb bf16 gate packing -> one bf16 x bf16 -> f32 accumulating
        # matmul per gate (K = 2H / 2W), one small gate DMA per grid step.
        ah_hi, ah_lo = _split_bf16(a_h)
        aw_hi, aw_lo = _split_bf16(a_w)
        a_pack = jnp.concatenate([ah_hi, ah_lo, aw_hi, aw_lo], axis=1)   # (NC, 2H+2W)

        gate_cost = pl.CostEstimate(
            flops=int(2 * NC * HW * 2 * (H + W) + 2 * NC * HW),
            transcendentals=0,
            bytes_accessed=int(itemsize * 2 * NC * HW
                               + 2 * (NC * 2 * (H + W) + 2 * (H + W) * HW)),
        )
        out2d = pl.pallas_call(
            functools.partial(_apply_gate_kernel, two_h=2 * H),
            out_shape=jax.ShapeDtypeStruct((NC, HW), dtype),
            grid_spec=pltpu.PrefetchScalarGridSpec(
                num_scalar_prefetch=0,
                grid=grid,
                in_specs=[
                    pl.BlockSpec((block_rows, HW), lambda i: (i, 0)),          # x
                    pl.BlockSpec((block_rows, 2 * (H + W)), lambda i: (i, 0)),  # gates
                    pl.BlockSpec((2 * H, HW), lambda i: (0, 0)),                # eh_pack
                    pl.BlockSpec((2 * W, HW), lambda i: (0, 0)),                # ew_pack
                ],
                out_specs=pl.BlockSpec((block_rows, HW), lambda i: (i, 0)),
            ),
            compiler_params=cparams,
            cost_estimate=gate_cost,
            input_output_aliases=io_alias,
        )(x2d, a_pack, eh_pack, ew_pack)
        return out2d.reshape(N, C, H, W)

    out3 = pl.pallas_call(
        _apply_gate_bcast_kernel,
        out_shape=jax.ShapeDtypeStruct((NC, H, W), dtype),
        grid_spec=pltpu.PrefetchScalarGridSpec(
            num_scalar_prefetch=0,
            grid=grid,
            in_specs=[
                pl.BlockSpec((block_rows, H, W), lambda i: (i, 0, 0)),
                pl.BlockSpec((block_rows, H), lambda i: (i, 0)),
                pl.BlockSpec((block_rows, W), lambda i: (i, 0)),
            ],
            out_specs=pl.BlockSpec((block_rows, H, W), lambda i: (i, 0, 0)),
        ),
        compiler_params=cparams,
        input_output_aliases=io_alias,
    )(x3, a_h.astype(dtype), a_w.astype(dtype))
    return out3.reshape(N, C, H, W)


# --------------------------------------------------------------------------- #
# Parameters and pure-JAX reference (mirrors the PyTorch forward, NCHW)        #
# --------------------------------------------------------------------------- #
def make_params(key, inp, oup, reduction=32):
    mip = max(8, inp // reduction)
    k1, k2, k3, k4, k5, k6 = jax.random.split(key, 6)
    # conv1: weight (mip, inp, 1, 1) stored transposed as (inp, mip)
    w1 = jax.random.normal(k1, (inp, mip), jnp.float32) * (1.0 / jnp.sqrt(inp))
    b1 = jax.random.normal(k2, (1, mip), jnp.float32) * 0.1
    # BatchNorm2d default init
    gamma = jnp.ones((1, mip), jnp.float32)
    beta = jnp.zeros((1, mip), jnp.float32)
    # conv_h / conv_w: weight (oup, mip, 1, 1) stored transposed as (mip, oup)
    wh = jax.random.normal(k3, (mip, oup), jnp.float32) * (1.0 / jnp.sqrt(mip))
    bh = jax.random.normal(k4, (1, oup), jnp.float32) * 0.1
    ww = jax.random.normal(k5, (mip, oup), jnp.float32) * (1.0 / jnp.sqrt(mip))
    bw = jax.random.normal(k6, (1, oup), jnp.float32) * 0.1
    return w1, b1, gamma, beta, wh, bh, ww, bw


def ca_att_reference(x_nchw, w1, b1, gamma, beta, wh, bh, ww, bw):
    n, c, h, w = x_nchw.shape
    x_h = jnp.mean(x_nchw, axis=3, keepdims=True)                        # (n,c,h,1)
    x_w = jnp.mean(x_nchw, axis=2, keepdims=True).transpose(0, 1, 3, 2)  # (n,c,w,1)
    y = jnp.concatenate([x_h, x_w], axis=2)[..., 0]                      # (n,c,h+w)
    y = jnp.einsum('cm,ncl->nml', w1, y) + b1[0][None, :, None]          # (n,mip,h+w)
    mu = jnp.mean(y, axis=(0, 2), keepdims=True)
    var = jnp.mean((y - mu) ** 2, axis=(0, 2), keepdims=True)
    y = (y - mu) / jnp.sqrt(var + 1e-5) * gamma[0][None, :, None] + beta[0][None, :, None]
    y = y * jnp.clip(y + 3.0, 0.0, 6.0) / 6.0
    y_h, y_w = y[:, :, :h], y[:, :, h:]
    a_h = jax.nn.sigmoid(jnp.einsum('mo,nml->nol', wh, y_h) + bh[0][None, :, None])
    a_w = jax.nn.sigmoid(jnp.einsum('mo,nml->nol', ww, y_w) + bw[0][None, :, None])
    return x_nchw * a_w[:, :, None, :] * a_h[:, :, :, None]


if __name__ == "__main__":
    N, C, H, W = 2, 32, 16, 16   # inp = oup = 32, reduction = 32 -> mip = 8
    key = jax.random.PRNGKey(0)
    kx, kp = jax.random.split(key)
    x = jax.random.normal(kx, (N, C, H, W), jnp.float32)
    params = make_params(kp, inp=C, oup=C, reduction=32)

    ref = ca_att_reference(x, *params)

    # Lane-dense one-hot/MXU path (small feature maps); block_rows=16 exercises
    # a 4-step pipelined grid even at this small demo size.
    out_a = jax.block_until_ready(
        ca_att_block(x, *params, block_rows=16, use_onehot=True))
    # Broadcast fallback path (large-feature-map guard), exercised for coverage.
    out_b = jax.block_until_ready(
        ca_att_block(x, *params, block_rows=16, use_onehot=False))
    # Fully auto-configured tiling / path selection.
    out_c = jax.block_until_ready(ca_att_block(x, *params))

    for out in (out_a, out_b, out_c):
        assert out.shape == (N, C, H, W)
        assert float(jnp.max(jnp.abs(out - ref))) < 1e-3

    print("KERNEL_OK")
</pallas_src>

<mosaic_0001>
module attributes {stable_mosaic.version = 11 : i64} {
  func.func @_coord_pool_kernel(%arg0: i32, %arg1: memref<16x256xf32, #tpu.memory_space<vmem>>, %arg2: memref<256x16xf32, #tpu.memory_space<vmem>>, %arg3: memref<256x16xf32, #tpu.memory_space<vmem>>, %arg4: memref<16x16xf32, #tpu.memory_space<vmem>>, %arg5: memref<16x16xf32, #tpu.memory_space<vmem>>) attributes {dimension_semantics = [#tpu.dimension_semantics<parallel>], iteration_bounds = array<i64: 4>, scalar_prefetch = 0 : i64, scratch_operands = 0 : i64, tpu.core_type = #tpu.core_type<tc>, window_params = [{transform_indices = @transform_0, window_bounds = array<i64: 16, 256>}, {pipeline_mode = #tpu.pipeline_mode<synchronous>, transform_indices = @transform_1, window_bounds = array<i64: 256, 16>}, {pipeline_mode = #tpu.pipeline_mode<synchronous>, transform_indices = @transform_2, window_bounds = array<i64: 256, 16>}, {transform_indices = @transform_3, window_bounds = array<i64: 16, 16>}, {transform_indices = @transform_4, window_bounds = array<i64: 16, 16>}]} {
    %c0 = arith.constant 0 : index
    %c0_0 = arith.constant 0 : index
    %0 = vector.load %arg1[%c0, %c0_0] : memref<16x256xf32, #tpu.memory_space<vmem>>, vector<16x256xf32>
    %c0_1 = arith.constant 0 : index
    %c0_2 = arith.constant 0 : index
    %1 = vector.load %arg2[%c0_1, %c0_2] : memref<256x16xf32, #tpu.memory_space<vmem>>, vector<256x16xf32>
    %cst = arith.constant dense<0.000000e+00> : vector<16x16xf32>
    %2 = tpu.matmul %0, %1, %cst {dimension_numbers = #tpu.dot_dimension_numbers<[1], [0], [0], [1], [0, 0, 1, 1], [], []>, precision = #tpu.contract_precision<fp32>} : vector<16x256xf32>, vector<256x16xf32>, vector<16x16xf32> -> vector<16x16xf32>
    %cst_3 = arith.constant 6.250000e-02 : f32
    %3 = vector.broadcast %cst_3 : f32 to vector<16x16xf32>
    %4 = arith.mulf %2, %3 : vector<16x16xf32>
    %c0_4 = arith.constant 0 : index
    %c0_5 = arith.constant 0 : index
    %5 = vector.load %arg4[%c0_4, %c0_5] : memref<16x16xf32, #tpu.memory_space<vmem>>, vector<16x16xf32>
    tpu.vector_store %arg4[%c0_4, %c0_5], %4 {strides = array<i32>} : memref<16x16xf32, #tpu.memory_space<vmem>>, vector<16x16xf32>,
    %c0_6 = arith.constant 0 : index
    %c0_7 = arith.constant 0 : index
    %6 = vector.load %arg3[%c0_6, %c0_7] : memref<256x16xf32, #tpu.memory_space<vmem>>, vector<256x16xf32>
    %cst_8 = arith.constant dense<0.000000e+00> : vector<16x16xf32>
    %7 = tpu.matmul %0, %6, %cst_8 {dimension_numbers = #tpu.dot_dimension_numbers<[1], [0], [0], [1], [0, 0, 1, 1], [], []>, precision = #tpu.contract_precision<fp32>} : vector<16x256xf32>, vector<256x16xf32>, vector<16x16xf32> -> vector<16x16xf32>
    %cst_9 = arith.constant 6.250000e-02 : f32
    %8 = vector.broadcast %cst_9 : f32 to vector<16x16xf32>
    %9 = arith.mulf %7, %8 : vector<16x16xf32>
    %c0_10 = arith.constant 0 : index
    %c0_11 = arith.constant 0 : index
    %10 = vector.load %arg5[%c0_10, %c0_11] : memref<16x16xf32, #tpu.memory_space<vmem>>, vector<16x16xf32>
    tpu.vector_store %arg5[%c0_10, %c0_11], %9 {strides = array<i32>} : memref<16x16xf32, #tpu.memory_space<vmem>>, vector<16x16xf32>,
    return
  }
  func.func @transform_0(%arg0: i32) -> (i32, i32) {
    %c0_i32 = arith.constant 0 : i32
    %c0_i32_0 = arith.constant 0 : i32
    return %arg0, %c0_i32 : i32, i32
  }
  func.func @transform_1(%arg0: i32) -> (i32, i32) {
    %c0_i32 = arith.constant 0 : i32
    %c0_i32_0 = arith.constant 0 : i32
    %c0_i32_1 = arith.constant 0 : i32
    return %c0_i32, %c0_i32_0 : i32, i32
  }
  func.func @transform_2(%arg0: i32) -> (i32, i32) {
    %c0_i32 = arith.constant 0 : i32
    %c0_i32_0 = arith.constant 0 : i32
    %c0_i32_1 = arith.constant 0 : i32
    return %c0_i32, %c0_i32_0 : i32, i32
  }
  func.func @transform_3(%arg0: i32) -> (i32, i32) {
    %c0_i32 = arith.constant 0 : i32
    %c0_i32_0 = arith.constant 0 : i32
    return %arg0, %c0_i32 : i32, i32
  }
  func.func @transform_4(%arg0: i32) -> (i32, i32) {
    %c0_i32 = arith.constant 0 : i32
    %c0_i32_0 = arith.constant 0 : i32
    return %arg0, %c0_i32 : i32, i32
  }
}

module attributes {stable_mosaic.version = 11 : i64} {
  func.func @_gate_kernel(%arg0: memref<32x32xf32, #tpu.memory_space<vmem>>, %arg1: memref<32x32xf32, #tpu.memory_space<vmem>>, %arg2: memref<32x8xf32, #tpu.memory_space<vmem>>, %arg3: memref<1x8xf32, #tpu.memory_space<vmem>>, %arg4: memref<1x8xf32, #tpu.memory_space<vmem>>, %arg5: memref<1x8xf32, #tpu.memory_space<vmem>>, %arg6: memref<8x32xf32, #tpu.memory_space<vmem>>, %arg7: memref<1x32xf32, #tpu.memory_space<vmem>>, %arg8: memref<8x32xf32, #tpu.memory_space<vmem>>, %arg9: memref<1x32xf32, #tpu.memory_space<vmem>>, %arg10: memref<32x32xf32, #tpu.memory_space<vmem>>, %arg11: memref<32x32xf32, #tpu.memory_space<vmem>>) attributes {dimension_semantics = [], scalar_prefetch = 0 : i64, scratch_operands = 0 : i64, tpu.core_type = #tpu.core_type<tc>} {
    %c0 = arith.constant 0 : index
    %c0_0 = arith.constant 0 : index
    %0 = vector.load %arg0[%c0, %c0_0] : memref<32x32xf32, #tpu.memory_space<vmem>>, vector<32x32xf32>
    %c0_1 = arith.constant 0 : index
    %c0_2 = arith.constant 0 : index
    %1 = vector.load %arg2[%c0_1, %c0_2] : memref<32x8xf32, #tpu.memory_space<vmem>>, vector<32x8xf32>
    %cst = arith.constant dense<0.000000e+00> : vector<32x8xf32>
    %2 = tpu.matmul %0, %1, %cst {dimension_numbers = #tpu.dot_dimension_numbers<[1], [0], [0], [1], [0, 0, 1, 1], [], []>, precision = #tpu.contract_precision<fp32>} : vector<32x32xf32>, vector<32x8xf32>, vector<32x8xf32> -> vector<32x8xf32>
    %c0_3 = arith.constant 0 : index
    %c0_4 = arith.constant 0 : index
    %3 = vector.load %arg3[%c0_3, %c0_4] : memref<1x8xf32, #tpu.memory_space<vmem>>, vector<1x8xf32>
    %4 = vector.broadcast %3 : vector<1x8xf32> to vector<32x8xf32>
    %5 = arith.addf %2, %4 : vector<32x8xf32>
    %c0_5 = arith.constant 0 : index
    %c0_6 = arith.constant 0 : index
    %6 = vector.load %arg1[%c0_5, %c0_6] : memref<32x32xf32, #tpu.memory_space<vmem>>, vector<32x32xf32>
    %c0_7 = arith.constant 0 : index
    %c0_8 = arith.constant 0 : index
    %7 = vector.load %arg2[%c0_7, %c0_8] : memref<32x8xf32, #tpu.memory_space<vmem>>, vector<32x8xf32>
    %cst_9 = arith.constant dense<0.000000e+00> : vector<32x8xf32>
    %8 = tpu.matmul %6, %7, %cst_9 {dimension_numbers = #tpu.dot_dimension_numbers<[1], [0], [0], [1], [0, 0, 1, 1], [], []>, precision = #tpu.contract_precision<fp32>} : vector<32x32xf32>, vector<32x8xf32>, vector<32x8xf32> -> vector<32x8xf32>
    %c0_10 = arith.constant 0 : index
    %c0_11 = arith.constant 0 : index
    %9 = vector.load %arg3[%c0_10, %c0_11] : memref<1x8xf32, #tpu.memory_space<vmem>>, vector<1x8xf32>
    %10 = vector.broadcast %9 : vector<1x8xf32> to vector<32x8xf32>
    %11 = arith.addf %8, %10 : vector<32x8xf32>
    %cst_12 = arith.constant dense<0.000000e+00> : vector<8xf32>
    %12 = vector.multi_reduction <add>, %5, %cst_12 [0] : vector<32x8xf32> to vector<8xf32>
    %13 = vector.shape_cast %12 : vector<8xf32> to vector<1x8xf32>
    %cst_13 = arith.constant dense<0.000000e+00> : vector<8xf32>
    %14 = vector.multi_reduction <add>, %11, %cst_13 [0] : vector<32x8xf32> to vector<8xf32>
    %15 = vector.shape_cast %14 : vector<8xf32> to vector<1x8xf32>
    %16 = arith.addf %13, %15 : vector<1x8xf32>
    %cst_14 = arith.constant 6.400000e+01 : f32
    %17 = vector.broadcast %cst_14 : f32 to vector<1x8xf32>
    %18 = arith.divf %16, %17 : vector<1x8xf32>
    %19 = vector.broadcast %18 : vector<1x8xf32> to vector<32x8xf32>
    %20 = arith.subf %5, %19 : vector<32x8xf32>
    %21 = arith.mulf %20, %20 : vector<32x8xf32>
    %cst_15 = arith.constant dense<0.000000e+00> : vector<8xf32>
    %22 = vector.multi_reduction <add>, %21, %cst_15 [0] : vector<32x8xf32> to vector<8xf32>
    %23 = vector.shape_cast %22 : vector<8xf32> to vector<1x8xf32>
    %24 = vector.broadcast %18 : vector<1x8xf32> to vector<32x8xf32>
    %25 = arith.subf %11, %24 : vector<32x8xf32>
    %26 = arith.mulf %25, %25 : vector<32x8xf32>
    %cst_16 = arith.constant dense<0.000000e+00> : vector<8xf32>
    %27 = vector.multi_reduction <add>, %26, %cst_16 [0] : vector<32x8xf32> to vector<8xf32>
    %28 = vector.shape_cast %27 : vector<8xf32> to vector<1x8xf32>
    %29 = arith.addf %23, %28 : vector<1x8xf32>
    %cst_17 = arith.constant 6.400000e+01 : f32
    %30 = vector.broadcast %cst_17 : f32 to vector<1x8xf32>
    %31 = arith.divf %29, %30 : vector<1x8xf32>
    %cst_18 = arith.constant 9.99999974E-6 : f32
    %32 = vector.broadcast %cst_18 : f32 to vector<1x8xf32>
    %33 = arith.addf %31, %32 : vector<1x8xf32>
    %34 = math.rsqrt %33 : vector<1x8xf32>
    %35 = vector.broadcast %18 : vector<1x8xf32> to vector<32x8xf32>
    %36 = arith.subf %5, %35 : vector<32x8xf32>
    %37 = vector.broadcast %34 : vector<1x8xf32> to vector<32x8xf32>
    %38 = arith.mulf %36, %37 : vector<32x8xf32>
    %c0_19 = arith.constant 0 : index
    %c0_20 = arith.constant 0 : index
    %39 = vector.load %arg4[%c0_19, %c0_20] : memref<1x8xf32, #tpu.memory_space<vmem>>, vector<1x8xf32>
    %40 = vector.broadcast %39 : vector<1x8xf32> to vector<32x8xf32>
    %41 = arith.mulf %38, %40 : vector<32x8xf32>
    %c0_21 = arith.constant 0 : index
    %c0_22 = arith.constant 0 : index
    %42 = vector.load %arg5[%c0_21, %c0_22] : memref<1x8xf32, #tpu.memory_space<vmem>>, vector<1x8xf32>
    %43 = vector.broadcast %42 : vector<1x8xf32> to vector<32x8xf32>
    %44 = arith.addf %41, %43 : vector<32x8xf32>
    %cst_23 = arith.constant 3.000000e+00 : f32
    %45 = vector.broadcast %cst_23 : f32 to vector<32x8xf32>
    %46 = arith.addf %44, %45 : vector<32x8xf32>
    %cst_24 = arith.constant 0.000000e+00 : f32
    %cst_25 = arith.constant 6.000000e+00 : f32
    %47 = vector.broadcast %cst_24 : f32 to vector<32x8xf32>
    %48 = arith.maximumf %47, %46 : vector<32x8xf32>
    %49 = vector.broadcast %cst_25 : f32 to vector<32x8xf32>
    %50 = arith.minimumf %49, %48 : vector<32x8xf32>
    %51 = arith.mulf %44, %50 : vector<32x8xf32>
    %cst_26 = arith.constant 0.166666672 : f32
    %52 = vector.broadcast %cst_26 : f32 to vector<32x8xf32>
    %53 = arith.mulf %51, %52 : vector<32x8xf32>
    %54 = vector.broadcast %18 : vector<1x8xf32> to vector<32x8xf32>
    %55 = arith.subf %11, %54 : vector<32x8xf32>
    %56 = vector.broadcast %34 : vector<1x8xf32> to vector<32x8xf32>
    %57 = arith.mulf %55, %56 : vector<32x8xf32>
    %c0_27 = arith.constant 0 : index
    %c0_28 = arith.constant 0 : index
    %58 = vector.load %arg4[%c0_27, %c0_28] : memref<1x8xf32, #tpu.memory_space<vmem>>, vector<1x8xf32>
    %59 = vector.broadcast %58 : vector<1x8xf32> to vector<32x8xf32>
    %60 = arith.mulf %57, %59 : vector<32x8xf32>
    %c0_29 = arith.constant 0 : index
    %c0_30 = arith.constant 0 : index
    %61 = vector.load %arg5[%c0_29, %c0_30] : memref<1x8xf32, #tpu.memory_space<vmem>>, vector<1x8xf32>
    %62 = vector.broadcast %61 : vector<1x8xf32> to vector<32x8xf32>
    %63 = arith.addf %60, %62 : vector<32x8xf32>
    %cst_31 = arith.constant 3.000000e+00 : f32
    %64 = vector.broadcast %cst_31 : f32 to vector<32x8xf32>
    %65 = arith.addf %63, %64 : vector<32x8xf32>
    %cst_32 = arith.constant 0.000000e+00 : f32
    %cst_33 = arith.constant 6.000000e+00 : f32
    %66 = vector.broadcast %cst_32 : f32 to vector<32x8xf32>
    %67 = arith.maximumf %66, %65 : vector<32x8xf32>
    %68 = vector.broadcast %cst_33 : f32 to vector<32x8xf32>
    %69 = arith.minimumf %68, %67 : vector<32x8xf32>
    %70 = arith.mulf %63, %69 : vector<32x8xf32>
    %cst_34 = arith.constant 0.166666672 : f32
    %71 = vector.broadcast %cst_34 : f32 to vector<32x8xf32>
    %72 = arith.mulf %70, %71 : vector<32x8xf32>
    %c0_35 = arith.constant 0 : index
    %c0_36 = arith.constant 0 : index
    %73 = vector.load %arg6[%c0_35, %c0_36] : memref<8x32xf32, #tpu.memory_space<vmem>>, vector<8x32xf32>
    %cst_37 = arith.constant dense<0.000000e+00> : vector<32x32xf32>
    %74 = tpu.matmul %53, %73, %cst_37 {dimension_numbers = #tpu.dot_dimension_numbers<[1], [0], [0], [1], [0, 0, 1, 1], [], []>, precision = #tpu.contract_precision<fp32>} : vector<32x8xf32>, vector<8x32xf32>, vector<32x32xf32> -> vector<32x32xf32>
    %c0_38 = arith.constant 0 : index
    %c0_39 = arith.constant 0 : index
    %75 = vector.load %arg7[%c0_38, %c0_39] : memref<1x32xf32, #tpu.memory_space<vmem>>, vector<1x32xf32>
    %76 = vector.broadcast %75 : vector<1x32xf32> to vector<32x32xf32>
    %77 = arith.addf %74, %76 : vector<32x32xf32>
    %78 = arith.negf %77 : vector<32x32xf32>
    %79 = math.exp %78 : vector<32x32xf32>
    %cst_40 = arith.constant 1.000000e+00 : f32
    %80 = vector.broadcast %cst_40 : f32 to vector<32x32xf32>
    %81 = arith.addf %80, %79 : vector<32x32xf32>
    %82 = arith.divf %80, %81 : vector<32x32xf32>
    %c0_41 = arith.constant 0 : index
    %c0_42 = arith.constant 0 : index
    %83 = vector.load %arg10[%c0_41, %c0_42] : memref<32x32xf32, #tpu.memory_space<vmem>>, vector<32x32xf32>
    tpu.vector_store %arg10[%c0_41, %c0_42], %82 {strides = array<i32>} : memref<32x32xf32, #tpu.memory_space<vmem>>, vector<32x32xf32>,
    %c0_43 = arith.constant 0 : index
    %c0_44 = arith.constant 0 : index
    %84 = vector.load %arg8[%c0_43, %c0_44] : memref<8x32xf32, #tpu.memory_space<vmem>>, vector<8x32xf32>
    %cst_45 = arith.constant dense<0.000000e+00> : vector<32x32xf32>
    %85 = tpu.matmul %72, %84, %cst_45 {dimension_numbers = #tpu.dot_dimension_numbers<[1], [0], [0], [1], [0, 0, 1, 1], [], []>, precision = #tpu.contract_precision<fp32>} : vector<32x8xf32>, vector<8x32xf32>, vector<32x32xf32> -> vector<32x32xf32>
    %c0_46 = arith.constant 0 : index
    %c0_47 = arith.constant 0 : index
    %86 = vector.load %arg9[%c0_46, %c0_47] : memref<1x32xf32, #tpu.memory_space<vmem>>, vector<1x32xf32>
    %87 = vector.broadcast %86 : vector<1x32xf32> to vector<32x32xf32>
    %88 = arith.addf %85, %87 : vector<32x32xf32>
    %89 = arith.negf %88 : vector<32x32xf32>
    %90 = math.exp %89 : vector<32x32xf32>
    %cst_48 = arith.constant 1.000000e+00 : f32
    %91 = vector.broadcast %cst_48 : f32 to vector<32x32xf32>
    %92 = arith.addf %91, %90 : vector<32x32xf32>
    %93 = arith.divf %91, %92 : vector<32x32xf32>
    %c0_49 = arith.constant 0 : index
    %c0_50 = arith.constant 0 : index
    %94 = vector.load %arg11[%c0_49, %c0_50] : memref<32x32xf32, #tpu.memory_space<vmem>>, vector<32x32xf32>
    tpu.vector_store %arg11[%c0_49, %c0_50], %93 {strides = array<i32>} : memref<32x32xf32, #tpu.memory_space<vmem>>, vector<32x32xf32>,
    return
  }
}

module attributes {stable_mosaic.version = 11 : i64} {
  func.func @_apply_gate_kernel(%arg0: i32, %arg1: memref<16x256xf32, #tpu.memory_space<vmem>>, %arg2: memref<16x64xbf16, #tpu.memory_space<vmem>>, %arg3: memref<32x256xbf16, #tpu.memory_space<vmem>>, %arg4: memref<32x256xbf16, #tpu.memory_space<vmem>>, %arg5: memref<16x256xf32, #tpu.memory_space<vmem>>) attributes {dimension_semantics = [#tpu.dimension_semantics<parallel>], iteration_bounds = array<i64: 4>, scalar_prefetch = 0 : i64, scratch_operands = 0 : i64, tpu.core_type = #tpu.core_type<tc>, window_params = [{transform_indices = @transform_0, window_bounds = array<i64: 16, 256>}, {transform_indices = @transform_1, window_bounds = array<i64: 16, 64>}, {pipeline_mode = #tpu.pipeline_mode<synchronous>, transform_indices = @transform_2, window_bounds = array<i64: 32, 256>}, {pipeline_mode = #tpu.pipeline_mode<synchronous>, transform_indices = @transform_3, window_bounds = array<i64: 32, 256>}, {transform_indices = @transform_4, window_bounds = array<i64: 16, 256>}]} {
    %c0 = arith.constant 0 : index
    %c0_0 = arith.constant 0 : index
    %0 = vector.load %arg2[%c0, %c0_0] : memref<16x64xbf16, #tpu.memory_space<vmem>>, vector<16x64xbf16>
    %1 = vector.extract_strided_slice %0 {offsets = [0, 0], sizes = [16, 32], strides = [1, 1]} : vector<16x64xbf16> to vector<16x32xbf16>
    %c0_1 = arith.constant 0 : index
    %c0_2 = arith.constant 0 : index
    %2 = vector.load %arg3[%c0_1, %c0_2] : memref<32x256xbf16, #tpu.memory_space<vmem>>, vector<32x256xbf16>
    %cst = arith.constant dense<0.000000e+00> : vector<16x256xf32>
    %3 = tpu.matmul %1, %2, %cst {dimension_numbers = #tpu.dot_dimension_numbers<[1], [0], [0], [1], [0, 0, 1, 1], [], []>} : vector<16x32xbf16>, vector<32x256xbf16>, vector<16x256xf32> -> vector<16x256xf32>
    %4 = vector.extract_strided_slice %0 {offsets = [0, 32], sizes = [16, 32], strides = [1, 1]} : vector<16x64xbf16> to vector<16x32xbf16>
    %c0_3 = arith.constant 0 : index
    %c0_4 = arith.constant 0 : index
    %5 = vector.load %arg4[%c0_3, %c0_4] : memref<32x256xbf16, #tpu.memory_space<vmem>>, vector<32x256xbf16>
    %cst_5 = arith.constant dense<0.000000e+00> : vector<16x256xf32>
    %6 = tpu.matmul %4, %5, %cst_5 {dimension_numbers = #tpu.dot_dimension_numbers<[1], [0], [0], [1], [0, 0, 1, 1], [], []>} : vector<16x32xbf16>, vector<32x256xbf16>, vector<16x256xf32> -> vector<16x256xf32>
    %c0_6 = arith.constant 0 : index
    %c0_7 = arith.constant 0 : index
    %7 = vector.load %arg1[%c0_6, %c0_7] : memref<16x256xf32, #tpu.memory_space<vmem>>, vector<16x256xf32>
    %8 = arith.mulf %7, %3 : vector<16x256xf32>
    %9 = arith.mulf %8, %6 : vector<16x256xf32>
    %c0_8 = arith.constant 0 : index
    %c0_9 = arith.constant 0 : index
    %10 = vector.load %arg5[%c0_8, %c0_9] : memref<16x256xf32, #tpu.memory_space<vmem>>, vector<16x256xf32>
    tpu.vector_store %arg5[%c0_8, %c0_9], %9 {strides = array<i32>} : memref<16x256xf32, #tpu.memory_space<vmem>>, vector<16x256xf32>,
    return
  }
  func.func @transform_0(%arg0: i32) -> (i32, i32) {
    %c0_i32 = arith.constant 0 : i32
    %c0_i32_0 = arith.constant 0 : i32
    return %arg0, %c0_i32 : i32, i32
  }
  func.func @transform_1(%arg0: i32) -> (i32, i32) {
    %c0_i32 = arith.constant 0 : i32
    %c0_i32_0 = arith.constant 0 : i32
    return %arg0, %c0_i32 : i32, i32
  }
  func.func @transform_2(%arg0: i32) -> (i32, i32) {
    %c0_i32 = arith.constant 0 : i32
    %c0_i32_0 = arith.constant 0 : i32
    %c0_i32_1 = arith.constant 0 : i32
    return %c0_i32, %c0_i32_0 : i32, i32
  }
  func.func @transform_3(%arg0: i32) -> (i32, i32) {
    %c0_i32 = arith.constant 0 : i32
    %c0_i32_0 = arith.constant 0 : i32
    %c0_i32_1 = arith.constant 0 : i32
    return %c0_i32, %c0_i32_0 : i32, i32
  }
  func.func @transform_4(%arg0: i32) -> (i32, i32) {
    %c0_i32 = arith.constant 0 : i32
    %c0_i32_0 = arith.constant 0 : i32
    return %arg0, %c0_i32 : i32, i32
  }
}

</mosaic_0001>

<llo_original>
// kernel: ca_att_block.3
$region0: #{ca_att_block.3}
  #allocation0 [shape = 'u32[]', space=smem, size = 0x4, offset = 0x4, fixed_abs, tag = 'smem constant byte address 0x4 - core index']
  #allocation1 [shape = 'u32[144,128]{1,0:T(1,128)}', space=vmem, size = 0x12000, scoped, tag = 'internal scratch']
  %s0 = inlined_call_operand.vmem [shape: f32[64,256], index: 0, kind: input, shape index: {}]
  %s1 = inlined_call_operand.vmem [shape: f32[256,16], index: 1, kind: input, shape index: {}]
  %s2 = inlined_call_operand.vmem [shape: f32[256,16], index: 2, kind: input, shape index: {}]
  %s3 = inlined_call_operand.vmem [shape: f32[64,16], index: 3, kind: output, shape index: {0}]
  %s4 = inlined_call_operand.vmem [shape: f32[64,16], index: 4, kind: output, shape index: {1}]
  %5 = xla_tuple %s3, %s4
  %s6 = sld [smem:[#allocation0]]
  $region53: #{ca_att_block.3} parent=0
    _
  %s8 = ssub.s32 1, %s6
  %s9 = scalar_select 0, %s8, %s6
  loop: start=0, step=1, limit=6
  $region2: #{ca_att_block.3} parent=0 // loop_pre_header
    _
  $region3: #{ca_att_block.3} parent=0 // loop_header
    %s11 = sphi 0, %s15
    %p12 = scmp.ge.s32.totalorder %s11, 6
    %s21 = sphi 0, %s23
    %s24 = sphi 0, %s21
    %s25 = sphi 0, %s24
    %s41 = sphi 0, %s25
    %s45 = sphi 0, %s45
    %s47 = sphi 0, %s45
    %s48 = sphi 0, %s47
    %s62 = sphi 0, %s48
    %s66 = sphi 0, %s66
    %s68 = sphi 0, %s66
    %s69 = sphi 0, %s68
    %s83 = sphi 0, %s69
    %s89 = sphi 0, %s91
    %s92 = sphi 0, %s89
    %s93 = sphi 0, %s92
    %s109 = sphi 0, %s93
    %s115 = sphi 0, %s117
    %s118 = sphi 0, %s115
    %s119 = sphi 0, %s118
    %s135 = sphi 0, %s119
  $region4: #{ca_att_block.3} parent=0 // loop_header_branch
    %14 = sbr.rel (%p12) target = $region8
  $region5: #{ca_att_block.3} parent=0 // loop_body
    %s16 = ssub.s32 %s11, 1
    %s17 = ssub.s32 %s11, 2
    %s18 = sadd.s32 %s11, 1
    %s19 = ssub.s32 %s11, %s18
    %p20 = scmp.eq.s32.totalorder %s19, 0
    %s22 = sadd.s32 %s21, 1
    %s23 = scalar_select %p20, %s21, %s22
    %p26 = pneg %p20
    %p27 = scmp.eq.s32.totalorder %s11, 3
    %p28 = por %p26, %p27
    %p29 = scmp.ne.s32.totalorder %s21, %s24
    %p30 = scmp.eq.s32.totalorder %s11, 0
    %p31 = por %p29, %p30
    %p32 = scmp.ne.s32.totalorder %s21, %s24
    %p33 = scmp.eq.s32.totalorder %s16, 3
    %p34 = por %p32, %p33
    %p35 = scmp.ne.s32.totalorder %s24, %s25
    %p36 = scmp.eq.s32.totalorder %s16, 0
    %p37 = por %p35, %p36
    %p38 = scmp.ne.s32.totalorder %s24, %s25
    %p39 = scmp.eq.s32.totalorder %s17, 3
    %p40 = por %p38, %p39
    %p42 = scmp.ne.s32.totalorder %s25, %s41
    %p43 = scmp.eq.s32.totalorder %s17, 0
    %p44 = por %p42, %p43
    %s46 = sadd.s32 %s45, 1
    %p49 = scmp.eq.s32.totalorder %s11, 3
    %p50 = scmp.ne.s32.totalorder %s45, %s47
    %p51 = scmp.eq.s32.totalorder %s11, 0
    %p52 = por %p50, %p51
    %p53 = scmp.ne.s32.totalorder %s45, %s47
    %p54 = scmp.eq.s32.totalorder %s16, 3
    %p55 = por %p53, %p54
    %p56 = scmp.ne.s32.totalorder %s47, %s48
    %p57 = scmp.eq.s32.totalorder %s16, 0
    %p58 = por %p56, %p57
    %p59 = scmp.ne.s32.totalorder %s47, %s48
    %p60 = scmp.eq.s32.totalorder %s17, 3
    %p61 = por %p59, %p60
    %p63 = scmp.ne.s32.totalorder %s48, %s62
    %p64 = scmp.eq.s32.totalorder %s17, 0
    %p65 = por %p63, %p64
    %s67 = sadd.s32 %s66, 1
    %p70 = scmp.eq.s32.totalorder %s11, 3
    %p71 = scmp.ne.s32.totalorder %s66, %s68
    %p72 = scmp.eq.s32.totalorder %s11, 0
    %p73 = por %p71, %p72
    %p74 = scmp.ne.s32.totalorder %s66, %s68
    %p75 = scmp.eq.s32.totalorder %s16, 3
    %p76 = por %p74, %p75
    %p77 = scmp.ne.s32.totalorder %s68, %s69
    %p78 = scmp.eq.s32.totalorder %s16, 0
    %p79 = por %p77, %p78
    %p80 = scmp.ne.s32.totalorder %s68, %s69
    %p81 = scmp.eq.s32.totalorder %s17, 3
    %p82 = por %p80, %p81
    %p84 = scmp.ne.s32.totalorder %s69, %s83
    %p85 = scmp.eq.s32.totalorder %s17, 0
    %p86 = por %p84, %p85
    %s87 = ssub.s32 %s11, %s18
    %p88 = scmp.eq.s32.totalorder %s87, 0
    %s90 = sadd.s32 %s89, 1
    %s91 = scalar_select %p88, %s89, %s90
    %p94 = pneg %p88
    %p95 = scmp.eq.s32.totalorder %s11, 3
    %p96 = por %p94, %p95
    %p97 = scmp.ne.s32.totalorder %s89, %s92
    %p98 = scmp.eq.s32.totalorder %s11, 0
    %p99 = por %p97, %p98
    %p100 = scmp.ne.s32.totalorder %s89, %s92
    %p101 = scmp.eq.s32.totalorder %s16, 3
    %p102 = por %p100, %p101
    %p103 = scmp.ne.s32.totalorder %s92, %s93
    %p104 = scmp.eq.s32.totalorder %s16, 0
    %p105 = por %p103, %p104
    %p106 = scmp.ne.s32.totalorder %s92, %s93
    %p107 = scmp.eq.s32.totalorder %s17, 3
    %p108 = por %p106, %p107
    %p110 = scmp.ne.s32.totalorder %s93, %s109
    %p111 = scmp.eq.s32.totalorder %s17, 0
    %p112 = por %p110, %p111
    %s113 = ssub.s32 %s11, %s18
    %p114 = scmp.eq.s32.totalorder %s113, 0
    %s116 = sadd.s32 %s115, 1
    %s117 = scalar_select %p114, %s115, %s116
    %p120 = pneg %p114
    %p121 = scmp.eq.s32.totalorder %s11, 3
    %p122 = por %p120, %p121
    %p123 = scmp.ne.s32.totalorder %s115, %s118
    %p124 = scmp.eq.s32.totalorder %s11, 0
    %p125 = por %p123, %p124
    %p126 = scmp.ne.s32.totalorder %s115, %s118
    %p127 = scmp.eq.s32.totalorder %s16, 3
    %p128 = por %p126, %p127
    %p129 = scmp.ne.s32.totalorder %s118, %s119
    %p130 = scmp.eq.s32.totalorder %s16, 0
    %p131 = por %p129, %p130
    %p132 = scmp.ne.s32.totalorder %s118, %s119
    %p133 = scmp.eq.s32.totalorder %s17, 3
    %p134 = por %p132, %p133
    %p136 = scmp.ne.s32.totalorder %s119, %s135
    %p137 = scmp.eq.s32.totalorder %s17, 0
    %p138 = por %p136, %p137
    %p139 = scmp.le.s32.totalorder 1, %s11
    %p140 = scmp.lt.s32.totalorder %s11, 5
    %p141 = pnand %p139, %p140
    %p142 = pneg %p141
    // Predicated region
    $region9: #{ca_att_block.3} parent=5 // pred_check
      _
    $region10: #{ca_att_block.3} parent=5 // pred_check_branch
      %144 = sbr.rel (%p141) target = $region12
    $region11: #{ca_att_block.3} parent=5 // pred_region
      %s145 = ssub.s32 %s11, 1
      // Predicated region
      $region13: #{ca_att_block.3} parent=11 // pred_check
        %p146 = pneg %p58
      $region14: #{ca_att_block.3} parent=11 // pred_check_branch
        %148 = sbr.rel (%p146) target = $region16
      $region15: #{ca_att_block.3} parent=11 // pred_region
        _
      $region16: #{ca_att_block.3} parent=11 // pred_fallthru
        _
      // Predicated region
      $region17: #{ca_att_block.3} parent=11 // pred_check
        %p149 = pneg %p79
      $region18: #{ca_att_block.3} parent=11 // pred_check_branch
        %151 = sbr.rel (%p149) target = $region20
      $region19: #{ca_att_block.3} parent=11 // pred_region
        _
      $region20: #{ca_att_block.3} parent=11 // pred_fallthru
        _
    $region12: #{ca_att_block.3} parent=5 // pred_fallthru
      _
    %p152 = scmp.lt.s32.totalorder %s11, 4
    // Predicated region
    $region21: #{ca_att_block.3} parent=5 // pred_check
      %p153 = pneg %p152
    $region22: #{ca_att_block.3} parent=5 // pred_check_branch
      %155 = sbr.rel (%p153) target = $region24
    $region23: #{ca_att_block.3} parent=5 // pred_region
      // Predicated region
      $region25: #{ca_att_block.3} parent=23 // pred_check
        %p156 = pneg %p31
      $region26: #{ca_att_block.3} parent=23 // pred_check_branch
        %158 = sbr.rel (%p156) target = $region28
      $region27: #{ca_att_block.3} parent=23 // pred_region
        %s159 = smul.u32 2, %s11
        %p160 = scmp.lt.s32.totalorder %s159, 7
        %s161 = scalar_select %p160, %s159, 7
        %s162 = smul.addr %s161, 2
        %s163 = smul.addr %s162, 8
        %s164 = scalar_lea.vmem %s0, %s163
        %s165 = smul.u32 2, %s11
      $region28: #{ca_att_block.3} parent=23 // pred_fallthru
        _
    $region24: #{ca_att_block.3} parent=5 // pred_fallthru
      _
    %p166 = scmp.le.s32.totalorder 1, %s11
    %p167 = scmp.lt.s32.totalorder %s11, 5
    %p168 = pnand %p166, %p167
    %p169 = pneg %p168
    // Predicated region
    $region29: #{ca_att_block.3} parent=5 // pred_check
      _
    $region30: #{ca_att_block.3} parent=5 // pred_check_branch
      %171 = sbr.rel (%p168) target = $region32
    $region31: #{ca_att_block.3} parent=5 // pred_region
      %s172 = ssub.s32 %s11, 1
      %s173 = smul.u32 2, %s16
      %p174 = scmp.lt.s32.totalorder %s173, 7
      %s175 = scalar_select %p174, %s173, 7
      %s176 = smul.addr %s175, 2
      %s177 = smul.addr %s176, 8
      %s178 = scalar_lea.vmem %s0, %s177
      %p179 = pneg %p37
      %p180 = pneg %p34
      %p181 = pneg %p58
      %p182 = pneg %p55
      %p183 = pneg %p79
      %p184 = pneg %p76
      %p185 = pneg %p105
      %p186 = pneg %p102
      %s187 = smul.u32 2, %s16
      %p188 = scmp.lt.s32.totalorder %s187, 7
      %s189 = scalar_select %p188, %s187, 7
      %s190 = smul.addr %s189, 8
      %s191 = scalar_lea.vmem %s3, %s190
      %p192 = pneg %p131
      %p193 = pneg %p128
      %s194 = smul.u32 2, %s16
      %p195 = scmp.lt.s32.totalorder %s194, 7
      %s196 = scalar_select %p195, %s194, 7
      %s197 = smul.addr %s196, 8
      %s198 = scalar_lea.vmem %s4, %s197
      %s199 = smul.u32 2, %s16
      %p200 = scmp.lt.s32.totalorder %s199, 7
      %s201 = scalar_select %p200, %s199, 7
      %s202 = smul.addr %s201, 2
      %s203 = smul.addr %s202, 8
      %s204 = scalar_lea.vmem %s0, %s203
      %s205 = smul.u32 2, %s16
      %s206 = smul.u32 2, %s16
      %p207 = scmp.lt.s32.totalorder %s206, 7
      %s208 = scalar_select %p207, %s206, 7
      %s209 = smul.addr %s208, 8
      %s210 = scalar_lea.vmem %s3, %s209
      %s211 = smul.u32 2, %s16
      %s212 = smul.u32 2, %s16
      %p213 = scmp.lt.s32.totalorder %s212, 7
      %s214 = scalar_select %p213, %s212, 7
      %s215 = smul.addr %s214, 8
      %s216 = scalar_lea.vmem %s4, %s215
      %s217 = smul.u32 2, %s16
      %v218 = vld [vmem:[%s204] sm:$0xff]
      %v219 = vld [vmem:[%s204 + $0x8] sm:$0xff]
      %v220 = vld [vmem:[%s204 + $0x10] sm:$0xff]
      %v221 = vld [vmem:[%s204 + $0x18] sm:$0xff]
      %v222 = vld [vmem:[%s1] sm:$0xff]
      %v223 = vld [vmem:[%s1 + $0x8] sm:$0xff]
      %v224 = vld [vmem:[%s1 + $0x10] sm:$0xff]
      %v225 = vld [vmem:[%s1 + $0x18] sm:$0xff]
      %v226 = vld [vmem:[%s1 + $0x20] sm:$0xff]
      %v227 = vld [vmem:[%s1 + $0x28] sm:$0xff]
      %v228 = vld [vmem:[%s1 + $0x30] sm:$0xff]
      %v229 = vld [vmem:[%s1 + $0x38] sm:$0xff]
      %v230 = vld [vmem:[%s1 + $0x40] sm:$0xff]
      %v231 = vld [vmem:[%s1 + $0x48] sm:$0xff]
      %v232 = vld [vmem:[%s1 + $0x50] sm:$0xff]
      %v233 = vld [vmem:[%s1 + $0x58] sm:$0xff]
      %v234 = vld [vmem:[%s1 + $0x60] sm:$0xff]
      %v235 = vld [vmem:[%s1 + $0x68] sm:$0xff]
      %v236 = vld [vmem:[%s1 + $0x70] sm:$0xff]
      %v237 = vld [vmem:[%s1 + $0x78] sm:$0xff]
      %v238 = vld [vmem:[%s1 + $0x80] sm:$0xff]
      %v239 = vld [vmem:[%s1 + $0x88] sm:$0xff]
      %v240 = vld [vmem:[%s1 + $0x90] sm:$0xff]
      %v241 = vld [vmem:[%s1 + $0x98] sm:$0xff]
      %v242 = vld [vmem:[%s1 + $0xa0] sm:$0xff]
      %v243 = vld [vmem:[%s1 + $0xa8] sm:$0xff]
      %v244 = vld [vmem:[%s1 + $0xb0] sm:$0xff]
      %v245 = vld [vmem:[%s1 + $0xb8] sm:$0xff]
      %v246 = vld [vmem:[%s1 + $0xc0] sm:$0xff]
      %v247 = vld [vmem:[%s1 + $0xc8] sm:$0xff]
      %v248 = vld [vmem:[%s1 + $0xd0] sm:$0xff]
      %v249 = vld [vmem:[%s1 + $0xd8] sm:$0xff]
      %v250 = vld [vmem:[%s1 + $0xe0] sm:$0xff]
      %v251 = vld [vmem:[%s1 + $0xe8] sm:$0xff]
      %v252 = vld [vmem:[%s1 + $0xf0] sm:$0xff]
      %v253 = vld [vmem:[%s1 + $0xf8] sm:$0xff]
      %254 = vmatprep.subr.mxu0 0.0
      %v255 = vand.u32 %v237, 4294901760
      %256 = vmatpush1.msra.mxu0 %v255
      %257 = vmatprep.subr.mxu0 0.0
      %v258 = vand.u32 %v236, 4294901760
      %259 = vmatpush1.msra.mxu0 %v258
      %260 = vmatprep.subr.mxu0 0.0
      %v261 = vand.u32 %v235, 4294901760
      %262 = vmatpush1.msra.mxu0 %v261
      %263 = vmatprep.subr.mxu0 0.0
      %v264 = vand.u32 %v234, 4294901760
      %265 = vmatpush1.msra.mxu0 %v264
      %266 = vmatprep.subr.mxu0 0.0
      %v267 = vand.u32 %v233, 4294901760
      %268 = vmatpush1.msra.mxu0 %v267
      %269 = vmatprep.subr.mxu0 0.0
      %v270 = vand.u32 %v232, 4294901760
      %271 = vmatpush1.msra.mxu0 %v270
      %272 = vmatprep.subr.mxu0 0.0
      %v273 = vand.u32 %v231, 4294901760
      %274 = vmatpush1.msra.mxu0 %v273
      %275 = vmatprep.subr.mxu0 0.0
      %v276 = vand.u32 %v230, 4294901760
      %277 = vmatpush1.msra.mxu0 %v276
      %278 = vmatprep.subr.mxu0 0.0
      %v279 = vand.u32 %v229, 4294901760
      %280 = vmatpush1.msra.mxu0 %v279
      %281 = vmatprep.subr.mxu0 0.0
      %v282 = vand.u32 %v228, 4294901760
      %283 = vmatpush1.msra.mxu0 %v282
      %284 = vmatprep.subr.mxu0 0.0
      %v285 = vand.u32 %v227, 4294901760
      %286 = vmatpush1.msra.mxu0 %v285
      %287 = vmatprep.subr.mxu0 0.0
      %v288 = vand.u32 %v226, 4294901760
      %289 = vmatpush1.msra.mxu0 %v288
      %290 = vmatprep.subr.mxu0 0.0
      %v291 = vand.u32 %v225, 4294901760
      %292 = vmatpush1.msra.mxu0 %v291
      %293 = vmatprep.subr.mxu0 0.0
      %v294 = vand.u32 %v224, 4294901760
      %295 = vmatpush1.msra.mxu0 %v294
      %296 = vmatprep.subr.mxu0 0.0
      %v297 = vand.u32 %v223, 4294901760
      %298 = vmatpush1.msra.mxu0 %v297
      %299 = vmatprep.subr.mxu0 0.0
      %v300 = vand.u32 %v222, 4294901760
      %301 = vmatpush1.msra.mxu0 %v300
      %302 = vmatprep.subr.mxu0 0.0
      %v303 = vand.u32 %v253, 4294901760
      %304 = vmatpush2.msra.mxu0 %v303
      %305 = vmatprep.subr.mxu0 0.0
      %v306 = vand.u32 %v252, 4294901760
      %307 = vmatpush2.msra.mxu0 %v306
      %308 = vmatprep.subr.mxu0 0.0
      %v309 = vand.u32 %v251, 4294901760
      %310 = vmatpush2.msra.mxu0 %v309
      %311 = vmatprep.subr.mxu0 0.0
      %v312 = vand.u32 %v250, 4294901760
      %313 = vmatpush2.msra.mxu0 %v312
      %314 = vmatprep.subr.mxu0 0.0
      %v315 = vand.u32 %v249, 4294901760
      %316 = vmatpush2.msra.mxu0 %v315
      %317 = vmatprep.subr.mxu0 0.0
      %v318 = vand.u32 %v248, 4294901760
      %319 = vmatpush2.msra.mxu0 %v318
      %320 = vmatprep.subr.mxu0 0.0
      %v321 = vand.u32 %v247, 4294901760
      %322 = vmatpush2.msra.mxu0 %v321
      %323 = vmatprep.subr.mxu0 0.0
      %v324 = vand.u32 %v246, 4294901760
      %325 = vmatpush2.msra.mxu0 %v324
      %326 = vmatprep.subr.mxu0 0.0
      %v327 = vand.u32 %v245, 4294901760
      %328 = vmatpush2.msra.mxu0 %v327
      %329 = vmatprep.subr.mxu0 0.0
      %v330 = vand.u32 %v244, 4294901760
      %331 = vmatpush2.msra.mxu0 %v330
      %332 = vmatprep.subr.mxu0 0.0
      %v333 = vand.u32 %v243, 4294901760
      %334 = vmatpush2.msra.mxu0 %v333
      %335 = vmatprep.subr.mxu0 0.0
      %v336 = vand.u32 %v242, 4294901760
      %337 = vmatpush2.msra.mxu0 %v336
      %338 = vmatprep.subr.mxu0 0.0
      %v339 = vand.u32 %v241, 4294901760
      %340 = vmatpush2.msra.mxu0 %v339
      %341 = vmatprep.subr.mxu0 0.0
      %v342 = vand.u32 %v240, 4294901760
      %343 = vmatpush2.msra.mxu0 %v342
      %344 = vmatprep.subr.mxu0 0.0
      %v345 = vand.u32 %v239, 4294901760
      %346 = vmatpush2.msra.mxu0 %v345
      %347 = vmatprep.subr.mxu0 0.0
      %v348 = vand.u32 %v238, 4294901760
      %349 = vmatpush2.msra.mxu0 %v348
      %v350 = vand.u32 %v219, 4294901760
      %v351 = vsub.f32 %v219, %v350
      %v352 = vand.u32 %v351, 4294901760
      %v353 = vsub.f32 %v351, %v352
      %v354 = vand.u32 %v353, 4294901760
      %355 = vmatprep.mubr.f32.mxu0 %v354
      %v356 = vand.u32 %v218, 4294901760
      %v357 = vsub.f32 %v218, %v356
      %v358 = vand.u32 %v357, 4294901760
      %v359 = vsub.f32 %v357, %v358
      %v360 = vand.u32 %v359, 4294901760
      %361 = vmatmul.mubr.f32.gmra.mxu0 %v360
      %v362 = vpop.f32.mrf.mxu0
      %v363 = vadd.f32 0.0, %v362
      %v364 = vpop.f32.mrf.mxu0
      %v365 = vand.u32 %v221, 4294901760
      %v366 = vsub.f32 %v221, %v365
      %v367 = vand.u32 %v366, 4294901760
      %v368 = vsub.f32 %v366, %v367
      %v369 = vand.u32 %v368, 4294901760
      %370 = vmatprep.mubr.f32.mxu0 %v369
      %v371 = vand.u32 %v220, 4294901760
      %v372 = vsub.f32 %v220, %v371
      %v373 = vand.u32 %v372, 4294901760
      %v374 = vsub.f32 %v372, %v373
      %v375 = vand.u32 %v374, 4294901760
      %376 = vmatmul.mubr.f32.gmra.mxu0 %v375
      %v377 = vpop.f32.mrf.mxu0
      %v378 = vadd.f32 0.0, %v377
      %v379 = vpop.f32.mrf.mxu0
      %380 = vdwg.mxu0
      %381 = vmatprep.subr.mxu0 0.0
      %v382 = vand.u32 %v237, 4294901760
      %v383 = vsub.f32 %v237, %v382
      %v384 = vand.u32 %v383, 4294901760
      %v385 = vsub.f32 %v383, %v384
      %v386 = vand.u32 %v385, 4294901760
      %387 = vmatpush1.msra.mxu0 %v386
      %388 = vmatprep.subr.mxu0 0.0
      %v389 = vand.u32 %v236, 4294901760
      %v390 = vsub.f32 %v236, %v389
      %v391 = vand.u32 %v390, 4294901760
      %v392 = vsub.f32 %v390, %v391
      %v393 = vand.u32 %v392, 4294901760
      %394 = vmatpush1.msra.mxu0 %v393
      %395 = vmatprep.subr.mxu0 0.0
      %v396 = vand.u32 %v235, 4294901760
      %v397 = vsub.f32 %v235, %v396
      %v398 = vand.u32 %v397, 4294901760
      %v399 = vsub.f32 %v397, %v398
      %v400 = vand.u32 %v399, 4294901760
      %401 = vmatpush1.msra.mxu0 %v400
      %402 = vmatprep.subr.mxu0 0.0
      %v403 = vand.u32 %v234, 4294901760
      %v404 = vsub.f32 %v234, %v403
      %v405 = vand.u32 %v404, 4294901760
      %v406 = vsub.f32 %v404, %v405
      %v407 = vand.u32 %v406, 4294901760
      %408 = vmatpush1.msra.mxu0 %v407
      %409 = vmatprep.subr.mxu0 0.0
      %v410 = vand.u32 %v233, 4294901760
      %v411 = vsub.f32 %v233, %v410
      %v412 = vand.u32 %v411, 4294901760
      %v413 = vsub.f32 %v411, %v412
      %v414 = vand.u32 %v413, 4294901760
      %415 = vmatpush1.msra.mxu0 %v414
      %416 = vmatprep.subr.mxu0 0.0
      %v417 = vand.u32 %v232, 4294901760
      %v418 = vsub.f32 %v232, %v417
      %v419 = vand.u32 %v418, 4294901760
      %v420 = vsub.f32 %v418, %v419
      %v421 = vand.u32 %v420, 4294901760
      %422 = vmatpush1.msra.mxu0 %v421
      %423 = vmatprep.subr.mxu0 0.0
      %v424 = vand.u32 %v231, 4294901760
      %v425 = vsub.f32 %v231, %v424
      %v426 = vand.u32 %v425, 4294901760
      %v427 = vsub.f32 %v425, %v426
      %v428 = vand.u32 %v427, 4294901760
      %429 = vmatpush1.msra.mxu0 %v428
      %430 = vmatprep.subr.mxu0 0.0
      %v431 = vand.u32 %v230, 4294901760
      %v432 = vsub.f32 %v230, %v431
      %v433 = vand.u32 %v432, 4294901760
      %v434 = vsub.f32 %v432, %v433
      %v435 = vand.u32 %v434, 4294901760
      %436 = vmatpush1.msra.mxu0 %v435
      %437 = vmatprep.subr.mxu0 0.0
      %v438 = vand.u32 %v229, 4294901760
      %v439 = vsub.f32 %v229, %v438
      %v440 = vand.u32 %v439, 4294901760
      %v441 = vsub.f32 %v439, %v440
      %v442 = vand.u32 %v441, 4294901760
      %443 = vmatpush1.msra.mxu0 %v442
      %444 = vmatprep.subr.mxu0 0.0
      %v445 = vand.u32 %v228, 4294901760
      %v446 = vsub.f32 %v228, %v445
      %v447 = vand.u32 %v446, 4294901760
      %v448 = vsub.f32 %v446, %v447
      %v449 = vand.u32 %v448, 4294901760
      %450 = vmatpush1.msra.mxu0 %v449
      %451 = vmatprep.subr.mxu0 0.0
      %v452 = vand.u32 %v227, 4294901760
      %v453 = vsub.f32 %v227, %v452
      %v454 = vand.u32 %v453, 4294901760
      %v455 = vsub.f32 %v453, %v454
      %v456 = vand.u32 %v455, 4294901760
      %457 = vmatpush1.msra.mxu0 %v456
      %458 = vmatprep.subr.mxu0 0.0
      %v459 = vand.u32 %v226, 4294901760
      %v460 = vsub.f32 %v226, %v459
      %v461 = vand.u32 %v460, 4294901760
      %v462 = vsub.f32 %v460, %v461
      %v463 = vand.u32 %v462, 4294901760
      %464 = vmatpush1.msra.mxu0 %v463
      %465 = vmatprep.subr.mxu0 0.0
      %v466 = vand.u32 %v225, 4294901760
      %v467 = vsub.f32 %v225, %v466
      %v468 = vand.u32 %v467, 4294901760
      %v469 = vsub.f32 %v467, %v468
      %v470 = vand.u32 %v469, 4294901760
      %471 = vmatpush1.msra.mxu0 %v470
      %472 = vmatprep.subr.mxu0 0.0
      %v473 = vand.u32 %v224, 4294901760
      %v474 = vsub.f32 %v224, %v473
      %v475 = vand.u32 %v474, 4294901760
      %v476 = vsub.f32 %v474, %v475
      %v477 = vand.u32 %v476, 4294901760
      %478 = vmatpush1.msra.mxu0 %v477
      %479 = vmatprep.subr.mxu0 0.0
      %v480 = vand.u32 %v223, 4294901760
      %v481 = vsub.f32 %v223, %v480
      %v482 = vand.u32 %v481, 4294901760
      %v483 = vsub.f32 %v481, %v482
      %v484 = vand.u32 %v483, 4294901760
      %485 = vmatpush1.msra.mxu0 %v484
      %486 = vmatprep.subr.mxu0 0.0
      %v487 = vand.u32 %v222, 4294901760
      %v488 = vsub.f32 %v222, %v487
      %v489 = vand.u32 %v488, 4294901760
      %v490 = vsub.f32 %v488, %v489
      %v491 = vand.u32 %v490, 4294901760
      %492 = vmatpush1.msra.mxu0 %v491
      %493 = vmatprep.subr.mxu0 0.0
      %v494 = vand.u32 %v253, 4294901760
      %v495 = vsub.f32 %v253, %v494
      %v496 = vand.u32 %v495, 4294901760
      %v497 = vsub.f32 %v495, %v496
      %v498 = vand.u32 %v497, 4294901760
      %499 = vmatpush2.msra.mxu0 %v498
      %500 = vmatprep.subr.mxu0 0.0
      %v501 = vand.u32 %v252, 4294901760
      %v502 = vsub.f32 %v252, %v501
      %v503 = vand.u32 %v502, 4294901760
      %v504 = vsub.f32 %v502, %v503
      %v505 = vand.u32 %v504, 4294901760
      %506 = vmatpush2.msra.mxu0 %v505
      %507 = vmatprep.subr.mxu0 0.0
      %v508 = vand.u32 %v251, 4294901760
      %v509 = vsub.f32 %v251, %v508
      %v510 = vand.u32 %v509, 4294901760
      %v511 = vsub.f32 %v509, %v510
      %v512 = vand.u32 %v511, 4294901760
      %513 = vmatpush2.msra.mxu0 %v512
      %514 = vmatprep.subr.mxu0 0.0
      %v515 = vand.u32 %v250, 4294901760
      %v516 = vsub.f32 %v250, %v515
      %v517 = vand.u32 %v516, 4294901760
      %v518 = vsub.f32 %v516, %v517
      %v519 = vand.u32 %v518, 4294901760
      %520 = vmatpush2.msra.mxu0 %v519
      %521 = vmatprep.subr.mxu0 0.0
      %v522 = vand.u32 %v249, 4294901760
      %v523 = vsub.f32 %v249, %v522
      %v524 = vand.u32 %v523, 4294901760
      %v525 = vsub.f32 %v523, %v524
      %v526 = vand.u32 %v525, 4294901760
      %527 = vmatpush2.msra.mxu0 %v526
      %528 = vmatprep.subr.mxu0 0.0
      %v529 = vand.u32 %v248, 4294901760
      %v530 = vsub.f32 %v248, %v529
      %v531 = vand.u32 %v530, 4294901760
      %v532 = vsub.f32 %v530, %v531
      %v533 = vand.u32 %v532, 4294901760
      %534 = vmatpush2.msra.mxu0 %v533
      %535 = vmatprep.subr.mxu0 0.0
      %v536 = vand.u32 %v247, 4294901760
      %v537 = vsub.f32 %v247, %v536
      %v538 = vand.u32 %v537, 4294901760
      %v539 = vsub.f32 %v537, %v538
      %v540 = vand.u32 %v539, 4294901760
      %541 = vmatpush2.msra.mxu0 %v540
      %542 = vmatprep.subr.mxu0 0.0
      %v543 = vand.u32 %v246, 4294901760
      %v544 = vsub.f32 %v246, %v543
      %v545 = vand.u32 %v544, 4294901760
      %v546 = vsub.f32 %v544, %v545
      %v547 = vand.u32 %v546, 4294901760
      %548 = vmatpush2.msra.mxu0 %v547
      %549 = vmatprep.subr.mxu0 0.0
      %v550 = vand.u32 %v245, 4294901760
      %v551 = vsub.f32 %v245, %v550
      %v552 = vand.u32 %v551, 4294901760
      %v553 = vsub.f32 %v551, %v552
      %v554 = vand.u32 %v553, 4294901760
      %555 = vmatpush2.msra.mxu0 %v554
      %556 = vmatprep.subr.mxu0 0.0
      %v557 = vand.u32 %v244, 4294901760
      %v558 = vsub.f32 %v244, %v557
      %v559 = vand.u32 %v558, 4294901760
      %v560 = vsub.f32 %v558, %v559
      %v561 = vand.u32 %v560, 4294901760
      %562 = vmatpush2.msra.mxu0 %v561
      %563 = vmatprep.subr.mxu0 0.0
      %v564 = vand.u32 %v243, 4294901760
      %v565 = vsub.f32 %v243, %v564
      %v566 = vand.u32 %v565, 4294901760
      %v567 = vsub.f32 %v565, %v566
      %v568 = vand.u32 %v567, 4294901760
      %569 = vmatpush2.msra.mxu0 %v568
      %570 = vmatprep.subr.mxu0 0.0
      %v571 = vand.u32 %v242, 4294901760
      %v572 = vsub.f32 %v242, %v571
      %v573 = vand.u32 %v572, 4294901760
      %v574 = vsub.f32 %v572, %v573
      %v575 = vand.u32 %v574, 4294901760
      %576 = vmatpush2.msra.mxu0 %v575
      %577 = vmatprep.subr.mxu0 0.0
      %v578 = vand.u32 %v241, 4294901760
      %v579 = vsub.f32 %v241, %v578
      %v580 = vand.u32 %v579, 4294901760
      %v581 = vsub.f32 %v579, %v580
      %v582 = vand.u32 %v581, 4294901760
      %583 = vmatpush2.msra.mxu0 %v582
      %584 = vmatprep.subr.mxu0 0.0
      %v585 = vand.u32 %v240, 4294901760
      %v586 = vsub.f32 %v240, %v585
      %v587 = vand.u32 %v586, 4294901760
      %v588 = vsub.f32 %v586, %v587
      %v589 = vand.u32 %v588, 4294901760
      %590 = vmatpush2.msra.mxu0 %v589
      %591 = vmatprep.subr.mxu0 0.0
      %v592 = vand.u32 %v239, 4294901760
      %v593 = vsub.f32 %v239, %v592
      %v594 = vand.u32 %v593, 4294901760
      %v595 = vsub.f32 %v593, %v594
      %v596 = vand.u32 %v595, 4294901760
      %597 = vmatpush2.msra.mxu0 %v596
      %598 = vmatprep.subr.mxu0 0.0
      %v599 = vand.u32 %v238, 4294901760
      %v600 = vsub.f32 %v238, %v599
      %v601 = vand.u32 %v600, 4294901760
      %v602 = vsub.f32 %v600, %v601
      %v603 = vand.u32 %v602, 4294901760
      %604 = vmatpush2.msra.mxu0 %v603
      %v605 = vand.u32 %v219, 4294901760
      %606 = vmatprep.mubr.f32.mxu0 %v605
      %v607 = vand.u32 %v218, 4294901760
      %608 = vmatmul.mubr.f32.gmra.mxu0 %v607
      %v609 = vpop.f32.mrf.mxu0
      %v610 = vadd.f32 %v363, %v609
      %v611 = vpop.f32.mrf.mxu0
      %v612 = vand.u32 %v221, 4294901760
      %613 = vmatprep.mubr.f32.mxu0 %v612
      %v614 = vand.u32 %v220, 4294901760
      %615 = vmatmul.mubr.f32.gmra.mxu0 %v614
      %v616 = vpop.f32.mrf.mxu0
      %v617 = vadd.f32 %v378, %v616
      %v618 = vpop.f32.mrf.mxu0
      %619 = vdwg.mxu0
      %620 = vmatprep.subr.mxu0 0.0
      %v621 = vand.u32 %v237, 4294901760
      %v622 = vsub.f32 %v237, %v621
      %623 = vmatpush1.msra.mxu0 %v622
      %624 = vmatprep.subr.mxu0 0.0
      %v625 = vand.u32 %v236, 4294901760
      %v626 = vsub.f32 %v236, %v625
      %627 = vmatpush1.msra.mxu0 %v626
      %628 = vmatprep.subr.mxu0 0.0
      %v629 = vand.u32 %v235, 4294901760
      %v630 = vsub.f32 %v235, %v629
      %631 = vmatpush1.msra.mxu0 %v630
      %632 = vmatprep.subr.mxu0 0.0
      %v633 = vand.u32 %v234, 4294901760
      %v634 = vsub.f32 %v234, %v633
      %635 = vmatpush1.msra.mxu0 %v634
      %636 = vmatprep.subr.mxu0 0.0
      %v637 = vand.u32 %v233, 4294901760
      %v638 = vsub.f32 %v233, %v637
      %639 = vmatpush1.msra.mxu0 %v638
      %640 = vmatprep.subr.mxu0 0.0
      %v641 = vand.u32 %v232, 4294901760
      %v642 = vsub.f32 %v232, %v641
      %643 = vmatpush1.msra.mxu0 %v642
      %644 = vmatprep.subr.mxu0 0.0
      %v645 = vand.u32 %v231, 4294901760
      %v646 = vsub.f32 %v231, %v645
      %647 = vmatpush1.msra.mxu0 %v646
      %648 = vmatprep.subr.mxu0 0.0
      %v649 = vand.u32 %v230, 4294901760
      %v650 = vsub.f32 %v230, %v649
      %651 = vmatpush1.msra.mxu0 %v650
      %652 = vmatprep.subr.mxu0 0.0
      %v653 = vand.u32 %v229, 4294901760
      %v654 = vsub.f32 %v229, %v653
      %655 = vmatpush1.msra.mxu0 %v654
      %656 = vmatprep.subr.mxu0 0.0
      %v657 = vand.u32 %v228, 4294901760
      %v658 = vsub.f32 %v228, %v657
      %659 = vmatpush1.msra.mxu0 %v658
      %660 = vmatprep.subr.mxu0 0.0
      %v661 = vand.u32 %v227, 4294901760
      %v662 = vsub.f32 %v227, %v661
      %663 = vmatpush1.msra.mxu0 %v662
      %664 = vmatprep.subr.mxu0 0.0
      %v665 = vand.u32 %v226, 4294901760
      %v666 = vsub.f32 %v226, %v665
      %667 = vmatpush1.msra.mxu0 %v666
      %668 = vmatprep.subr.mxu0 0.0
      %v669 = vand.u32 %v225, 4294901760
      %v670 = vsub.f32 %v225, %v669
      %671 = vmatpush1.msra.mxu0 %v670
      %672 = vmatprep.subr.mxu0 0.0
      %v673 = vand.u32 %v224, 4294901760
      %v674 = vsub.f32 %v224, %v673
      %675 = vmatpush1.msra.mxu0 %v674
      %676 = vmatprep.subr.mxu0 0.0
      %v677 = vand.u32 %v223, 4294901760
      %v678 = vsub.f32 %v223, %v677
      %679 = vmatpush1.msra.mxu0 %v678
      %680 = vmatprep.subr.mxu0 0.0
      %v681 = vand.u32 %v222, 4294901760
      %v682 = vsub.f32 %v222, %v681
      %683 = vmatpush1.msra.mxu0 %v682
      %684 = vmatprep.subr.mxu0 0.0
      %v685 = vand.u32 %v253, 4294901760
      %v686 = vsub.f32 %v253, %v685
      %687 = vmatpush2.msra.mxu0 %v686
      %688 = vmatprep.subr.mxu0 0.0
      %v689 = vand.u32 %v252, 4294901760
      %v690 = vsub.f32 %v252, %v689
      %691 = vmatpush2.msra.mxu0 %v690
      %692 = vmatprep.subr.mxu0 0.0
      %v693 = vand.u32 %v251, 4294901760
      %v694 = vsub.f32 %v251, %v693
      %695 = vmatpush2.msra.mxu0 %v694
      %696 = vmatprep.subr.mxu0 0.0
      %v697 = vand.u32 %v250, 4294901760
      %v698 = vsub.f32 %v250, %v697
      %699 = vmatpush2.msra.mxu0 %v698
      %700 = vmatprep.subr.mxu0 0.0
      %v701 = vand.u32 %v249, 4294901760
      %v702 = vsub.f32 %v249, %v701
      %703 = vmatpush2.msra.mxu0 %v702
      %704 = vmatprep.subr.mxu0 0.0
      %v705 = vand.u32 %v248, 4294901760
      %v706 = vsub.f32 %v248, %v705
      %707 = vmatpush2.msra.mxu0 %v706
      %708 = vmatprep.subr.mxu0 0.0
      %v709 = vand.u32 %v247, 4294901760
      %v710 = vsub.f32 %v247, %v709
      %711 = vmatpush2.msra.mxu0 %v710
      %712 = vmatprep.subr.mxu0 0.0
      %v713 = vand.u32 %v246, 4294901760
      %v714 = vsub.f32 %v246, %v713
      %715 = vmatpush2.msra.mxu0 %v714
      %716 = vmatprep.subr.mxu0 0.0
      %v717 = vand.u32 %v245, 4294901760
      %v718 = vsub.f32 %v245, %v717
      %719 = vmatpush2.msra.mxu0 %v718
      %720 = vmatprep.subr.mxu0 0.0
      %v721 = vand.u32 %v244, 4294901760
      %v722 = vsub.f32 %v244, %v721
      %723 = vmatpush2.msra.mxu0 %v722
      %724 = vmatprep.subr.mxu0 0.0
      %v725 = vand.u32 %v243, 4294901760
      %v726 = vsub.f32 %v243, %v725
      %727 = vmatpush2.msra.mxu0 %v726
      %728 = vmatprep.subr.mxu0 0.0
      %v729 = vand.u32 %v242, 4294901760
      %v730 = vsub.f32 %v242, %v729
      %731 = vmatpush2.msra.mxu0 %v730
      %732 = vmatprep.subr.mxu0 0.0
      %v733 = vand.u32 %v241, 4294901760
      %v734 = vsub.f32 %v241, %v733
      %735 = vmatpush2.msra.mxu0 %v734
      %736 = vmatprep.subr.mxu0 0.0
      %v737 = vand.u32 %v240, 4294901760
      %v738 = vsub.f32 %v240, %v737
      %739 = vmatpush2.msra.mxu0 %v738
      %740 = vmatprep.subr.mxu0 0.0
      %v741 = vand.u32 %v239, 4294901760
      %v742 = vsub.f32 %v239, %v741
      %743 = vmatpush2.msra.mxu0 %v742
      %744 = vmatprep.subr.mxu0 0.0
      %v745 = vand.u32 %v238, 4294901760
      %v746 = vsub.f32 %v238, %v745
      %747 = vmatpush2.msra.mxu0 %v746
      %v748 = vand.u32 %v219, 4294901760
      %v749 = vsub.f32 %v219, %v748
      %750 = vmatprep.mubr.f32.mxu0 %v749
      %v751 = vand.u32 %v218, 4294901760
      %v752 = vsub.f32 %v218, %v751
      %753 = vmatmul.mubr.f32.gmra.mxu0 %v752
      %v754 = vpop.f32.mrf.mxu0
      %v755 = vadd.f32 %v610, %v754
      %v756 = vpop.f32.mrf.mxu0
      %v757 = vand.u32 %v221, 4294901760
      %v758 = vsub.f32 %v221, %v757
      %759 = vmatprep.mubr.f32.mxu0 %v758
      %v760 = vand.u32 %v220, 4294901760
      %v761 = vsub.f32 %v220, %v760
      %762 = vmatmul.mubr.f32.gmra.mxu0 %v761
      %v763 = vpop.f32.mrf.mxu0
      %v764 = vadd.f32 %v617, %v763
      %v765 = vpop.f32.mrf.mxu0
      %766 = vdwg.mxu0
      %767 = vmatprep.subr.mxu0 0.0
      %v768 = vand.u32 %v237, 4294901760
      %769 = vmatpush1.msra.mxu0 %v768
      %770 = vmatprep.subr.mxu0 0.0
      %v771 = vand.u32 %v236, 4294901760
      %772 = vmatpush1.msra.mxu0 %v771
      %773 = vmatprep.subr.mxu0 0.0
      %v774 = vand.u32 %v235, 4294901760
      %775 = vmatpush1.msra.mxu0 %v774
      %776 = vmatprep.subr.mxu0 0.0
      %v777 = vand.u32 %v234, 4294901760
      %778 = vmatpush1.msra.mxu0 %v777
      %779 = vmatprep.subr.mxu0 0.0
      %v780 = vand.u32 %v233, 4294901760
      %781 = vmatpush1.msra.mxu0 %v780
      %782 = vmatprep.subr.mxu0 0.0
      %v783 = vand.u32 %v232, 4294901760
      %784 = vmatpush1.msra.mxu0 %v783
      %785 = vmatprep.subr.mxu0 0.0
      %v786 = vand.u32 %v231, 4294901760
      %787 = vmatpush1.msra.mxu0 %v786
      %788 = vmatprep.subr.mxu0 0.0
      %v789 = vand.u32 %v230, 4294901760
      %790 = vmatpush1.msra.mxu0 %v789
      %791 = vmatprep.subr.mxu0 0.0
      %v792 = vand.u32 %v229, 4294901760
      %793 = vmatpush1.msra.mxu0 %v792
      %794 = vmatprep.subr.mxu0 0.0
      %v795 = vand.u32 %v228, 4294901760
      %796 = vmatpush1.msra.mxu0 %v795
      %797 = vmatprep.subr.mxu0 0.0
      %v798 = vand.u32 %v227, 4294901760
      %799 = vmatpush1.msra.mxu0 %v798
      %800 = vmatprep.subr.mxu0 0.0
      %v801 = vand.u32 %v226, 4294901760
      %802 = vmatpush1.msra.mxu0 %v801
      %803 = vmatprep.subr.mxu0 0.0
      %v804 = vand.u32 %v225, 4294901760
      %805 = vmatpush1.msra.mxu0 %v804
      %806 = vmatprep.subr.mxu0 0.0
      %v807 = vand.u32 %v224, 4294901760
      %808 = vmatpush1.msra.mxu0 %v807
      %809 = vmatprep.subr.mxu0 0.0
      %v810 = vand.u32 %v223, 4294901760
      %811 = vmatpush1.msra.mxu0 %v810
      %812 = vmatprep.subr.mxu0 0.0
      %v813 = vand.u32 %v222, 4294901760
      %814 = vmatpush1.msra.mxu0 %v813
      %815 = vmatprep.subr.mxu0 0.0
      %v816 = vand.u32 %v253, 4294901760
      %817 = vmatpush2.msra.mxu0 %v816
      %818 = vmatprep.subr.mxu0 0.0
      %v819 = vand.u32 %v252, 4294901760
      %820 = vmatpush2.msra.mxu0 %v819
      %821 = vmatprep.subr.mxu0 0.0
      %v822 = vand.u32 %v251, 4294901760
      %823 = vmatpush2.msra.mxu0 %v822
      %824 = vmatprep.subr.mxu0 0.0
      %v825 = vand.u32 %v250, 4294901760
      %826 = vmatpush2.msra.mxu0 %v825
      %827 = vmatprep.subr.mxu0 0.0
      %v828 = vand.u32 %v249, 4294901760
      %829 = vmatpush2.msra.mxu0 %v828
      %830 = vmatprep.subr.mxu0 0.0
      %v831 = vand.u32 %v248, 4294901760
      %832 = vmatpush2.msra.mxu0 %v831
      %833 = vmatprep.subr.mxu0 0.0
      %v834 = vand.u32 %v247, 4294901760
      %835 = vmatpush2.msra.mxu0 %v834
      %836 = vmatprep.subr.mxu0 0.0
      %v837 = vand.u32 %v246, 4294901760
      %838 = vmatpush2.msra.mxu0 %v837
      %839 = vmatprep.subr.mxu0 0.0
      %v840 = vand.u32 %v245, 4294901760
      %841 = vmatpush2.msra.mxu0 %v840
      %842 = vmatprep.subr.mxu0 0.0
      %v843 = vand.u32 %v244, 4294901760
      %844 = vmatpush2.msra.mxu0 %v843
      %845 = vmatprep.subr.mxu0 0.0
      %v846 = vand.u32 %v243, 4294901760
      %847 = vmatpush2.msra.mxu0 %v846
      %848 = vmatprep.subr.mxu0 0.0
      %v849 = vand.u32 %v242, 4294901760
      %850 = vmatpush2.msra.mxu0 %v849
      %851 = vmatprep.subr.mxu0 0.0
      %v852 = vand.u32 %v241, 4294901760
      %853 = vmatpush2.msra.mxu0 %v852
      %854 = vmatprep.subr.mxu0 0.0
      %v855 = vand.u32 %v240, 4294901760
      %856 = vmatpush2.msra.mxu0 %v855
      %857 = vmatprep.subr.mxu0 0.0
      %v858 = vand.u32 %v239, 4294901760
      %859 = vmatpush2.msra.mxu0 %v858
      %860 = vmatprep.subr.mxu0 0.0
      %v861 = vand.u32 %v238, 4294901760
      %862 = vmatpush2.msra.mxu0 %v861
      %v863 = vand.u32 %v219, 4294901760
      %v864 = vsub.f32 %v219, %v863
      %v865 = vand.u32 %v864, 4294901760
      %866 = vmatprep.mubr.f32.mxu0 %v865
      %v867 = vand.u32 %v218, 4294901760
      %v868 = vsub.f32 %v218, %v867
      %v869 = vand.u32 %v868, 4294901760
      %870 = vmatmul.mubr.f32.gmra.mxu0 %v869
      %v871 = vpop.f32.mrf.mxu0
      %v872 = vadd.f32 %v755, %v871
      %v873 = vpop.f32.mrf.mxu0
      %v874 = vand.u32 %v221, 4294901760
      %v875 = vsub.f32 %v221, %v874
      %v876 = vand.u32 %v875, 4294901760
      %877 = vmatprep.mubr.f32.mxu0 %v876
      %v878 = vand.u32 %v220, 4294901760
      %v879 = vsub.f32 %v220, %v878
      %v880 = vand.u32 %v879, 4294901760
      %881 = vmatmul.mubr.f32.gmra.mxu0 %v880
      %v882 = vpop.f32.mrf.mxu0
      %v883 = vadd.f32 %v764, %v882
      %v884 = vpop.f32.mrf.mxu0
      %885 = vdwg.mxu0
      %886 = vmatprep.subr.mxu0 0.0
      %v887 = vand.u32 %v237, 4294901760
      %v888 = vsub.f32 %v237, %v887
      %v889 = vand.u32 %v888, 4294901760
      %890 = vmatpush1.msra.mxu0 %v889
      %891 = vmatprep.subr.mxu0 0.0
      %v892 = vand.u32 %v236, 4294901760
      %v893 = vsub.f32 %v236, %v892
      %v894 = vand.u32 %v893, 4294901760
      %895 = vmatpush1.msra.mxu0 %v894
      %896 = vmatprep.subr.mxu0 0.0
      %v897 = vand.u32 %v235, 4294901760
      %v898 = vsub.f32 %v235, %v897
      %v899 = vand.u32 %v898, 4294901760
      %900 = vmatpush1.msra.mxu0 %v899
      %901 = vmatprep.subr.mxu0 0.0
      %v902 = vand.u32 %v234, 4294901760
      %v903 = vsub.f32 %v234, %v902
      %v904 = vand.u32 %v903, 4294901760
      %905 = vmatpush1.msra.mxu0 %v904
      %906 = vmatprep.subr.mxu0 0.0
      %v907 = vand.u32 %v233, 4294901760
      %v908 = vsub.f32 %v233, %v907
      %v909 = vand.u32 %v908, 4294901760
      %910 = vmatpush1.msra.mxu0 %v909
      %911 = vmatprep.subr.mxu0 0.0
      %v912 = vand.u32 %v232, 4294901760
      %v913 = vsub.f32 %v232, %v912
      %v914 = vand.u32 %v913, 4294901760
      %915 = vmatpush1.msra.mxu0 %v914
      %916 = vmatprep.subr.mxu0 0.0
      %v917 = vand.u32 %v231, 4294901760
      %v918 = vsub.f32 %v231, %v917
      %v919 = vand.u32 %v918, 4294901760
      %920 = vmatpush1.msra.mxu0 %v919
      %921 = vmatprep.subr.mxu0 0.0
      %v922 = vand.u32 %v230, 4294901760
      %v923 = vsub.f32 %v230, %v922
      %v924 = vand.u32 %v923, 4294901760
      %925 = vmatpush1.msra.mxu0 %v924
      %926 = vmatprep.subr.mxu0 0.0
      %v927 = vand.u32 %v229, 4294901760
      %v928 = vsub.f32 %v229, %v927
      %v929 = vand.u32 %v928, 4294901760
      %930 = vmatpush1.msra.mxu0 %v929
      %931 = vmatprep.subr.mxu0 0.0
      %v932 = vand.u32 %v228, 4294901760
      %v933 = vsub.f32 %v228, %v932
      %v934 = vand.u32 %v933, 4294901760
      %935 = vmatpush1.msra.mxu0 %v934
      %936 = vmatprep.subr.mxu0 0.0
      %v937 = vand.u32 %v227, 4294901760
      %v938 = vsub.f32 %v227, %v937
      %v939 = vand.u32 %v938, 4294901760
      %940 = vmatpush1.msra.mxu0 %v939
      %941 = vmatprep.subr.mxu0 0.0
      %v942 = vand.u32 %v226, 4294901760
      %v943 = vsub.f32 %v226, %v942
      %v944 = vand.u32 %v943, 4294901760
      %945 = vmatpush1.msra.mxu0 %v944
      %946 = vmatprep.subr.mxu0 0.0
      %v947 = vand.u32 %v225, 4294901760
      %v948 = vsub.f32 %v225, %v947
      %v949 = vand.u32 %v948, 4294901760
      %950 = vmatpush1.msra.mxu0 %v949
      %951 = vmatprep.subr.mxu0 0.0
      %v952 = vand.u32 %v224, 4294901760
      %v953 = vsub.f32 %v224, %v952
      %v954 = vand.u32 %v953, 4294901760
      %955 = vmatpush1.msra.mxu0 %v954
      %956 = vmatprep.subr.mxu0 0.0
      %v957 = vand.u32 %v223, 4294901760
      %v958 = vsub.f32 %v223, %v957
      %v959 = vand.u32 %v958, 4294901760
      %960 = vmatpush1.msra.mxu0 %v959
      %961 = vmatprep.subr.mxu0 0.0
      %v962 = vand.u32 %v222, 4294901760
      %v963 = vsub.f32 %v222, %v962
      %v964 = vand.u32 %v963, 4294901760
      %965 = vmatpush1.msra.mxu0 %v964
      %966 = vmatprep.subr.mxu0 0.0
      %v967 = vand.u32 %v253, 4294901760
      %v968 = vsub.f32 %v253, %v967
      %v969 = vand.u32 %v968, 4294901760
      %970 = vmatpush2.msra.mxu0 %v969
      %971 = vmatprep.subr.mxu0 0.0
      %v972 = vand.u32 %v252, 4294901760
      %v973 = vsub.f32 %v252, %v972
      %v974 = vand.u32 %v973, 4294901760
      %975 = vmatpush2.msra.mxu0 %v974
      %976 = vmatprep.subr.mxu0 0.0
      %v977 = vand.u32 %v251, 4294901760
      %v978 = vsub.f32 %v251, %v977
      %v979 = vand.u32 %v978, 4294901760
      %980 = vmatpush2.msra.mxu0 %v979
      %981 = vmatprep.subr.mxu0 0.0
      %v982 = vand.u32 %v250, 4294901760
      %v983 = vsub.f32 %v250, %v982
      %v984 = vand.u32 %v983, 4294901760
      %985 = vmatpush2.msra.mxu0 %v984
      %986 = vmatprep.subr.mxu0 0.0
      %v987 = vand.u32 %v249, 4294901760
      %v988 = vsub.f32 %v249, %v987
      %v989 = vand.u32 %v988, 4294901760
      %990 = vmatpush2.msra.mxu0 %v989
      %991 = vmatprep.subr.mxu0 0.0
      %v992 = vand.u32 %v248, 4294901760
      %v993 = vsub.f32 %v248, %v992
      %v994 = vand.u32 %v993, 4294901760
      %995 = vmatpush2.msra.mxu0 %v994
      %996 = vmatprep.subr.mxu0 0.0
      %v997 = vand.u32 %v247, 4294901760
      %v998 = vsub.f32 %v247, %v997
      %v999 = vand.u32 %v998, 4294901760
      %1000 = vmatpush2.msra.mxu0 %v999
      %1001 = vmatprep.subr.mxu0 0.0
      %v1002 = vand.u32 %v246, 4294901760
      %v1003 = vsub.f32 %v246, %v1002
      %v1004 = vand.u32 %v1003, 4294901760
      %1005 = vmatpush2.msra.mxu0 %v1004
      %1006 = vmatprep.subr.mxu0 0.0
      %v1007 = vand.u32 %v245, 4294901760
      %v1008 = vsub.f32 %v245, %v1007
      %v1009 = vand.u32 %v1008, 4294901760
      %1010 = vmatpush2.msra.mxu0 %v1009
      %1011 = vmatprep.subr.mxu0 0.0
      %v1012 = vand.u32 %v244, 4294901760
      %v1013 = vsub.f32 %v244, %v1012
      %v1014 = vand.u32 %v1013, 4294901760
      %1015 = vmatpush2.msra.mxu0 %v1014
      %1016 = vmatprep.subr.mxu0 0.0
      %v1017 = vand.u32 %v243, 4294901760
      %v1018 = vsub.f32 %v243, %v1017
      %v1019 = vand.u32 %v1018, 4294901760
      %1020 = vmatpush2.msra.mxu0 %v1019
      %1021 = vmatprep.subr.mxu0 0.0
      %v1022 = vand.u32 %v242, 4294901760
      %v1023 = vsub.f32 %v242, %v1022
      %v1024 = vand.u32 %v1023, 4294901760
      %1025 = vmatpush2.msra.mxu0 %v1024
      %1026 = vmatprep.subr.mxu0 0.0
      %v1027 = vand.u32 %v241, 4294901760
      %v1028 = vsub.f32 %v241, %v1027
      %v1029 = vand.u32 %v1028, 4294901760
      %1030 = vmatpush2.msra.mxu0 %v1029
      %1031 = vmatprep.subr.mxu0 0.0
      %v1032 = vand.u32 %v240, 4294901760
      %v1033 = vsub.f32 %v240, %v1032
      %v1034 = vand.u32 %v1033, 4294901760
      %1035 = vmatpush2.msra.mxu0 %v1034
      %1036 = vmatprep.subr.mxu0 0.0
      %v1037 = vand.u32 %v239, 4294901760
      %v1038 = vsub.f32 %v239, %v1037
      %v1039 = vand.u32 %v1038, 4294901760
      %1040 = vmatpush2.msra.mxu0 %v1039
      %1041 = vmatprep.subr.mxu0 0.0
      %v1042 = vand.u32 %v238, 4294901760
      %v1043 = vsub.f32 %v238, %v1042
      %v1044 = vand.u32 %v1043, 4294901760
      %1045 = vmatpush2.msra.mxu0 %v1044
      %v1046 = vand.u32 %v219, 4294901760
      %1047 = vmatprep.mubr.f32.mxu0 %v1046
      %v1048 = vand.u32 %v218, 4294901760
      %1049 = vmatmul.mubr.f32.gmra.mxu0 %v1048
      %v1050 = vpop.f32.mrf.mxu0
      %v1051 = vadd.f32 %v872, %v1050
      %v1052 = vpop.f32.mrf.mxu0
      %v1053 = vand.u32 %v221, 4294901760
      %1054 = vmatprep.mubr.f32.mxu0 %v1053
      %v1055 = vand.u32 %v220, 4294901760
      %1056 = vmatmul.mubr.f32.gmra.mxu0 %v1055
      %v1057 = vpop.f32.mrf.mxu0
      %v1058 = vadd.f32 %v883, %v1057
      %v1059 = vpop.f32.mrf.mxu0
      %1060 = vdwg.mxu0
      %1061 = vmatprep.subr.mxu0 0.0
      %v1062 = vand.u32 %v237, 4294901760
      %1063 = vmatpush1.msra.mxu0 %v1062
      %1064 = vmatprep.subr.mxu0 0.0
      %v1065 = vand.u32 %v236, 4294901760
      %1066 = vmatpush1.msra.mxu0 %v1065
      %1067 = vmatprep.subr.mxu0 0.0
      %v1068 = vand.u32 %v235, 4294901760
      %1069 = vmatpush1.msra.mxu0 %v1068
      %1070 = vmatprep.subr.mxu0 0.0
      %v1071 = vand.u32 %v234, 4294901760
      %1072 = vmatpush1.msra.mxu0 %v1071
      %1073 = vmatprep.subr.mxu0 0.0
      %v1074 = vand.u32 %v233, 4294901760
      %1075 = vmatpush1.msra.mxu0 %v1074
      %1076 = vmatprep.subr.mxu0 0.0
      %v1077 = vand.u32 %v232, 4294901760
      %1078 = vmatpush1.msra.mxu0 %v1077
      %1079 = vmatprep.subr.mxu0 0.0
      %v1080 = vand.u32 %v231, 4294901760
      %1081 = vmatpush1.msra.mxu0 %v1080
      %1082 = vmatprep.subr.mxu0 0.0
      %v1083 = vand.u32 %v230, 4294901760
      %1084 = vmatpush1.msra.mxu0 %v1083
      %1085 = vmatprep.subr.mxu0 0.0
      %v1086 = vand.u32 %v229, 4294901760
      %1087 = vmatpush1.msra.mxu0 %v1086
      %1088 = vmatprep.subr.mxu0 0.0
      %v1089 = vand.u32 %v228, 4294901760
      %1090 = vmatpush1.msra.mxu0 %v1089
      %1091 = vmatprep.subr.mxu0 0.0
      %v1092 = vand.u32 %v227, 4294901760
      %1093 = vmatpush1.msra.mxu0 %v1092
      %1094 = vmatprep.subr.mxu0 0.0
      %v1095 = vand.u32 %v226, 4294901760
      %1096 = vmatpush1.msra.mxu0 %v1095
      %1097 = vmatprep.subr.mxu0 0.0
      %v1098 = vand.u32 %v225, 4294901760
      %1099 = vmatpush1.msra.mxu0 %v1098
      %1100 = vmatprep.subr.mxu0 0.0
      %v1101 = vand.u32 %v224, 4294901760
      %1102 = vmatpush1.msra.mxu0 %v1101
      %1103 = vmatprep.subr.mxu0 0.0
      %v1104 = vand.u32 %v223, 4294901760
      %1105 = vmatpush1.msra.mxu0 %v1104
      %1106 = vmatprep.subr.mxu0 0.0
      %v1107 = vand.u32 %v222, 4294901760
      %1108 = vmatpush1.msra.mxu0 %v1107
      %1109 = vmatprep.subr.mxu0 0.0
      %v1110 = vand.u32 %v253, 4294901760
      %1111 = vmatpush2.msra.mxu0 %v1110
      %1112 = vmatprep.subr.mxu0 0.0
      %v1113 = vand.u32 %v252, 4294901760
      %1114 = vmatpush2.msra.mxu0 %v1113
      %1115 = vmatprep.subr.mxu0 0.0
      %v1116 = vand.u32 %v251, 4294901760
      %1117 = vmatpush2.msra.mxu0 %v1116
      %1118 = vmatprep.subr.mxu0 0.0
      %v1119 = vand.u32 %v250, 4294901760
      %1120 = vmatpush2.msra.mxu0 %v1119
      %1121 = vmatprep.subr.mxu0 0.0
      %v1122 = vand.u32 %v249, 4294901760
      %1123 = vmatpush2.msra.mxu0 %v1122
      %1124 = vmatprep.subr.mxu0 0.0
      %v1125 = vand.u32 %v248, 4294901760
      %1126 = vmatpush2.msra.mxu0 %v1125
      %1127 = vmatprep.subr.mxu0 0.0
      %v1128 = vand.u32 %v247, 4294901760
      %1129 = vmatpush2.msra.mxu0 %v1128
      %1130 = vmatprep.subr.mxu0 0.0
      %v1131 = vand.u32 %v246, 4294901760
      %1132 = vmatpush2.msra.mxu0 %v1131
      %1133 = vmatprep.subr.mxu0 0.0
      %v1134 = vand.u32 %v245, 4294901760
      %1135 = vmatpush2.msra.mxu0 %v1134
      %1136 = vmatprep.subr.mxu0 0.0
      %v1137 = vand.u32 %v244, 4294901760
      %1138 = vmatpush2.msra.mxu0 %v1137
      %1139 = vmatprep.subr.mxu0 0.0
      %v1140 = vand.u32 %v243, 4294901760
      %1141 = vmatpush2.msra.mxu0 %v1140
      %1142 = vmatprep.subr.mxu0 0.0
      %v1143 = vand.u32 %v242, 4294901760
      %1144 = vmatpush2.msra.mxu0 %v1143
      %1145 = vmatprep.subr.mxu0 0.0
      %v1146 = vand.u32 %v241, 4294901760
      %1147 = vmatpush2.msra.mxu0 %v1146
      %1148 = vmatprep.subr.mxu0 0.0
      %v1149 = vand.u32 %v240, 4294901760
      %1150 = vmatpush2.msra.mxu0 %v1149
      %1151 = vmatprep.subr.mxu0 0.0
      %v1152 = vand.u32 %v239, 4294901760
      %1153 = vmatpush2.msra.mxu0 %v1152
      %1154 = vmatprep.subr.mxu0 0.0
      %v1155 = vand.u32 %v238, 4294901760
      %1156 = vmatpush2.msra.mxu0 %v1155
      %v1157 = vand.u32 %v219, 4294901760
      %1158 = vmatprep.mubr.f32.mxu0 %v1157
      %v1159 = vand.u32 %v218, 4294901760
      %1160 = vmatmul.mubr.f32.gmra.mxu0 %v1159
      %v1161 = vpop.f32.mrf.mxu0
      %v1162 = vadd.f32 %v1051, %v1161
      %v1163 = vpop.f32.mrf.mxu0
      %v1164 = vand.u32 %v221, 4294901760
      %1165 = vmatprep.mubr.f32.mxu0 %v1164
      %v1166 = vand.u32 %v220, 4294901760
      %1167 = vmatmul.mubr.f32.gmra.mxu0 %v1166
      %v1168 = vpop.f32.mrf.mxu0
      %v1169 = vadd.f32 %v1058, %v1168
      %v1170 = vpop.f32.mrf.mxu0
      %1171 = vdwg.mxu0
      %v1172 = vmul.f32 %v1162, 0.0625
      %v1173 = vmul.f32 %v1169, 0.0625
      %vm1174 = vcmask 130048
      %1175 = vst.msk [vmem:[%s210] sm:$0xff] %vm1174, %v1172
      %1176 = vst.msk [vmem:[%s210 + $0x8] sm:$0xff] %vm1174, %v1173
      %v1177 = vld [vmem:[%s2] sm:$0xff]
      %v1178 = vld [vmem:[%s2 + $0x8] sm:$0xff]
      %v1179 = vld [vmem:[%s2 + $0x10] sm:$0xff]
      %v1180 = vld [vmem:[%s2 + $0x18] sm:$0xff]
      %v1181 = vld [vmem:[%s2 + $0x20] sm:$0xff]
      %v1182 = vld [vmem:[%s2 + $0x28] sm:$0xff]
      %v1183 = vld [vmem:[%s2 + $0x30] sm:$0xff]
      %v1184 = vld [vmem:[%s2 + $0x38] sm:$0xff]
      %v1185 = vld [vmem:[%s2 + $0x40] sm:$0xff]
      %v1186 = vld [vmem:[%s2 + $0x48] sm:$0xff]
      %v1187 = vld [vmem:[%s2 + $0x50] sm:$0xff]
      %v1188 = vld [vmem:[%s2 + $0x58] sm:$0xff]
      %v1189 = vld [vmem:[%s2 + $0x60] sm:$0xff]
      %v1190 = vld [vmem:[%s2 + $0x68] sm:$0xff]
      %v1191 = vld [vmem:[%s2 + $0x70] sm:$0xff]
      %v1192 = vld [vmem:[%s2 + $0x78] sm:$0xff]
      %v1193 = vld [vmem:[%s2 + $0x80] sm:$0xff]
      %v1194 = vld [vmem:[%s2 + $0x88] sm:$0xff]
      %v1195 = vld [vmem:[%s2 + $0x90] sm:$0xff]
      %v1196 = vld [vmem:[%s2 + $0x98] sm:$0xff]
      %v1197 = vld [vmem:[%s2 + $0xa0] sm:$0xff]
      %v1198 = vld [vmem:[%s2 + $0xa8] sm:$0xff]
      %v1199 = vld [vmem:[%s2 + $0xb0] sm:$0xff]
      %v1200 = vld [vmem:[%s2 + $0xb8] sm:$0xff]
      %v1201 = vld [vmem:[%s2 + $0xc0] sm:$0xff]
      %v1202 = vld [vmem:[%s2 + $0xc8] sm:$0xff]
      %v1203 = vld [vmem:[%s2 + $0xd0] sm:$0xff]
      %v1204 = vld [vmem:[%s2 + $0xd8] sm:$0xff]
      %v1205 = vld [vmem:[%s2 + $0xe0] sm:$0xff]
      %v1206 = vld [vmem:[%s2 + $0xe8] sm:$0xff]
      %v1207 = vld [vmem:[%s2 + $0xf0] sm:$0xff]
      %v1208 = vld [vmem:[%s2 + $0xf8] sm:$0xff]
      %1209 = vmatprep.subr.mxu0 0.0
      %v1210 = vand.u32 %v1192, 4294901760
      %1211 = vmatpush1.msra.mxu0 %v1210
      %1212 = vmatprep.subr.mxu0 0.0
      %v1213 = vand.u32 %v1191, 4294901760
      %1214 = vmatpush1.msra.mxu0 %v1213
      %1215 = vmatprep.subr.mxu0 0.0
      %v1216 = vand.u32 %v1190, 4294901760
      %1217 = vmatpush1.msra.mxu0 %v1216
      %1218 = vmatprep.subr.mxu0 0.0
      %v1219 = vand.u32 %v1189, 4294901760
      %1220 = vmatpush1.msra.mxu0 %v1219
      %1221 = vmatprep.subr.mxu0 0.0
      %v1222 = vand.u32 %v1188, 4294901760
      %1223 = vmatpush1.msra.mxu0 %v1222
      %1224 = vmatprep.subr.mxu0 0.0
      %v1225 = vand.u32 %v1187, 4294901760
      %1226 = vmatpush1.msra.mxu0 %v1225
      %1227 = vmatprep.subr.mxu0 0.0
      %v1228 = vand.u32 %v1186, 4294901760
      %1229 = vmatpush1.msra.mxu0 %v1228
      %1230 = vmatprep.subr.mxu0 0.0
      %v1231 = vand.u32 %v1185, 4294901760
      %1232 = vmatpush1.msra.mxu0 %v1231
      %1233 = vmatprep.subr.mxu0 0.0
      %v1234 = vand.u32 %v1184, 4294901760
      %1235 = vmatpush1.msra.mxu0 %v1234
      %1236 = vmatprep.subr.mxu0 0.0
      %v1237 = vand.u32 %v1183, 4294901760
      %1238 = vmatpush1.msra.mxu0 %v1237
      %1239 = vmatprep.subr.mxu0 0.0
      %v1240 = vand.u32 %v1182, 4294901760
      %1241 = vmatpush1.msra.mxu0 %v1240
      %1242 = vmatprep.subr.mxu0 0.0
      %v1243 = vand.u32 %v1181, 4294901760
      %1244 = vmatpush1.msra.mxu0 %v1243
      %1245 = vmatprep.subr.mxu0 0.0
      %v1246 = vand.u32 %v1180, 4294901760
      %1247 = vmatpush1.msra.mxu0 %v1246
      %1248 = vmatprep.subr.mxu0 0.0
      %v1249 = vand.u32 %v1179, 4294901760
      %1250 = vmatpush1.msra.mxu0 %v1249
      %1251 = vmatprep.subr.mxu0 0.0
      %v1252 = vand.u32 %v1178, 4294901760
      %1253 = vmatpush1.msra.mxu0 %v1252
      %1254 = vmatprep.subr.mxu0 0.0
      %v1255 = vand.u32 %v1177, 4294901760
      %1256 = vmatpush1.msra.mxu0 %v1255
      %1257 = vmatprep.subr.mxu0 0.0
      %v1258 = vand.u32 %v1208, 4294901760
      %1259 = vmatpush2.msra.mxu0 %v1258
      %1260 = vmatprep.subr.mxu0 0.0
      %v1261 = vand.u32 %v1207, 4294901760
      %1262 = vmatpush2.msra.mxu0 %v1261
      %1263 = vmatprep.subr.mxu0 0.0
      %v1264 = vand.u32 %v1206, 4294901760
      %1265 = vmatpush2.msra.mxu0 %v1264
      %1266 = vmatprep.subr.mxu0 0.0
      %v1267 = vand.u32 %v1205, 4294901760
      %1268 = vmatpush2.msra.mxu0 %v1267
      %1269 = vmatprep.subr.mxu0 0.0
      %v1270 = vand.u32 %v1204, 4294901760
      %1271 = vmatpush2.msra.mxu0 %v1270
      %1272 = vmatprep.subr.mxu0 0.0
      %v1273 = vand.u32 %v1203, 4294901760
      %1274 = vmatpush2.msra.mxu0 %v1273
      %1275 = vmatprep.subr.mxu0 0.0
      %v1276 = vand.u32 %v1202, 4294901760
      %1277 = vmatpush2.msra.mxu0 %v1276
      %1278 = vmatprep.subr.mxu0 0.0
      %v1279 = vand.u32 %v1201, 4294901760
      %1280 = vmatpush2.msra.mxu0 %v1279
      %1281 = vmatprep.subr.mxu0 0.0
      %v1282 = vand.u32 %v1200, 4294901760
      %1283 = vmatpush2.msra.mxu0 %v1282
      %1284 = vmatprep.subr.mxu0 0.0
      %v1285 = vand.u32 %v1199, 4294901760
      %1286 = vmatpush2.msra.mxu0 %v1285
      %1287 = vmatprep.subr.mxu0 0.0
      %v1288 = vand.u32 %v1198, 4294901760
      %1289 = vmatpush2.msra.mxu0 %v1288
      %1290 = vmatprep.subr.mxu0 0.0
      %v1291 = vand.u32 %v1197, 4294901760
      %1292 = vmatpush2.msra.mxu0 %v1291
      %1293 = vmatprep.subr.mxu0 0.0
      %v1294 = vand.u32 %v1196, 4294901760
      %1295 = vmatpush2.msra.mxu0 %v1294
      %1296 = vmatprep.subr.mxu0 0.0
      %v1297 = vand.u32 %v1195, 4294901760
      %1298 = vmatpush2.msra.mxu0 %v1297
      %1299 = vmatprep.subr.mxu0 0.0
      %v1300 = vand.u32 %v1194, 4294901760
      %1301 = vmatpush2.msra.mxu0 %v1300
      %1302 = vmatprep.subr.mxu0 0.0
      %v1303 = vand.u32 %v1193, 4294901760
      %1304 = vmatpush2.msra.mxu0 %v1303
      %v1305 = vand.u32 %v219, 4294901760
      %v1306 = vsub.f32 %v219, %v1305
      %v1307 = vand.u32 %v1306, 4294901760
      %v1308 = vsub.f32 %v1306, %v1307
      %v1309 = vand.u32 %v1308, 4294901760
      %1310 = vmatprep.mubr.f32.mxu0 %v1309
      %v1311 = vand.u32 %v218, 4294901760
      %v1312 = vsub.f32 %v218, %v1311
      %v1313 = vand.u32 %v1312, 4294901760
      %v1314 = vsub.f32 %v1312, %v1313
      %v1315 = vand.u32 %v1314, 4294901760
      %1316 = vmatmul.mubr.f32.gmra.mxu0 %v1315
      %v1317 = vpop.f32.mrf.mxu0
      %v1318 = vadd.f32 0.0, %v1317
      %v1319 = vpop.f32.mrf.mxu0
      %v1320 = vand.u32 %v221, 4294901760
      %v1321 = vsub.f32 %v221, %v1320
      %v1322 = vand.u32 %v1321, 4294901760
      %v1323 = vsub.f32 %v1321, %v1322
      %v1324 = vand.u32 %v1323, 4294901760
      %1325 = vmatprep.mubr.f32.mxu0 %v1324
      %v1326 = vand.u32 %v220, 4294901760
      %v1327 = vsub.f32 %v220, %v1326
      %v1328 = vand.u32 %v1327, 4294901760
      %v1329 = vsub.f32 %v1327, %v1328
      %v1330 = vand.u32 %v1329, 4294901760
      %1331 = vmatmul.mubr.f32.gmra.mxu0 %v1330
      %v1332 = vpop.f32.mrf.mxu0
      %v1333 = vadd.f32 0.0, %v1332
      %v1334 = vpop.f32.mrf.mxu0
      %1335 = vdwg.mxu0
      %1336 = vmatprep.subr.mxu0 0.0
      %v1337 = vand.u32 %v1192, 4294901760
      %v1338 = vsub.f32 %v1192, %v1337
      %v1339 = vand.u32 %v1338, 4294901760
      %v1340 = vsub.f32 %v1338, %v1339
      %v1341 = vand.u32 %v1340, 4294901760
      %1342 = vmatpush1.msra.mxu0 %v1341
      %1343 = vmatprep.subr.mxu0 0.0
      %v1344 = vand.u32 %v1191, 4294901760
      %v1345 = vsub.f32 %v1191, %v1344
      %v1346 = vand.u32 %v1345, 4294901760
      %v1347 = vsub.f32 %v1345, %v1346
      %v1348 = vand.u32 %v1347, 4294901760
      %1349 = vmatpush1.msra.mxu0 %v1348
      %1350 = vmatprep.subr.mxu0 0.0
      %v1351 = vand.u32 %v1190, 4294901760
      %v1352 = vsub.f32 %v1190, %v1351
      %v1353 = vand.u32 %v1352, 4294901760
      %v1354 = vsub.f32 %v1352, %v1353
      %v1355 = vand.u32 %v1354, 4294901760
      %1356 = vmatpush1.msra.mxu0 %v1355
      %1357 = vmatprep.subr.mxu0 0.0
      %v1358 = vand.u32 %v1189, 4294901760
      %v1359 = vsub.f32 %v1189, %v1358
      %v1360 = vand.u32 %v1359, 4294901760
      %v1361 = vsub.f32 %v1359, %v1360
      %v1362 = vand.u32 %v1361, 4294901760
      %1363 = vmatpush1.msra.mxu0 %v1362
      %1364 = vmatprep.subr.mxu0 0.0
      %v1365 = vand.u32 %v1188, 4294901760
      %v1366 = vsub.f32 %v1188, %v1365
      %v1367 = vand.u32 %v1366, 4294901760
      %v1368 = vsub.f32 %v1366, %v1367
      %v1369 = vand.u32 %v1368, 4294901760
      %1370 = vmatpush1.msra.mxu0 %v1369
      %1371 = vmatprep.subr.mxu0 0.0
      %v1372 = vand.u32 %v1187, 4294901760
      %v1373 = vsub.f32 %v1187, %v1372
      %v1374 = vand.u32 %v1373, 4294901760
      %v1375 = vsub.f32 %v1373, %v1374
      %v1376 = vand.u32 %v1375, 4294901760
      %1377 = vmatpush1.msra.mxu0 %v1376
      %1378 = vmatprep.subr.mxu0 0.0
      %v1379 = vand.u32 %v1186, 4294901760
      %v1380 = vsub.f32 %v1186, %v1379
      %v1381 = vand.u32 %v1380, 4294901760
      %v1382 = vsub.f32 %v1380, %v1381
      %v1383 = vand.u32 %v1382, 4294901760
      %1384 = vmatpush1.msra.mxu0 %v1383
      %1385 = vmatprep.subr.mxu0 0.0
      %v1386 = vand.u32 %v1185, 4294901760
      %v1387 = vsub.f32 %v1185, %v1386
      %v1388 = vand.u32 %v1387, 4294901760
      %v1389 = vsub.f32 %v1387, %v1388
      %v1390 = vand.u32 %v1389, 4294901760
      %1391 = vmatpush1.msra.mxu0 %v1390
      %1392 = vmatprep.subr.mxu0 0.0
      %v1393 = vand.u32 %v1184, 4294901760
      %v1394 = vsub.f32 %v1184, %v1393
      %v1395 = vand.u32 %v1394, 4294901760
      %v1396 = vsub.f32 %v1394, %v1395
      %v1397 = vand.u32 %v1396, 4294901760
      %1398 = vmatpush1.msra.mxu0 %v1397
      %1399 = vmatprep.subr.mxu0 0.0
      %v1400 = vand.u32 %v1183, 4294901760
      %v1401 = vsub.f32 %v1183, %v1400
      %v1402 = vand.u32 %v1401, 4294901760
      %v1403 = vsub.f32 %v1401, %v1402
      %v1404 = vand.u32 %v1403, 4294901760
      %1405 = vmatpush1.msra.mxu0 %v1404
      %1406 = vmatprep.subr.mxu0 0.0
      %v1407 = vand.u32 %v1182, 4294901760
      %v1408 = vsub.f32 %v1182, %v1407
      %v1409 = vand.u32 %v1408, 4294901760
      %v1410 = vsub.f32 %v1408, %v1409
      %v1411 = vand.u32 %v1410, 4294901760
      %1412 = vmatpush1.msra.mxu0 %v1411
      %1413 = vmatprep.subr.mxu0 0.0
      %v1414 = vand.u32 %v1181, 4294901760
      %v1415 = vsub.f32 %v1181, %v1414
      %v1416 = vand.u32 %v1415, 4294901760
      %v1417 = vsub.f32 %v1415, %v1416
      %v1418 = vand.u32 %v1417, 4294901760
      %1419 = vmatpush1.msra.mxu0 %v1418
      %1420 = vmatprep.subr.mxu0 0.0
      %v1421 = vand.u32 %v1180, 4294901760
      %v1422 = vsub.f32 %v1180, %v1421
      %v1423 = vand.u32 %v1422, 4294901760
      %v1424 = vsub.f32 %v1422, %v1423
      %v1425 = vand.u32 %v1424, 4294901760
      %1426 = vmatpush1.msra.mxu0 %v1425
      %1427 = vmatprep.subr.mxu0 0.0
      %v1428 = vand.u32 %v1179, 4294901760
      %v1429 = vsub.f32 %v1179, %v1428
      %v1430 = vand.u32 %v1429, 4294901760
      %v1431 = vsub.f32 %v1429, %v1430
      %v1432 = vand.u32 %v1431, 4294901760
      %1433 = vmatpush1.msra.mxu0 %v1432
      %1434 = vmatprep.subr.mxu0 0.0
      %v1435 = vand.u32 %v1178, 4294901760
      %v1436 = vsub.f32 %v1178, %v1435
      %v1437 = vand.u32 %v1436, 4294901760
      %v1438 = vsub.f32 %v1436, %v1437
      %v1439 = vand.u32 %v1438, 4294901760
      %1440 = vmatpush1.msra.mxu0 %v1439
      %1441 = vmatprep.subr.mxu0 0.0
      %v1442 = vand.u32 %v1177, 4294901760
      %v1443 = vsub.f32 %v1177, %v1442
      %v1444 = vand.u32 %v1443, 4294901760
      %v1445 = vsub.f32 %v1443, %v1444
      %v1446 = vand.u32 %v1445, 4294901760
      %1447 = vmatpush1.msra.mxu0 %v1446
      %1448 = vmatprep.subr.mxu0 0.0
      %v1449 = vand.u32 %v1208, 4294901760
      %v1450 = vsub.f32 %v1208, %v1449
      %v1451 = vand.u32 %v1450, 4294901760
      %v1452 = vsub.f32 %v1450, %v1451
      %v1453 = vand.u32 %v1452, 4294901760
      %1454 = vmatpush2.msra.mxu0 %v1453
      %1455 = vmatprep.subr.mxu0 0.0
      %v1456 = vand.u32 %v1207, 4294901760
      %v1457 = vsub.f32 %v1207, %v1456
      %v1458 = vand.u32 %v1457, 4294901760
      %v1459 = vsub.f32 %v1457, %v1458
      %v1460 = vand.u32 %v1459, 4294901760
      %1461 = vmatpush2.msra.mxu0 %v1460
      %1462 = vmatprep.subr.mxu0 0.0
      %v1463 = vand.u32 %v1206, 4294901760
      %v1464 = vsub.f32 %v1206, %v1463
      %v1465 = vand.u32 %v1464, 4294901760
      %v1466 = vsub.f32 %v1464, %v1465
      %v1467 = vand.u32 %v1466, 4294901760
      %1468 = vmatpush2.msra.mxu0 %v1467
      %1469 = vmatprep.subr.mxu0 0.0
      %v1470 = vand.u32 %v1205, 4294901760
      %v1471 = vsub.f32 %v1205, %v1470
      %v1472 = vand.u32 %v1471, 4294901760
      %v1473 = vsub.f32 %v1471, %v1472
      %v1474 = vand.u32 %v1473, 4294901760
      %1475 = vmatpush2.msra.mxu0 %v1474
      %1476 = vmatprep.subr.mxu0 0.0
      %v1477 = vand.u32 %v1204, 4294901760
      %v1478 = vsub.f32 %v1204, %v1477
      %v1479 = vand.u32 %v1478, 4294901760
      %v1480 = vsub.f32 %v1478, %v1479
      %v1481 = vand.u32 %v1480, 4294901760
      %1482 = vmatpush2.msra.mxu0 %v1481
      %1483 = vmatprep.subr.mxu0 0.0
      %v1484 = vand.u32 %v1203, 4294901760
      %v1485 = vsub.f32 %v1203, %v1484
      %v1486 = vand.u32 %v1485, 4294901760
      %v1487 = vsub.f32 %v1485, %v1486
      %v1488 = vand.u32 %v1487, 4294901760
      %1489 = vmatpush2.msra.mxu0 %v1488
      %1490 = vmatprep.subr.mxu0 0.0
      %v1491 = vand.u32 %v1202, 4294901760
      %v1492 = vsub.f32 %v1202, %v1491
      %v1493 = vand.u32 %v1492, 4294901760
      %v1494 = vsub.f32 %v1492, %v1493
      %v1495 = vand.u32 %v1494, 4294901760
      %1496 = vmatpush2.msra.mxu0 %v1495
      %1497 = vmatprep.subr.mxu0 0.0
      %v1498 = vand.u32 %v1201, 4294901760
      %v1499 = vsub.f32 %v1201, %v1498
      %v1500 = vand.u32 %v1499, 4294901760
      %v1501 = vsub.f32 %v1499, %v1500
      %v1502 = vand.u32 %v1501, 4294901760
      %1503 = vmatpush2.msra.mxu0 %v1502
      %1504 = vmatprep.subr.mxu0 0.0
      %v1505 = vand.u32 %v1200, 4294901760
      %v1506 = vsub.f32 %v1200, %v1505
      %v1507 = vand.u32 %v1506, 4294901760
      %v1508 = vsub.f32 %v1506, %v1507
      %v1509 = vand.u32 %v1508, 4294901760
      %1510 = vmatpush2.msra.mxu0 %v1509
      %1511 = vmatprep.subr.mxu0 0.0
      %v1512 = vand.u32 %v1199, 4294901760
      %v1513 = vsub.f32 %v1199, %v1512
      %v1514 = vand.u32 %v1513, 4294901760
      %v1515 = vsub.f32 %v1513, %v1514
      %v1516 = vand.u32 %v1515, 4294901760
      %1517 = vmatpush2.msra.mxu0 %v1516
      %1518 = vmatprep.subr.mxu0 0.0
      %v1519 = vand.u32 %v1198, 4294901760
      %v1520 = vsub.f32 %v1198, %v1519
      %v1521 = vand.u32 %v1520, 4294901760
      %v1522 = vsub.f32 %v1520, %v1521
      %v1523 = vand.u32 %v1522, 4294901760
      %1524 = vmatpush2.msra.mxu0 %v1523
      %1525 = vmatprep.subr.mxu0 0.0
      %v1526 = vand.u32 %v1197, 4294901760
      %v1527 = vsub.f32 %v1197, %v1526
      %v1528 = vand.u32 %v1527, 4294901760
      %v1529 = vsub.f32 %v1527, %v1528
      %v1530 = vand.u32 %v1529, 4294901760
      %1531 = vmatpush2.msra.mxu0 %v1530
      %1532 = vmatprep.subr.mxu0 0.0
      %v1533 = vand.u32 %v1196, 4294901760
      %v1534 = vsub.f32 %v1196, %v1533
      %v1535 = vand.u32 %v1534, 4294901760
      %v1536 = vsub.f32 %v1534, %v1535
      %v1537 = vand.u32 %v1536, 4294901760
      %1538 = vmatpush2.msra.mxu0 %v1537
      %1539 = vmatprep.subr.mxu0 0.0
      %v1540 = vand.u32 %v1195, 4294901760
      %v1541 = vsub.f32 %v1195, %v1540
      %v1542 = vand.u32 %v1541, 4294901760
      %v1543 = vsub.f32 %v1541, %v1542
      %v1544 = vand.u32 %v1543, 4294901760
      %1545 = vmatpush2.msra.mxu0 %v1544
      %1546 = vmatprep.subr.mxu0 0.0
      %v1547 = vand.u32 %v1194, 4294901760
      %v1548 = vsub.f32 %v1194, %v1547
      %v1549 = vand.u32 %v1548, 4294901760
      %v1550 = vsub.f32 %v1548, %v1549
      %v1551 = vand.u32 %v1550, 4294901760
      %1552 = vmatpush2.msra.mxu0 %v1551
      %1553 = vmatprep.subr.mxu0 0.0
      %v1554 = vand.u32 %v1193, 4294901760
      %v1555 = vsub.f32 %v1193, %v1554
      %v1556 = vand.u32 %v1555, 4294901760
      %v1557 = vsub.f32 %v1555, %v1556
      %v1558 = vand.u32 %v1557, 4294901760
      %1559 = vmatpush2.msra.mxu0 %v1558
      %v1560 = vand.u32 %v219, 4294901760
      %1561 = vmatprep.mubr.f32.mxu0 %v1560
      %v1562 = vand.u32 %v218, 4294901760
      %1563 = vmatmul.mubr.f32.gmra.mxu0 %v1562
      %v1564 = vpop.f32.mrf.mxu0
      %v1565 = vadd.f32 %v1318, %v1564
      %v1566 = vpop.f32.mrf.mxu0
      %v1567 = vand.u32 %v221, 4294901760
      %1568 = vmatprep.mubr.f32.mxu0 %v1567
      %v1569 = vand.u32 %v220, 4294901760
      %1570 = vmatmul.mubr.f32.gmra.mxu0 %v1569
      %v1571 = vpop.f32.mrf.mxu0
      %v1572 = vadd.f32 %v1333, %v1571
      %v1573 = vpop.f32.mrf.mxu0
      %1574 = vdwg.mxu0
      %1575 = vmatprep.subr.mxu0 0.0
      %v1576 = vand.u32 %v1192, 4294901760
      %v1577 = vsub.f32 %v1192, %v1576
      %1578 = vmatpush1.msra.mxu0 %v1577
      %1579 = vmatprep.subr.mxu0 0.0
      %v1580 = vand.u32 %v1191, 4294901760
      %v1581 = vsub.f32 %v1191, %v1580
      %1582 = vmatpush1.msra.mxu0 %v1581
      %1583 = vmatprep.subr.mxu0 0.0
      %v1584 = vand.u32 %v1190, 4294901760
      %v1585 = vsub.f32 %v1190, %v1584
      %1586 = vmatpush1.msra.mxu0 %v1585
      %1587 = vmatprep.subr.mxu0 0.0
      %v1588 = vand.u32 %v1189, 4294901760
      %v1589 = vsub.f32 %v1189, %v1588
      %1590 = vmatpush1.msra.mxu0 %v1589
      %1591 = vmatprep.subr.mxu0 0.0
      %v1592 = vand.u32 %v1188, 4294901760
      %v1593 = vsub.f32 %v1188, %v1592
      %1594 = vmatpush1.msra.mxu0 %v1593
      %1595 = vmatprep.subr.mxu0 0.0
      %v1596 = vand.u32 %v1187, 4294901760
      %v1597 = vsub.f32 %v1187, %v1596
      %1598 = vmatpush1.msra.mxu0 %v1597
      %1599 = vmatprep.subr.mxu0 0.0
      %v1600 = vand.u32 %v1186, 4294901760
      %v1601 = vsub.f32 %v1186, %v1600
      %1602 = vmatpush1.msra.mxu0 %v1601
      %1603 = vmatprep.subr.mxu0 0.0
      %v1604 = vand.u32 %v1185, 4294901760
      %v1605 = vsub.f32 %v1185, %v1604
      %1606 = vmatpush1.msra.mxu0 %v1605
      %1607 = vmatprep.subr.mxu0 0.0
      %v1608 = vand.u32 %v1184, 4294901760
      %v1609 = vsub.f32 %v1184, %v1608
      %1610 = vmatpush1.msra.mxu0 %v1609
      %1611 = vmatprep.subr.mxu0 0.0
      %v1612 = vand.u32 %v1183, 4294901760
      %v1613 = vsub.f32 %v1183, %v1612
      %1614 = vmatpush1.msra.mxu0 %v1613
      %1615 = vmatprep.subr.mxu0 0.0
      %v1616 = vand.u32 %v1182, 4294901760
      %v1617 = vsub.f32 %v1182, %v1616
      %1618 = vmatpush1.msra.mxu0 %v1617
      %1619 = vmatprep.subr.mxu0 0.0
      %v1620 = vand.u32 %v1181, 4294901760
      %v1621 = vsub.f32 %v1181, %v1620
      %1622 = vmatpush1.msra.mxu0 %v1621
      %1623 = vmatprep.subr.mxu0 0.0
      %v1624 = vand.u32 %v1180, 4294901760
      %v1625 = vsub.f32 %v1180, %v1624
      %1626 = vmatpush1.msra.mxu0 %v1625
      %1627 = vmatprep.subr.mxu0 0.0
      %v1628 = vand.u32 %v1179, 4294901760
      %v1629 = vsub.f32 %v1179, %v1628
      %1630 = vmatpush1.msra.mxu0 %v1629
      %1631 = vmatprep.subr.mxu0 0.0
      %v1632 = vand.u32 %v1178, 4294901760
      %v1633 = vsub.f32 %v1178, %v1632
      %1634 = vmatpush1.msra.mxu0 %v1633
      %1635 = vmatprep.subr.mxu0 0.0
      %v1636 = vand.u32 %v1177, 4294901760
      %v1637 = vsub.f32 %v1177, %v1636
      %1638 = vmatpush1.msra.mxu0 %v1637
      %1639 = vmatprep.subr.mxu0 0.0
      %v1640 = vand.u32 %v1208, 4294901760
      %v1641 = vsub.f32 %v1208, %v1640
      %1642 = vmatpush2.msra.mxu0 %v1641
      %1643 = vmatprep.subr.mxu0 0.0
      %v1644 = vand.u32 %v1207, 4294901760
      %v1645 = vsub.f32 %v1207, %v1644
      %1646 = vmatpush2.msra.mxu0 %v1645
      %1647 = vmatprep.subr.mxu0 0.0
      %v1648 = vand.u32 %v1206, 4294901760
      %v1649 = vsub.f32 %v1206, %v1648
      %1650 = vmatpush2.msra.mxu0 %v1649
      %1651 = vmatprep.subr.mxu0 0.0
      %v1652 = vand.u32 %v1205, 4294901760
      %v1653 = vsub.f32 %v1205, %v1652
      %1654 = vmatpush2.msra.mxu0 %v1653
      %1655 = vmatprep.subr.mxu0 0.0
      %v1656 = vand.u32 %v1204, 4294901760
      %v1657 = vsub.f32 %v1204, %v1656
      %1658 = vmatpush2.msra.mxu0 %v1657
      %1659 = vmatprep.subr.mxu0 0.0
      %v1660 = vand.u32 %v1203, 4294901760
      %v1661 = vsub.f32 %v1203, %v1660
      %1662 = vmatpush2.msra.mxu0 %v1661
      %1663 = vmatprep.subr.mxu0 0.0
      %v1664 = vand.u32 %v1202, 4294901760
      %v1665 = vsub.f32 %v1202, %v1664
      %1666 = vmatpush2.msra.mxu0 %v1665
      %1667 = vmatprep.subr.mxu0 0.0
      %v1668 = vand.u32 %v1201, 4294901760
      %v1669 = vsub.f32 %v1201, %v1668
      %1670 = vmatpush2.msra.mxu0 %v1669
      %1671 = vmatprep.subr.mxu0 0.0
      %v1672 = vand.u32 %v1200, 4294901760
      %v1673 = vsub.f32 %v1200, %v1672
      %1674 = vmatpush2.msra.mxu0 %v1673
      %1675 = vmatprep.subr.mxu0 0.0
      %v1676 = vand.u32 %v1199, 4294901760
      %v1677 = vsub.f32 %v1199, %v1676
      %1678 = vmatpush2.msra.mxu0 %v1677
      %1679 = vmatprep.subr.mxu0 0.0
      %v1680 = vand.u32 %v1198, 4294901760
      %v1681 = vsub.f32 %v1198, %v1680
      %1682 = vmatpush2.msra.mxu0 %v1681
      %1683 = vmatprep.subr.mxu0 0.0
      %v1684 = vand.u32 %v1197, 4294901760
      %v1685 = vsub.f32 %v1197, %v1684
      %1686 = vmatpush2.msra.mxu0 %v1685
      %1687 = vmatprep.subr.mxu0 0.0
      %v1688 = vand.u32 %v1196, 4294901760
      %v1689 = vsub.f32 %v1196, %v1688
      %1690 = vmatpush2.msra.mxu0 %v1689
      %1691 = vmatprep.subr.mxu0 0.0
      %v1692 = vand.u32 %v1195, 4294901760
      %v1693 = vsub.f32 %v1195, %v1692
      %1694 = vmatpush2.msra.mxu0 %v1693
      %1695 = vmatprep.subr.mxu0 0.0
      %v1696 = vand.u32 %v1194, 4294901760
      %v1697 = vsub.f32 %v1194, %v1696
      %1698 = vmatpush2.msra.mxu0 %v1697
      %1699 = vmatprep.subr.mxu0 0.0
      %v1700 = vand.u32 %v1193, 4294901760
      %v1701 = vsub.f32 %v1193, %v1700
      %1702 = vmatpush2.msra.mxu0 %v1701
      %v1703 = vand.u32 %v219, 4294901760
      %v1704 = vsub.f32 %v219, %v1703
      %1705 = vmatprep.mubr.f32.mxu0 %v1704
      %v1706 = vand.u32 %v218, 4294901760
      %v1707 = vsub.f32 %v218, %v1706
      %1708 = vmatmul.mubr.f32.gmra.mxu0 %v1707
      %v1709 = vpop.f32.mrf.mxu0
      %v1710 = vadd.f32 %v1565, %v1709
      %v1711 = vpop.f32.mrf.mxu0
      %v1712 = vand.u32 %v221, 4294901760
      %v1713 = vsub.f32 %v221, %v1712
      %1714 = vmatprep.mubr.f32.mxu0 %v1713
      %v1715 = vand.u32 %v220, 4294901760
      %v1716 = vsub.f32 %v220, %v1715
      %1717 = vmatmul.mubr.f32.gmra.mxu0 %v1716
      %v1718 = vpop.f32.mrf.mxu0
      %v1719 = vadd.f32 %v1572, %v1718
      %v1720 = vpop.f32.mrf.mxu0
      %1721 = vdwg.mxu0
      %1722 = vmatprep.subr.mxu0 0.0
      %v1723 = vand.u32 %v1192, 4294901760
      %1724 = vmatpush1.msra.mxu0 %v1723
      %1725 = vmatprep.subr.mxu0 0.0
      %v1726 = vand.u32 %v1191, 4294901760
      %1727 = vmatpush1.msra.mxu0 %v1726
      %1728 = vmatprep.subr.mxu0 0.0
      %v1729 = vand.u32 %v1190, 4294901760
      %1730 = vmatpush1.msra.mxu0 %v1729
      %1731 = vmatprep.subr.mxu0 0.0
      %v1732 = vand.u32 %v1189, 4294901760
      %1733 = vmatpush1.msra.mxu0 %v1732
      %1734 = vmatprep.subr.mxu0 0.0
      %v1735 = vand.u32 %v1188, 4294901760
      %1736 = vmatpush1.msra.mxu0 %v1735
      %1737 = vmatprep.subr.mxu0 0.0
      %v1738 = vand.u32 %v1187, 4294901760
      %1739 = vmatpush1.msra.mxu0 %v1738
      %1740 = vmatprep.subr.mxu0 0.0
      %v1741 = vand.u32 %v1186, 4294901760
      %1742 = vmatpush1.msra.mxu0 %v1741
      %1743 = vmatprep.subr.mxu0 0.0
      %v1744 = vand.u32 %v1185, 4294901760
      %1745 = vmatpush1.msra.mxu0 %v1744
      %1746 = vmatprep.subr.mxu0 0.0
      %v1747 = vand.u32 %v1184, 4294901760
      %1748 = vmatpush1.msra.mxu0 %v1747
      %1749 = vmatprep.subr.mxu0 0.0
      %v1750 = vand.u32 %v1183, 4294901760
      %1751 = vmatpush1.msra.mxu0 %v1750
      %1752 = vmatprep.subr.mxu0 0.0
      %v1753 = vand.u32 %v1182, 4294901760
      %1754 = vmatpush1.msra.mxu0 %v1753
      %1755 = vmatprep.subr.mxu0 0.0
      %v1756 = vand.u32 %v1181, 4294901760
      %1757 = vmatpush1.msra.mxu0 %v1756
      %1758 = vmatprep.subr.mxu0 0.0
      %v1759 = vand.u32 %v1180, 4294901760
      %1760 = vmatpush1.msra.mxu0 %v1759
      %1761 = vmatprep.subr.mxu0 0.0
      %v1762 = vand.u32 %v1179, 4294901760
      %1763 = vmatpush1.msra.mxu0 %v1762
      %1764 = vmatprep.subr.mxu0 0.0
      %v1765 = vand.u32 %v1178, 4294901760
      %1766 = vmatpush1.msra.mxu0 %v1765
      %1767 = vmatprep.subr.mxu0 0.0
      %v1768 = vand.u32 %v1177, 4294901760
      %1769 = vmatpush1.msra.mxu0 %v1768
      %1770 = vmatprep.subr.mxu0 0.0
      %v1771 = vand.u32 %v1208, 4294901760
      %1772 = vmatpush2.msra.mxu0 %v1771
      %1773 = vmatprep.subr.mxu0 0.0
      %v1774 = vand.u32 %v1207, 4294901760
      %1775 = vmatpush2.msra.mxu0 %v1774
      %1776 = vmatprep.subr.mxu0 0.0
      %v1777 = vand.u32 %v1206, 4294901760
      %1778 = vmatpush2.msra.mxu0 %v1777
      %1779 = vmatprep.subr.mxu0 0.0
      %v1780 = vand.u32 %v1205, 4294901760
      %1781 = vmatpush2.msra.mxu0 %v1780
      %1782 = vmatprep.subr.mxu0 0.0
      %v1783 = vand.u32 %v1204, 4294901760
      %1784 = vmatpush2.msra.mxu0 %v1783
      %1785 = vmatprep.subr.mxu0 0.0
      %v1786 = vand.u32 %v1203, 4294901760
      %1787 = vmatpush2.msra.mxu0 %v1786
      %1788 = vmatprep.subr.mxu0 0.0
      %v1789 = vand.u32 %v1202, 4294901760
      %1790 = vmatpush2.msra.mxu0 %v1789
      %1791 = vmatprep.subr.mxu0 0.0
      %v1792 = vand.u32 %v1201, 4294901760
      %1793 = vmatpush2.msra.mxu0 %v1792
      %1794 = vmatprep.subr.mxu0 0.0
      %v1795 = vand.u32 %v1200, 4294901760
      %1796 = vmatpush2.msra.mxu0 %v1795
      %1797 = vmatprep.subr.mxu0 0.0
      %v1798 = vand.u32 %v1199, 4294901760
      %1799 = vmatpush2.msra.mxu0 %v1798
      %1800 = vmatprep.subr.mxu0 0.0
      %v1801 = vand.u32 %v1198, 4294901760
      %1802 = vmatpush2.msra.mxu0 %v1801
      %1803 = vmatprep.subr.mxu0 0.0
      %v1804 = vand.u32 %v1197, 4294901760
      %1805 = vmatpush2.msra.mxu0 %v1804
      %1806 = vmatprep.subr.mxu0 0.0
      %v1807 = vand.u32 %v1196, 4294901760
      %1808 = vmatpush2.msra.mxu0 %v1807
      %1809 = vmatprep.subr.mxu0 0.0
      %v1810 = vand.u32 %v1195, 4294901760
      %1811 = vmatpush2.msra.mxu0 %v1810
      %1812 = vmatprep.subr.mxu0 0.0
      %v1813 = vand.u32 %v1194, 4294901760
      %1814 = vmatpush2.msra.mxu0 %v1813
      %1815 = vmatprep.subr.mxu0 0.0
      %v1816 = vand.u32 %v1193, 4294901760
      %1817 = vmatpush2.msra.mxu0 %v1816
      %v1818 = vand.u32 %v219, 4294901760
      %v1819 = vsub.f32 %v219, %v1818
      %v1820 = vand.u32 %v1819, 4294901760
      %1821 = vmatprep.mubr.f32.mxu0 %v1820
      %v1822 = vand.u32 %v218, 4294901760
      %v1823 = vsub.f32 %v218, %v1822
      %v1824 = vand.u32 %v1823, 4294901760
      %1825 = vmatmul.mubr.f32.gmra.mxu0 %v1824
      %v1826 = vpop.f32.mrf.mxu0
      %v1827 = vadd.f32 %v1710, %v1826
      %v1828 = vpop.f32.mrf.mxu0
      %v1829 = vand.u32 %v221, 4294901760
      %v1830 = vsub.f32 %v221, %v1829
      %v1831 = vand.u32 %v1830, 4294901760
      %1832 = vmatprep.mubr.f32.mxu0 %v1831
      %v1833 = vand.u32 %v220, 4294901760
      %v1834 = vsub.f32 %v220, %v1833
      %v1835 = vand.u32 %v1834, 4294901760
      %1836 = vmatmul.mubr.f32.gmra.mxu0 %v1835
      %v1837 = vpop.f32.mrf.mxu0
      %v1838 = vadd.f32 %v1719, %v1837
      %v1839 = vpop.f32.mrf.mxu0
      %1840 = vdwg.mxu0
      %1841 = vmatprep.subr.mxu0 0.0
      %v1842 = vand.u32 %v1192, 4294901760
      %v1843 = vsub.f32 %v1192, %v1842
      %v1844 = vand.u32 %v1843, 4294901760
      %1845 = vmatpush1.msra.mxu0 %v1844
      %1846 = vmatprep.subr.mxu0 0.0
      %v1847 = vand.u32 %v1191, 4294901760
      %v1848 = vsub.f32 %v1191, %v1847
      %v1849 = vand.u32 %v1848, 4294901760
      %1850 = vmatpush1.msra.mxu0 %v1849
      %1851 = vmatprep.subr.mxu0 0.0
      %v1852 = vand.u32 %v1190, 4294901760
      %v1853 = vsub.f32 %v1190, %v1852
      %v1854 = vand.u32 %v1853, 4294901760
      %1855 = vmatpush1.msra.mxu0 %v1854
      %1856 = vmatprep.subr.mxu0 0.0
      %v1857 = vand.u32 %v1189, 4294901760
      %v1858 = vsub.f32 %v1189, %v1857
      %v1859 = vand.u32 %v1858, 4294901760
      %1860 = vmatpush1.msra.mxu0 %v1859
      %1861 = vmatprep.subr.mxu0 0.0
      %v1862 = vand.u32 %v1188, 4294901760
      %v1863 = vsub.f32 %v1188, %v1862
      %v1864 = vand.u32 %v1863, 4294901760
      %1865 = vmatpush1.msra.mxu0 %v1864
      %1866 = vmatprep.subr.mxu0 0.0
      %v1867 = vand.u32 %v1187, 4294901760
      %v1868 = vsub.f32 %v1187, %v1867
      %v1869 = vand.u32 %v1868, 4294901760
      %1870 = vmatpush1.msra.mxu0 %v1869
      %1871 = vmatprep.subr.mxu0 0.0
      %v1872 = vand.u32 %v1186, 4294901760
      %v1873 = vsub.f32 %v1186, %v1872
      %v1874 = vand.u32 %v1873, 4294901760
      %1875 = vmatpush1.msra.mxu0 %v1874
      %1876 = vmatprep.subr.mxu0 0.0
      %v1877 = vand.u32 %v1185, 4294901760
      %v1878 = vsub.f32 %v1185, %v1877
      %v1879 = vand.u32 %v1878, 4294901760
      %1880 = vmatpush1.msra.mxu0 %v1879
      %1881 = vmatprep.subr.mxu0 0.0
      %v1882 = vand.u32 %v1184, 4294901760
      %v1883 = vsub.f32 %v1184, %v1882
      %v1884 = vand.u32 %v1883, 4294901760
      %1885 = vmatpush1.msra.mxu0 %v1884
      %1886 = vmatprep.subr.mxu0 0.0
      %v1887 = vand.u32 %v1183, 4294901760
      %v1888 = vsub.f32 %v1183, %v1887
      %v1889 = vand.u32 %v1888, 4294901760
      %1890 = vmatpush1.msra.mxu0 %v1889
      %1891 = vmatprep.subr.mxu0 0.0
      %v1892 = vand.u32 %v1182, 4294901760
      %v1893 = vsub.f32 %v1182, %v1892
      %v1894 = vand.u32 %v1893, 4294901760
      %1895 = vmatpush1.msra.mxu0 %v1894
      %1896 = vmatprep.subr.mxu0 0.0
      %v1897 = vand.u32 %v1181, 4294901760
      %v1898 = vsub.f32 %v1181, %v1897
      %v1899 = vand.u32 %v1898, 4294901760
      %1900 = vmatpush1.msra.mxu0 %v1899
      %1901 = vmatprep.subr.mxu0 0.0
      %v1902 = vand.u32 %v1180, 4294901760
      %v1903 = vsub.f32 %v1180, %v1902
      %v1904 = vand.u32 %v1903, 4294901760
      %1905 = vmatpush1.msra.mxu0 %v1904
      %1906 = vmatprep.subr.mxu0 0.0
      %v1907 = vand.u32 %v1179, 4294901760
      %v1908 = vsub.f32 %v1179, %v1907
      %v1909 = vand.u32 %v1908, 4294901760
      %1910 = vmatpush1.msra.mxu0 %v1909
      %1911 = vmatprep.subr.mxu0 0.0
      %v1912 = vand.u32 %v1178, 4294901760
      %v1913 = vsub.f32 %v1178, %v1912
      %v1914 = vand.u32 %v1913, 4294901760
      %1915 = vmatpush1.msra.mxu0 %v1914
      %1916 = vmatprep.subr.mxu0 0.0
      %v1917 = vand.u32 %v1177, 4294901760
      %v1918 = vsub.f32 %v1177, %v1917
      %v1919 = vand.u32 %v1918, 4294901760
      %1920 = vmatpush1.msra.mxu0 %v1919
      %1921 = vmatprep.subr.mxu0 0.0
      %v1922 = vand.u32 %v1208, 4294901760
      %v1923 = vsub.f32 %v1208, %v1922
      %v1924 = vand.u32 %v1923, 4294901760
      %1925 = vmatpush2.msra.mxu0 %v1924
      %1926 = vmatprep.subr.mxu0 0.0
      %v1927 = vand.u32 %v1207, 4294901760
      %v1928 = vsub.f32 %v1207, %v1927
      %v1929 = vand.u32 %v1928, 4294901760
      %1930 = vmatpush2.msra.mxu0 %v1929
      %1931 = vmatprep.subr.mxu0 0.0
      %v1932 = vand.u32 %v1206, 4294901760
      %v1933 = vsub.f32 %v1206, %v1932
      %v1934 = vand.u32 %v1933, 4294901760
      %1935 = vmatpush2.msra.mxu0 %v1934
      %1936 = vmatprep.subr.mxu0 0.0
      %v1937 = vand.u32 %v1205, 4294901760
      %v1938 = vsub.f32 %v1205, %v1937
      %v1939 = vand.u32 %v1938, 4294901760
      %1940 = vmatpush2.msra.mxu0 %v1939
      %1941 = vmatprep.subr.mxu0 0.0
      %v1942 = vand.u32 %v1204, 4294901760
      %v1943 = vsub.f32 %v1204, %v1942
      %v1944 = vand.u32 %v1943, 4294901760
      %1945 = vmatpush2.msra.mxu0 %v1944
      %1946 = vmatprep.subr.mxu0 0.0
      %v1947 = vand.u32 %v1203, 4294901760
      %v1948 = vsub.f32 %v1203, %v1947
      %v1949 = vand.u32 %v1948, 4294901760
      %1950 = vmatpush2.msra.mxu0 %v1949
      %1951 = vmatprep.subr.mxu0 0.0
      %v1952 = vand.u32 %v1202, 4294901760
      %v1953 = vsub.f32 %v1202, %v1952
      %v1954 = vand.u32 %v1953, 4294901760
      %1955 = vmatpush2.msra.mxu0 %v1954
      %1956 = vmatprep.subr.mxu0 0.0
      %v1957 = vand.u32 %v1201, 4294901760
      %v1958 = vsub.f32 %v1201, %v1957
      %v1959 = vand.u32 %v1958, 4294901760
      %1960 = vmatpush2.msra.mxu0 %v1959
      %1961 = vmatprep.subr.mxu0 0.0
      %v1962 = vand.u32 %v1200, 4294901760
      %v1963 = vsub.f32 %v1200, %v1962
      %v1964 = vand.u32 %v1963, 4294901760
      %1965 = vmatpush2.msra.mxu0 %v1964
      %1966 = vmatprep.subr.mxu0 0.0
      %v1967 = vand.u32 %v1199, 4294901760
      %v1968 = vsub.f32 %v1199, %v1967
      %v1969 = vand.u32 %v1968, 4294901760
      %1970 = vmatpush2.msra.mxu0 %v1969
      %1971 = vmatprep.subr.mxu0 0.0
      %v1972 = vand.u32 %v1198, 4294901760
      %v1973 = vsub.f32 %v1198, %v1972
      %v1974 = vand.u32 %v1973, 4294901760
      %1975 = vmatpush2.msra.mxu0 %v1974
      %1976 = vmatprep.subr.mxu0 0.0
      %v1977 = vand.u32 %v1197, 4294901760
      %v1978 = vsub.f32 %v1197, %v1977
      %v1979 = vand.u32 %v1978, 4294901760
      %1980 = vmatpush2.msra.mxu0 %v1979
      %1981 = vmatprep.subr.mxu0 0.0
      %v1982 = vand.u32 %v1196, 4294901760
      %v1983 = vsub.f32 %v1196, %v1982
      %v1984 = vand.u32 %v1983, 4294901760
      %1985 = vmatpush2.msra.mxu0 %v1984
      %1986 = vmatprep.subr.mxu0 0.0
      %v1987 = vand.u32 %v1195, 4294901760
      %v1988 = vsub.f32 %v1195, %v1987
      %v1989 = vand.u32 %v1988, 4294901760
      %1990 = vmatpush2.msra.mxu0 %v1989
      %1991 = vmatprep.subr.mxu0 0.0
      %v1992 = vand.u32 %v1194, 4294901760
      %v1993 = vsub.f32 %v1194, %v1992
      %v1994 = vand.u32 %v1993, 4294901760
      %1995 = vmatpush2.msra.mxu0 %v1994
      %1996 = vmatprep.subr.mxu0 0.0
      %v1997 = vand.u32 %v1193, 4294901760
      %v1998 = vsub.f32 %v1193, %v1997
      %v1999 = vand.u32 %v1998, 4294901760
      %2000 = vmatpush2.msra.mxu0 %v1999
      %v2001 = vand.u32 %v219, 4294901760
      %2002 = vmatprep.mubr.f32.mxu0 %v2001
      %v2003 = vand.u32 %v218, 4294901760
      %2004 = vmatmul.mubr.f32.gmra.mxu0 %v2003
      %v2005 = vpop.f32.mrf.mxu0
      %v2006 = vadd.f32 %v1827, %v2005
      %v2007 = vpop.f32.mrf.mxu0
      %v2008 = vand.u32 %v221, 4294901760
      %2009 = vmatprep.mubr.f32.mxu0 %v2008
      %v2010 = vand.u32 %v220, 4294901760
      %2011 = vmatmul.mubr.f32.gmra.mxu0 %v2010
      %v2012 = vpop.f32.mrf.mxu0
      %v2013 = vadd.f32 %v1838, %v2012
      %v2014 = vpop.f32.mrf.mxu0
      %2015 = vdwg.mxu0
      %2016 = vmatprep.subr.mxu0 0.0
      %v2017 = vand.u32 %v1192, 4294901760
      %2018 = vmatpush1.msra.mxu0 %v2017
      %2019 = vmatprep.subr.mxu0 0.0
      %v2020 = vand.u32 %v1191, 4294901760
      %2021 = vmatpush1.msra.mxu0 %v2020
      %2022 = vmatprep.subr.mxu0 0.0
      %v2023 = vand.u32 %v1190, 4294901760
      %2024 = vmatpush1.msra.mxu0 %v2023
      %2025 = vmatprep.subr.mxu0 0.0
      %v2026 = vand.u32 %v1189, 4294901760
      %2027 = vmatpush1.msra.mxu0 %v2026
      %2028 = vmatprep.subr.mxu0 0.0
      %v2029 = vand.u32 %v1188, 4294901760
      %2030 = vmatpush1.msra.mxu0 %v2029
      %2031 = vmatprep.subr.mxu0 0.0
      %v2032 = vand.u32 %v1187, 4294901760
      %2033 = vmatpush1.msra.mxu0 %v2032
      %2034 = vmatprep.subr.mxu0 0.0
      %v2035 = vand.u32 %v1186, 4294901760
      %2036 = vmatpush1.msra.mxu0 %v2035
      %2037 = vmatprep.subr.mxu0 0.0
      %v2038 = vand.u32 %v1185, 4294901760
      %2039 = vmatpush1.msra.mxu0 %v2038
      %2040 = vmatprep.subr.mxu0 0.0
      %v2041 = vand.u32 %v1184, 4294901760
      %2042 = vmatpush1.msra.mxu0 %v2041
      %2043 = vmatprep.subr.mxu0 0.0
      %v2044 = vand.u32 %v1183, 4294901760
      %2045 = vmatpush1.msra.mxu0 %v2044
      %2046 = vmatprep.subr.mxu0 0.0
      %v2047 = vand.u32 %v1182, 4294901760
      %2048 = vmatpush1.msra.mxu0 %v2047
      %2049 = vmatprep.subr.mxu0 0.0
      %v2050 = vand.u32 %v1181, 4294901760
      %2051 = vmatpush1.msra.mxu0 %v2050
      %2052 = vmatprep.subr.mxu0 0.0
      %v2053 = vand.u32 %v1180, 4294901760
      %2054 = vmatpush1.msra.mxu0 %v2053
      %2055 = vmatprep.subr.mxu0 0.0
      %v2056 = vand.u32 %v1179, 4294901760
      %2057 = vmatpush1.msra.mxu0 %v2056
      %2058 = vmatprep.subr.mxu0 0.0
      %v2059 = vand.u32 %v1178, 4294901760
      %2060 = vmatpush1.msra.mxu0 %v2059
      %2061 = vmatprep.subr.mxu0 0.0
      %v2062 = vand.u32 %v1177, 4294901760
      %2063 = vmatpush1.msra.mxu0 %v2062
      %2064 = vmatprep.subr.mxu0 0.0
      %v2065 = vand.u32 %v1208, 4294901760
      %2066 = vmatpush2.msra.mxu0 %v2065
      %2067 = vmatprep.subr.mxu0 0.0
      %v2068 = vand.u32 %v1207, 4294901760
      %2069 = vmatpush2.msra.mxu0 %v2068
      %2070 = vmatprep.subr.mxu0 0.0
      %v2071 = vand.u32 %v1206, 4294901760
      %2072 = vmatpush2.msra.mxu0 %v2071
      %2073 = vmatprep.subr.mxu0 0.0
      %v2074 = vand.u32 %v1205, 4294901760
      %2075 = vmatpush2.msra.mxu0 %v2074
      %2076 = vmatprep.subr.mxu0 0.0
      %v2077 = vand.u32 %v1204, 4294901760
      %2078 = vmatpush2.msra.mxu0 %v2077
      %2079 = vmatprep.subr.mxu0 0.0
      %v2080 = vand.u32 %v1203, 4294901760
      %2081 = vmatpush2.msra.mxu0 %v2080
      %2082 = vmatprep.subr.mxu0 0.0
      %v2083 = vand.u32 %v1202, 4294901760
      %2084 = vmatpush2.msra.mxu0 %v2083
      %2085 = vmatprep.subr.mxu0 0.0
      %v2086 = vand.u32 %v1201, 4294901760
      %2087 = vmatpush2.msra.mxu0 %v2086
      %2088 = vmatprep.subr.mxu0 0.0
      %v2089 = vand.u32 %v1200, 4294901760
      %2090 = vmatpush2.msra.mxu0 %v2089
      %2091 = vmatprep.subr.mxu0 0.0
      %v2092 = vand.u32 %v1199, 4294901760
      %2093 = vmatpush2.msra.mxu0 %v2092
      %2094 = vmatprep.subr.mxu0 0.0
      %v2095 = vand.u32 %v1198, 4294901760
      %2096 = vmatpush2.msra.mxu0 %v2095
      %2097 = vmatprep.subr.mxu0 0.0
      %v2098 = vand.u32 %v1197, 4294901760
      %2099 = vmatpush2.msra.mxu0 %v2098
      %2100 = vmatprep.subr.mxu0 0.0
      %v2101 = vand.u32 %v1196, 4294901760
      %2102 = vmatpush2.msra.mxu0 %v2101
      %2103 = vmatprep.subr.mxu0 0.0
      %v2104 = vand.u32 %v1195, 4294901760
      %2105 = vmatpush2.msra.mxu0 %v2104
      %2106 = vmatprep.subr.mxu0 0.0
      %v2107 = vand.u32 %v1194, 4294901760
      %2108 = vmatpush2.msra.mxu0 %v2107
      %2109 = vmatprep.subr.mxu0 0.0
      %v2110 = vand.u32 %v1193, 4294901760
      %2111 = vmatpush2.msra.mxu0 %v2110
      %v2112 = vand.u32 %v219, 4294901760
      %2113 = vmatprep.mubr.f32.mxu0 %v2112
      %v2114 = vand.u32 %v218, 4294901760
      %2115 = vmatmul.mubr.f32.gmra.mxu0 %v2114
      %v2116 = vpop.f32.mrf.mxu0
      %v2117 = vadd.f32 %v2006, %v2116
      %v2118 = vpop.f32.mrf.mxu0
      %v2119 = vand.u32 %v221, 4294901760
      %2120 = vmatprep.mubr.f32.mxu0 %v2119
      %v2121 = vand.u32 %v220, 4294901760
      %2122 = vmatmul.mubr.f32.gmra.mxu0 %v2121
      %v2123 = vpop.f32.mrf.mxu0
      %v2124 = vadd.f32 %v2013, %v2123
      %v2125 = vpop.f32.mrf.mxu0
      %2126 = vdwg.mxu0
      %v2127 = vmul.f32 %v2117, 0.0625
      %v2128 = vmul.f32 %v2124, 0.0625
      %2129 = vst.msk [vmem:[%s216] sm:$0xff] %vm1174, %v2127
      %2130 = vst.msk [vmem:[%s216 + $0x8] sm:$0xff] %vm1174, %v2128
      %s2131 = smul.u32 2, %s16
      %p2132 = scmp.lt.s32.totalorder %s2131, 7
      %s2133 = scalar_select %p2132, %s2131, 7
      %s2134 = smul.addr %s2133, 8
      %s2135 = scalar_lea.vmem %s3, %s2134
      %s2136 = smul.u32 2, %s16
      %p2137 = scmp.lt.s32.totalorder %s2136, 7
      %s2138 = scalar_select %p2137, %s2136, 7
      %s2139 = smul.addr %s2138, 8
      %s2140 = scalar_lea.vmem %s4, %s2139
      // Predicated region
      $region33: #{ca_att_block.3} parent=31 // pred_check
        %p2141 = pneg %p102
      $region34: #{ca_att_block.3} parent=31 // pred_check_branch
        %2143 = sbr.rel (%p2141) target = $region36
      $region35: #{ca_att_block.3} parent=31 // pred_region
        %s2144 = smul.u32 2, %s16
      $region36: #{ca_att_block.3} parent=31 // pred_fallthru
        _
      // Predicated region
      $region37: #{ca_att_block.3} parent=31 // pred_check
        %p2145 = pneg %p128
      $region38: #{ca_att_block.3} parent=31 // pred_check_branch
        %2147 = sbr.rel (%p2145) target = $region40
      $region39: #{ca_att_block.3} parent=31 // pred_region
        %s2148 = smul.u32 2, %s16
      $region40: #{ca_att_block.3} parent=31 // pred_fallthru
        _
    $region32: #{ca_att_block.3} parent=5 // pred_fallthru
      _
    %p2149 = scmp.le.s32.totalorder 2, %s11
    // Predicated region
    $region41: #{ca_att_block.3} parent=5 // pred_check
      %p2150 = pneg %p2149
    $region42: #{ca_att_block.3} parent=5 // pred_check_branch
      %2152 = sbr.rel (%p2150) target = $region44
    $region43: #{ca_att_block.3} parent=5 // pred_region
      %s2153 = ssub.s32 %s11, 2
      // Predicated region
      $region45: #{ca_att_block.3} parent=43 // pred_check
        %p2154 = pneg %p108
      $region46: #{ca_att_block.3} parent=43 // pred_check_branch
        %2156 = sbr.rel (%p2154) target = $region48
      $region47: #{ca_att_block.3} parent=43 // pred_region
        %s2157 = smul.u32 2, %s17
        %p2158 = scmp.lt.s32.totalorder %s2157, 7
        %s2159 = scalar_select %p2158, %s2157, 7
        %s2160 = smul.addr %s2159, 8
        %s2161 = scalar_lea.vmem %s3, %s2160
      $region48: #{ca_att_block.3} parent=43 // pred_fallthru
        _
      // Predicated region
      $region49: #{ca_att_block.3} parent=43 // pred_check
        %p2162 = pneg %p134
      $region50: #{ca_att_block.3} parent=43 // pred_check_branch
        %2164 = sbr.rel (%p2162) target = $region52
      $region51: #{ca_att_block.3} parent=43 // pred_region
        %s2165 = smul.u32 2, %s17
        %p2166 = scmp.lt.s32.totalorder %s2165, 7
        %s2167 = scalar_select %p2166, %s2165, 7
        %s2168 = smul.addr %s2167, 8
        %s2169 = scalar_lea.vmem %s4, %s2168
      $region52: #{ca_att_block.3} parent=43 // pred_fallthru
        _
    $region44: #{ca_att_block.3} parent=5 // pred_fallthru
      _
  $region6: #{ca_att_block.3} parent=0 // loop_footer
    %s15 = sadd.s32 1, %s11
  $region7: #{ca_att_block.3} parent=0 // loop_footer_branch
    %10 = sbr.rel target = $region3
  $region8: #{ca_att_block.3} parent=0 // loop_exit
    _

// kernel: ca_att_block.5
$region0: #{ca_att_block.5}
  #allocation0 [shape = 'u32[]', space=smem, size = 0x4, offset = 0x4, fixed_abs, tag = 'smem constant byte address 0x4 - core index']
  #allocation1 [shape = 'u32[144,128]{1,0:T(1,128)}', space=vmem, size = 0x12000, scoped, tag = 'internal scratch']
  %s0 = inlined_call_operand.vmem [shape: f32[64,256], index: 0, kind: input, shape index: {}]
  %s1 = inlined_call_operand.vmem [shape: bf16[64,64], index: 1, kind: input, shape index: {}]
  %s2 = inlined_call_operand.vmem [shape: bf16[32,256], index: 2, kind: input, shape index: {}]
  %s3 = inlined_call_operand.vmem [shape: bf16[32,256], index: 3, kind: input, shape index: {}]
  %s4 = inlined_call_operand.vmem [shape: f32[64,256], index: 4, kind: output, shape index: {}]
  %s5 = sld [smem:[#allocation0]]
  $region49: #{ca_att_block.5} parent=0
    _
  %s7 = ssub.s32 1, %s5
  %s8 = scalar_select 0, %s7, %s5
  loop: start=0, step=1, limit=6
  $region2: #{ca_att_block.5} parent=0 // loop_pre_header
    _
  $region3: #{ca_att_block.5} parent=0 // loop_header
    %s10 = sphi 0, %s14
    %p11 = scmp.ge.s32.totalorder %s10, 6
    %s20 = sphi 0, %s22
    %s23 = sphi 0, %s20
    %s24 = sphi 0, %s23
    %s40 = sphi 0, %s24
    %s46 = sphi 0, %s48
    %s49 = sphi 0, %s46
    %s50 = sphi 0, %s49
    %s66 = sphi 0, %s50
    %s70 = sphi 0, %s70
    %s72 = sphi 0, %s70
    %s73 = sphi 0, %s72
    %s87 = sphi 0, %s73
    %s91 = sphi 0, %s91
    %s93 = sphi 0, %s91
    %s94 = sphi 0, %s93
    %s108 = sphi 0, %s94
    %s114 = sphi 0, %s116
    %s117 = sphi 0, %s114
    %s118 = sphi 0, %s117
    %s134 = sphi 0, %s118
  $region4: #{ca_att_block.5} parent=0 // loop_header_branch
    %13 = sbr.rel (%p11) target = $region8
  $region5: #{ca_att_block.5} parent=0 // loop_body
    %s15 = ssub.s32 %s10, 1
    %s16 = ssub.s32 %s10, 2
    %s17 = sadd.s32 %s10, 1
    %s18 = ssub.s32 %s10, %s17
    %p19 = scmp.eq.s32.totalorder %s18, 0
    %s21 = sadd.s32 %s20, 1
    %s22 = scalar_select %p19, %s20, %s21
    %p25 = pneg %p19
    %p26 = scmp.eq.s32.totalorder %s10, 3
    %p27 = por %p25, %p26
    %p28 = scmp.ne.s32.totalorder %s20, %s23
    %p29 = scmp.eq.s32.totalorder %s10, 0
    %p30 = por %p28, %p29
    %p31 = scmp.ne.s32.totalorder %s20, %s23
    %p32 = scmp.eq.s32.totalorder %s15, 3
    %p33 = por %p31, %p32
    %p34 = scmp.ne.s32.totalorder %s23, %s24
    %p35 = scmp.eq.s32.totalorder %s15, 0
    %p36 = por %p34, %p35
    %p37 = scmp.ne.s32.totalorder %s23, %s24
    %p38 = scmp.eq.s32.totalorder %s16, 3
    %p39 = por %p37, %p38
    %p41 = scmp.ne.s32.totalorder %s24, %s40
    %p42 = scmp.eq.s32.totalorder %s16, 0
    %p43 = por %p41, %p42
    %s44 = ssub.s32 %s10, %s17
    %p45 = scmp.eq.s32.totalorder %s44, 0
    %s47 = sadd.s32 %s46, 1
    %s48 = scalar_select %p45, %s46, %s47
    %p51 = pneg %p45
    %p52 = scmp.eq.s32.totalorder %s10, 3
    %p53 = por %p51, %p52
    %p54 = scmp.ne.s32.totalorder %s46, %s49
    %p55 = scmp.eq.s32.totalorder %s10, 0
    %p56 = por %p54, %p55
    %p57 = scmp.ne.s32.totalorder %s46, %s49
    %p58 = scmp.eq.s32.totalorder %s15, 3
    %p59 = por %p57, %p58
    %p60 = scmp.ne.s32.totalorder %s49, %s50
    %p61 = scmp.eq.s32.totalorder %s15, 0
    %p62 = por %p60, %p61
    %p63 = scmp.ne.s32.totalorder %s49, %s50
    %p64 = scmp.eq.s32.totalorder %s16, 3
    %p65 = por %p63, %p64
    %p67 = scmp.ne.s32.totalorder %s50, %s66
    %p68 = scmp.eq.s32.totalorder %s16, 0
    %p69 = por %p67, %p68
    %s71 = sadd.s32 %s70, 1
    %p74 = scmp.eq.s32.totalorder %s10, 3
    %p75 = scmp.ne.s32.totalorder %s70, %s72
    %p76 = scmp.eq.s32.totalorder %s10, 0
    %p77 = por %p75, %p76
    %p78 = scmp.ne.s32.totalorder %s70, %s72
    %p79 = scmp.eq.s32.totalorder %s15, 3
    %p80 = por %p78, %p79
    %p81 = scmp.ne.s32.totalorder %s72, %s73
    %p82 = scmp.eq.s32.totalorder %s15, 0
    %p83 = por %p81, %p82
    %p84 = scmp.ne.s32.totalorder %s72, %s73
    %p85 = scmp.eq.s32.totalorder %s16, 3
    %p86 = por %p84, %p85
    %p88 = scmp.ne.s32.totalorder %s73, %s87
    %p89 = scmp.eq.s32.totalorder %s16, 0
    %p90 = por %p88, %p89
    %s92 = sadd.s32 %s91, 1
    %p95 = scmp.eq.s32.totalorder %s10, 3
    %p96 = scmp.ne.s32.totalorder %s91, %s93
    %p97 = scmp.eq.s32.totalorder %s10, 0
    %p98 = por %p96, %p97
    %p99 = scmp.ne.s32.totalorder %s91, %s93
    %p100 = scmp.eq.s32.totalorder %s15, 3
    %p101 = por %p99, %p100
    %p102 = scmp.ne.s32.totalorder %s93, %s94
    %p103 = scmp.eq.s32.totalorder %s15, 0
    %p104 = por %p102, %p103
    %p105 = scmp.ne.s32.totalorder %s93, %s94
    %p106 = scmp.eq.s32.totalorder %s16, 3
    %p107 = por %p105, %p106
    %p109 = scmp.ne.s32.totalorder %s94, %s108
    %p110 = scmp.eq.s32.totalorder %s16, 0
    %p111 = por %p109, %p110
    %s112 = ssub.s32 %s10, %s17
    %p113 = scmp.eq.s32.totalorder %s112, 0
    %s115 = sadd.s32 %s114, 1
    %s116 = scalar_select %p113, %s114, %s115
    %p119 = pneg %p113
    %p120 = scmp.eq.s32.totalorder %s10, 3
    %p121 = por %p119, %p120
    %p122 = scmp.ne.s32.totalorder %s114, %s117
    %p123 = scmp.eq.s32.totalorder %s10, 0
    %p124 = por %p122, %p123
    %p125 = scmp.ne.s32.totalorder %s114, %s117
    %p126 = scmp.eq.s32.totalorder %s15, 3
    %p127 = por %p125, %p126
    %p128 = scmp.ne.s32.totalorder %s117, %s118
    %p129 = scmp.eq.s32.totalorder %s15, 0
    %p130 = por %p128, %p129
    %p131 = scmp.ne.s32.totalorder %s117, %s118
    %p132 = scmp.eq.s32.totalorder %s16, 3
    %p133 = por %p131, %p132
    %p135 = scmp.ne.s32.totalorder %s118, %s134
    %p136 = scmp.eq.s32.totalorder %s16, 0
    %p137 = por %p135, %p136
    %p138 = scmp.le.s32.totalorder 1, %s10
    %p139 = scmp.lt.s32.totalorder %s10, 5
    %p140 = pnand %p138, %p139
    %p141 = pneg %p140
    // Predicated region
    $region9: #{ca_att_block.5} parent=5 // pred_check
      _
    $region10: #{ca_att_block.5} parent=5 // pred_check_branch
      %143 = sbr.rel (%p140) target = $region12
    $region11: #{ca_att_block.5} parent=5 // pred_region
      %s144 = ssub.s32 %s10, 1
      // Predicated region
      $region13: #{ca_att_block.5} parent=11 // pred_check
        %p145 = pneg %p83
      $region14: #{ca_att_block.5} parent=11 // pred_check_branch
        %147 = sbr.rel (%p145) target = $region16
      $region15: #{ca_att_block.5} parent=11 // pred_region
        _
      $region16: #{ca_att_block.5} parent=11 // pred_fallthru
        _
      // Predicated region
      $region17: #{ca_att_block.5} parent=11 // pred_check
        %p148 = pneg %p104
      $region18: #{ca_att_block.5} parent=11 // pred_check_branch
        %150 = sbr.rel (%p148) target = $region20
      $region19: #{ca_att_block.5} parent=11 // pred_region
        _
      $region20: #{ca_att_block.5} parent=11 // pred_fallthru
        _
    $region12: #{ca_att_block.5} parent=5 // pred_fallthru
      _
    %p151 = scmp.lt.s32.totalorder %s10, 4
    // Predicated region
    $region21: #{ca_att_block.5} parent=5 // pred_check
      %p152 = pneg %p151
    $region22: #{ca_att_block.5} parent=5 // pred_check_branch
      %154 = sbr.rel (%p152) target = $region24
    $region23: #{ca_att_block.5} parent=5 // pred_region
      // Predicated region
      $region25: #{ca_att_block.5} parent=23 // pred_check
        %p155 = pneg %p30
      $region26: #{ca_att_block.5} parent=23 // pred_check_branch
        %157 = sbr.rel (%p155) target = $region28
      $region27: #{ca_att_block.5} parent=23 // pred_region
        %s158 = smul.u32 2, %s10
        %p159 = scmp.lt.s32.totalorder %s158, 7
        %s160 = scalar_select %p159, %s158, 7
        %s161 = smul.addr %s160, 2
        %s162 = smul.addr %s161, 8
        %s163 = scalar_lea.vmem %s0, %s162
        %s164 = smul.u32 2, %s10
      $region28: #{ca_att_block.5} parent=23 // pred_fallthru
        _
      // Predicated region
      $region29: #{ca_att_block.5} parent=23 // pred_check
        %p165 = pneg %p56
      $region30: #{ca_att_block.5} parent=23 // pred_check_branch
        %167 = sbr.rel (%p165) target = $region32
      $region31: #{ca_att_block.5} parent=23 // pred_region
        %s168 = smul.u32 2, %s10
        %p169 = scmp.lt.s32.totalorder %s168, 7
        %s170 = scalar_select %p169, %s168, 7
        %s171 = smul.addr %s170, 4
        %s172 = scalar_lea.vmem %s1, %s171
        %s173 = smul.u32 2, %s10
      $region32: #{ca_att_block.5} parent=23 // pred_fallthru
        _
    $region24: #{ca_att_block.5} parent=5 // pred_fallthru
      _
    %p174 = scmp.le.s32.totalorder 1, %s10
    %p175 = scmp.lt.s32.totalorder %s10, 5
    %p176 = pnand %p174, %p175
    %p177 = pneg %p176
    // Predicated region
    $region33: #{ca_att_block.5} parent=5 // pred_check
      _
    $region34: #{ca_att_block.5} parent=5 // pred_check_branch
      %179 = sbr.rel (%p176) target = $region36
    $region35: #{ca_att_block.5} parent=5 // pred_region
      %s180 = ssub.s32 %s10, 1
      %s181 = smul.u32 2, %s15
      %p182 = scmp.lt.s32.totalorder %s181, 7
      %s183 = scalar_select %p182, %s181, 7
      %s184 = smul.addr %s183, 2
      %s185 = smul.addr %s184, 8
      %s186 = scalar_lea.vmem %s0, %s185
      %p187 = pneg %p36
      %p188 = pneg %p33
      %s189 = smul.u32 2, %s15
      %p190 = scmp.lt.s32.totalorder %s189, 7
      %s191 = scalar_select %p190, %s189, 7
      %s192 = smul.addr %s191, 4
      %s193 = scalar_lea.vmem %s1, %s192
      %p194 = pneg %p62
      %p195 = pneg %p59
      %p196 = pneg %p83
      %p197 = pneg %p80
      %p198 = pneg %p104
      %p199 = pneg %p101
      %p200 = pneg %p130
      %p201 = pneg %p127
      %s202 = smul.u32 2, %s15
      %p203 = scmp.lt.s32.totalorder %s202, 7
      %s204 = scalar_select %p203, %s202, 7
      %s205 = smul.addr %s204, 2
      %s206 = smul.addr %s205, 8
      %s207 = scalar_lea.vmem %s4, %s206
      %s208 = smul.u32 2, %s15
      %p209 = scmp.lt.s32.totalorder %s208, 7
      %s210 = scalar_select %p209, %s208, 7
      %s211 = smul.addr %s210, 2
      %s212 = smul.addr %s211, 8
      %s213 = scalar_lea.vmem %s0, %s212
      %s214 = smul.u32 2, %s15
      %s215 = smul.u32 2, %s15
      %p216 = scmp.lt.s32.totalorder %s215, 7
      %s217 = scalar_select %p216, %s215, 7
      %s218 = smul.addr %s217, 4
      %s219 = scalar_lea.vmem %s1, %s218
      %s220 = smul.u32 2, %s15
      %s221 = smul.u32 2, %s15
      %p222 = scmp.lt.s32.totalorder %s221, 7
      %s223 = scalar_select %p222, %s221, 7
      %s224 = smul.addr %s223, 2
      %s225 = smul.addr %s224, 8
      %s226 = scalar_lea.vmem %s4, %s225
      %s227 = smul.u32 2, %s15
      %v229 = vld [vmem:[%s219] sm:$0xf]
      %v230 = vld [vmem:[%s219 + $0x4] sm:$0xf]
      %v231 = vld [vmem:[%s2] sm:$0xff]
      %v232 = vld [vmem:[%s2 + $0x8] sm:$0xff]
      %v233 = vld [vmem:[%s2 + $0x10] sm:$0xff]
      %v234 = vld [vmem:[%s2 + $0x18] sm:$0xff]
      %v237 = vunpack.c.l.b16 %v229
      %v238 = vunpack.c.l.b16 %v230
      %v239 = vpack.c.b16 %v238, %v237
      %v244 = vunpack.c.l.b16 %v231
      %v245 = vunpack.c.h.b16 %v231
      %v246 = vunpack.c.l.b16 %v232
      %v247 = vunpack.c.h.b16 %v232
      %v248 = vunpack.c.l.b16 %v233
      %v249 = vunpack.c.h.b16 %v233
      %v250 = vunpack.c.l.b16 %v234
      %v251 = vunpack.c.h.b16 %v234
      %v252 = vpack.c.b16 %v246, %v244
      %v253 = vpack.c.b16 %v247, %v245
      %v254 = vpack.c.b16 %v250, %v248
      %v255 = vpack.c.b16 %v251, %v249
      %vm260 = vcmask 261120
      %v262 = vsel %vm260, %v239, 0
      %264 = vmatprep.subr.bf16.mxu0 0
      %265 = vmatpush1.bf16.msra.mxu0 0
      %266 = vmatprep.subr.bf16.mxu0 0
      %267 = vmatpush1.bf16.msra.mxu0 0
      %268 = vmatprep.subr.bf16.mxu0 0
      %269 = vmatpush1.bf16.msra.mxu0 0
      %270 = vmatprep.subr.bf16.mxu0 0
      %271 = vmatpush1.bf16.msra.mxu0 0
      %272 = vmatprep.subr.bf16.mxu0 0
      %273 = vmatpush1.bf16.msra.mxu0 0
      %274 = vmatprep.subr.bf16.mxu0 0
      %275 = vmatpush1.bf16.msra.mxu0 0
      %276 = vmatprep.subr.bf16.mxu0 %v255
      %277 = vmatpush1.bf16.msra.mxu0 %v254
      %278 = vmatprep.subr.bf16.mxu0 %v253
      %279 = vmatpush1.bf16.msra.mxu0 %v252
      %280 = vmatprep.subr.bf16.mxu0 0
      %281 = vmatpush2.bf16.msra.mxu0 0
      %282 = vmatprep.subr.bf16.mxu0 0
      %283 = vmatpush2.bf16.msra.mxu0 0
      %284 = vmatprep.subr.bf16.mxu0 0
      %285 = vmatpush2.bf16.msra.mxu0 0
      %286 = vmatprep.subr.bf16.mxu0 0
      %287 = vmatpush2.bf16.msra.mxu0 0
      %288 = vmatprep.subr.bf16.mxu0 0
      %289 = vmatpush2.bf16.msra.mxu0 0
      %290 = vmatprep.subr.bf16.mxu0 0
      %291 = vmatpush2.bf16.msra.mxu0 0
      %292 = vmatprep.subr.bf16.mxu0 0
      %293 = vmatpush2.bf16.msra.mxu0 0
      %294 = vmatprep.subr.bf16.mxu0 0
      %295 = vmatpush2.bf16.msra.mxu0 0
      %296 = vmatprep.mubr.bf16.mxu0 0
      %297 = vmatmul.mubr.bf16.gmra.mxu0 %v262
      %v298 = vpop.f32.mrf.mxu0
      %v299 = vadd.f32 0.0, %v298
      %v300 = vpop.f32.mrf.mxu0
      %v301 = vadd.f32 0.0, %v300
      %v302 = vpop.f32.mrf.mxu0
      %v303 = vadd.f32 0.0, %v302
      %v304 = vpop.f32.mrf.mxu0
      %v305 = vadd.f32 0.0, %v304
      %306 = vdwg.mxu0
      %v307 = vld [vmem:[%s3] sm:$0xff]
      %v308 = vld [vmem:[%s3 + $0x8] sm:$0xff]
      %v309 = vld [vmem:[%s3 + $0x10] sm:$0xff]
      %v310 = vld [vmem:[%s3 + $0x18] sm:$0xff]
      %311 = vrot.lane.b32.xlu0 %v239, 96
      %v312 = vpop.permute.xlu0 %311
      %v317 = vunpack.c.l.b16 %v307
      %v318 = vunpack.c.h.b16 %v307
      %v319 = vunpack.c.l.b16 %v308
      %v320 = vunpack.c.h.b16 %v308
      %v321 = vunpack.c.l.b16 %v309
      %v322 = vunpack.c.h.b16 %v309
      %v323 = vunpack.c.l.b16 %v310
      %v324 = vunpack.c.h.b16 %v310
      %v325 = vpack.c.b16 %v319, %v317
      %v326 = vpack.c.b16 %v320, %v318
      %v327 = vpack.c.b16 %v323, %v321
      %v328 = vpack.c.b16 %v324, %v322
      %v334 = vsel %vm260, %v312, 0
      %336 = vmatprep.subr.bf16.mxu0 0
      %337 = vmatpush1.bf16.msra.mxu0 0
      %338 = vmatprep.subr.bf16.mxu0 0
      %339 = vmatpush1.bf16.msra.mxu0 0
      %340 = vmatprep.subr.bf16.mxu0 0
      %341 = vmatpush1.bf16.msra.mxu0 0
      %342 = vmatprep.subr.bf16.mxu0 0
      %343 = vmatpush1.bf16.msra.mxu0 0
      %344 = vmatprep.subr.bf16.mxu0 0
      %345 = vmatpush1.bf16.msra.mxu0 0
      %346 = vmatprep.subr.bf16.mxu0 0
      %347 = vmatpush1.bf16.msra.mxu0 0
      %348 = vmatprep.subr.bf16.mxu0 %v328
      %349 = vmatpush1.bf16.msra.mxu0 %v327
      %350 = vmatprep.subr.bf16.mxu0 %v326
      %351 = vmatpush1.bf16.msra.mxu0 %v325
      %352 = vmatprep.subr.bf16.mxu0 0
      %353 = vmatpush2.bf16.msra.mxu0 0
      %354 = vmatprep.subr.bf16.mxu0 0
      %355 = vmatpush2.bf16.msra.mxu0 0
      %356 = vmatprep.subr.bf16.mxu0 0
      %357 = vmatpush2.bf16.msra.mxu0 0
      %358 = vmatprep.subr.bf16.mxu0 0
      %359 = vmatpush2.bf16.msra.mxu0 0
      %360 = vmatprep.subr.bf16.mxu0 0
      %361 = vmatpush2.bf16.msra.mxu0 0
      %362 = vmatprep.subr.bf16.mxu0 0
      %363 = vmatpush2.bf16.msra.mxu0 0
      %364 = vmatprep.subr.bf16.mxu0 0
      %365 = vmatpush2.bf16.msra.mxu0 0
      %366 = vmatprep.subr.bf16.mxu0 0
      %367 = vmatpush2.bf16.msra.mxu0 0
      %368 = vmatprep.mubr.bf16.mxu0 0
      %369 = vmatmul.mubr.bf16.gmra.mxu0 %v334
      %v370 = vpop.f32.mrf.mxu0
      %v371 = vadd.f32 0.0, %v370
      %v372 = vpop.f32.mrf.mxu0
      %v373 = vadd.f32 0.0, %v372
      %v374 = vpop.f32.mrf.mxu0
      %v375 = vadd.f32 0.0, %v374
      %v376 = vpop.f32.mrf.mxu0
      %v377 = vadd.f32 0.0, %v376
      %378 = vdwg.mxu0
      %v379 = vld [vmem:[%s213] sm:$0xff]
      %v380 = vld [vmem:[%s213 + $0x8] sm:$0xff]
      %v381 = vld [vmem:[%s213 + $0x10] sm:$0xff]
      %v382 = vld [vmem:[%s213 + $0x18] sm:$0xff]
      %v383 = vmul.f32 %v379, %v299
      %v384 = vmul.f32 %v380, %v301
      %v385 = vmul.f32 %v381, %v303
      %v386 = vmul.f32 %v382, %v305
      %v387 = vmul.f32 %v383, %v371
      %v388 = vmul.f32 %v384, %v373
      %v389 = vmul.f32 %v385, %v375
      %v390 = vmul.f32 %v386, %v377
      %391 = vst [vmem:[%s226] sm:$0xff] %v387
      %392 = vst [vmem:[%s226 + $0x8] sm:$0xff] %v388
      %393 = vst [vmem:[%s226 + $0x10] sm:$0xff] %v389
      %394 = vst [vmem:[%s226 + $0x18] sm:$0xff] %v390
      %s395 = smul.u32 2, %s15
      %p396 = scmp.lt.s32.totalorder %s395, 7
      %s397 = scalar_select %p396, %s395, 7
      %s398 = smul.addr %s397, 2
      %s399 = smul.addr %s398, 8
      %s400 = scalar_lea.vmem %s4, %s399
      // Predicated region
      $region37: #{ca_att_block.5} parent=35 // pred_check
        %p401 = pneg %p127
      $region38: #{ca_att_block.5} parent=35 // pred_check_branch
        %403 = sbr.rel (%p401) target = $region40
      $region39: #{ca_att_block.5} parent=35 // pred_region
        %s404 = smul.u32 2, %s15
      $region40: #{ca_att_block.5} parent=35 // pred_fallthru
        _
    $region36: #{ca_att_block.5} parent=5 // pred_fallthru
      _
    %p405 = scmp.le.s32.totalorder 2, %s10
    // Predicated region
    $region41: #{ca_att_block.5} parent=5 // pred_check
      %p406 = pneg %p405
    $region42: #{ca_att_block.5} parent=5 // pred_check_branch
      %408 = sbr.rel (%p406) target = $region44
    $region43: #{ca_att_block.5} parent=5 // pred_region
      %s409 = ssub.s32 %s10, 2
      // Predicated region
      $region45: #{ca_att_block.5} parent=43 // pred_check
        %p410 = pneg %p133
      $region46: #{ca_att_block.5} parent=43 // pred_check_branch
        %412 = sbr.rel (%p410) target = $region48
      $region47: #{ca_att_block.5} parent=43 // pred_region
        %s413 = smul.u32 2, %s16
        %p414 = scmp.lt.s32.totalorder %s413, 7
        %s415 = scalar_select %p414, %s413, 7
        %s416 = smul.addr %s415, 2
        %s417 = smul.addr %s416, 8
        %s418 = scalar_lea.vmem %s4, %s417
      $region48: #{ca_att_block.5} parent=43 // pred_fallthru
        _
    $region44: #{ca_att_block.5} parent=5 // pred_fallthru
      _
  $region6: #{ca_att_block.5} parent=0 // loop_footer
    %s14 = sadd.s32 1, %s10
  $region7: #{ca_att_block.5} parent=0 // loop_footer_branch
    %9 = sbr.rel target = $region3
  $region8: #{ca_att_block.5} parent=0 // loop_exit
    _

// kernel: ca_att_block.4
$region0: #{ca_att_block.4}
  #allocation0 [shape = 'u32[]', space=smem, size = 0x4, offset = 0x4, fixed_abs, tag = 'smem constant byte address 0x4 - core index']
  #allocation1 [shape = 'u32[144,128]{1,0:T(1,128)}', space=vmem, size = 0x12000, scoped, tag = 'internal scratch']
  %s0 = inlined_call_operand.vmem [shape: f32[32,32], index: 0, kind: input, shape index: {}]
  %s1 = inlined_call_operand.vmem [shape: f32[32,32], index: 1, kind: input, shape index: {}]
  %s2 = inlined_call_operand.vmem [shape: f32[32,8], index: 2, kind: input, shape index: {}]
  %s3 = inlined_call_operand.vmem [shape: f32[1,8], index: 3, kind: input, shape index: {}]
  %s4 = inlined_call_operand.vmem [shape: f32[1,8], index: 4, kind: input, shape index: {}]
  %s5 = inlined_call_operand.vmem [shape: f32[1,8], index: 5, kind: input, shape index: {}]
  %s6 = inlined_call_operand.vmem [shape: f32[8,32], index: 6, kind: input, shape index: {}]
  %s7 = inlined_call_operand.vmem [shape: f32[1,32], index: 7, kind: input, shape index: {}]
  %s8 = inlined_call_operand.vmem [shape: f32[8,32], index: 8, kind: input, shape index: {}]
  %s9 = inlined_call_operand.vmem [shape: f32[1,32], index: 9, kind: input, shape index: {}]
  %s10 = inlined_call_operand.vmem [shape: f32[32,32], index: 10, kind: output, shape index: {0}]
  %s11 = inlined_call_operand.vmem [shape: f32[32,32], index: 11, kind: output, shape index: {1}]
  %12 = xla_tuple %s10, %s11
  %s13 = sld [smem:[#allocation0]]
  $region58: #{ca_att_block.4} parent=0
    _
  %s15 = ssub.s32 1, %s13
  %s16 = scalar_select 0, %s15, %s13
  // Predicated region
  $region2: #{ca_att_block.4} parent=0 // pred_check
    _
  $region3: #{ca_att_block.4} parent=0 // pred_check_branch
    %18 = sbr.rel (0) target = $region5
  $region4: #{ca_att_block.4} parent=0 // pred_region
    _
  $region5: #{ca_att_block.4} parent=0 // pred_fallthru
    _
  // Predicated region
  $region6: #{ca_att_block.4} parent=0 // pred_check
    _
  $region7: #{ca_att_block.4} parent=0 // pred_check_branch
    %20 = sbr.rel (0) target = $region9
  $region8: #{ca_att_block.4} parent=0 // pred_region
    _
  $region9: #{ca_att_block.4} parent=0 // pred_fallthru
    _
  // Predicated region
  $region10: #{ca_att_block.4} parent=0 // pred_check
    _
  $region11: #{ca_att_block.4} parent=0 // pred_check_branch
    %22 = sbr.rel (0) target = $region13
  $region12: #{ca_att_block.4} parent=0 // pred_region
    _
  $region13: #{ca_att_block.4} parent=0 // pred_fallthru
    _
  // Predicated region
  $region14: #{ca_att_block.4} parent=0 // pred_check
    _
  $region15: #{ca_att_block.4} parent=0 // pred_check_branch
    %24 = sbr.rel (0) target = $region17
  $region16: #{ca_att_block.4} parent=0 // pred_region
    _
  $region17: #{ca_att_block.4} parent=0 // pred_fallthru
    _
  // Predicated region
  $region18: #{ca_att_block.4} parent=0 // pred_check
    _
  $region19: #{ca_att_block.4} parent=0 // pred_check_branch
    %26 = sbr.rel (0) target = $region21
  $region20: #{ca_att_block.4} parent=0 // pred_region
    _
  $region21: #{ca_att_block.4} parent=0 // pred_fallthru
    _
  // Predicated region
  $region22: #{ca_att_block.4} parent=0 // pred_check
    _
  $region23: #{ca_att_block.4} parent=0 // pred_check_branch
    %28 = sbr.rel (0) target = $region25
  $region24: #{ca_att_block.4} parent=0 // pred_region
    _
  $region25: #{ca_att_block.4} parent=0 // pred_fallthru
    _
  // Predicated region
  $region26: #{ca_att_block.4} parent=0 // pred_check
    _
  $region27: #{ca_att_block.4} parent=0 // pred_check_branch
    %30 = sbr.rel (0) target = $region29
  $region28: #{ca_att_block.4} parent=0 // pred_region
    _
  $region29: #{ca_att_block.4} parent=0 // pred_fallthru
    _
  // Predicated region
  $region30: #{ca_att_block.4} parent=0 // pred_check
    _
  $region31: #{ca_att_block.4} parent=0 // pred_check_branch
    %32 = sbr.rel (0) target = $region33
  $region32: #{ca_att_block.4} parent=0 // pred_region
    _
  $region33: #{ca_att_block.4} parent=0 // pred_fallthru
    _
  // Predicated region
  $region34: #{ca_att_block.4} parent=0 // pred_check
    _
  $region35: #{ca_att_block.4} parent=0 // pred_check_branch
    %34 = sbr.rel (0) target = $region37
  $region36: #{ca_att_block.4} parent=0 // pred_region
    _
  $region37: #{ca_att_block.4} parent=0 // pred_fallthru
    _
  // Predicated region
  $region38: #{ca_att_block.4} parent=0 // pred_check
    _
  $region39: #{ca_att_block.4} parent=0 // pred_check_branch
    %36 = sbr.rel (0) target = $region41
  $region40: #{ca_att_block.4} parent=0 // pred_region
    _
  $region41: #{ca_att_block.4} parent=0 // pred_fallthru
    _
  %v37 = vld [vmem:[%s0] sm:$0xff]
  %v38 = vld [vmem:[%s0 + $0x8] sm:$0xff]
  %v39 = vld [vmem:[%s0 + $0x10] sm:$0xff]
  %v40 = vld [vmem:[%s0 + $0x18] sm:$0xff]
  %v41 = vld [vmem:[%s2] sm:$0xff]
  %v42 = vld [vmem:[%s2 + $0x8] sm:$0xff]
  %v43 = vld [vmem:[%s2 + $0x10] sm:$0xff]
  %v44 = vld [vmem:[%s2 + $0x18] sm:$0xff]
  %v45 = vld [vmem:[%s3] sm:$0x1]
  %v47 = vlaneseq
  %v48 = vshrl.u32 %v47, 7
  %v49 = vsub.s32 0, %v48
  %v50 = vrot.slane %v45, %v49
  %vm52 = vcmask 261120
  %v54 = vsel %vm52, %v37, 0
  %v57 = vsel %vm52, %v38, 0
  %v60 = vsel %vm52, %v39, 0
  %v63 = vsel %vm52, %v40, 0
  %65 = vmatprep.subr.mxu0 0.0
  %66 = vmatpush1.msra.mxu0 0.0
  %67 = vmatprep.subr.mxu0 0.0
  %68 = vmatpush1.msra.mxu0 0.0
  %69 = vmatprep.subr.mxu0 0.0
  %70 = vmatpush1.msra.mxu0 0.0
  %71 = vmatprep.subr.mxu0 0.0
  %72 = vmatpush1.msra.mxu0 0.0
  %73 = vmatprep.subr.mxu0 0.0
  %74 = vmatpush1.msra.mxu0 0.0
  %75 = vmatprep.subr.mxu0 0.0
  %76 = vmatpush1.msra.mxu0 0.0
  %77 = vmatprep.subr.mxu0 0.0
  %78 = vmatpush1.msra.mxu0 0.0
  %79 = vmatprep.subr.mxu0 0.0
  %80 = vmatpush1.msra.mxu0 0.0
  %81 = vmatprep.subr.mxu0 0.0
  %82 = vmatpush1.msra.mxu0 0.0
  %83 = vmatprep.subr.mxu0 0.0
  %84 = vmatpush1.msra.mxu0 0.0
  %85 = vmatprep.subr.mxu0 0.0
  %86 = vmatpush1.msra.mxu0 0.0
  %87 = vmatprep.subr.mxu0 0.0
  %88 = vmatpush1.msra.mxu0 0.0
  %89 = vmatprep.subr.mxu0 0.0
  %v90 = vand.u32 %v44, 4294901760
  %91 = vmatpush1.msra.mxu0 %v90
  %92 = vmatprep.subr.mxu0 0.0
  %v93 = vand.u32 %v43, 4294901760
  %94 = vmatpush1.msra.mxu0 %v93
  %95 = vmatprep.subr.mxu0 0.0
  %v96 = vand.u32 %v42, 4294901760
  %97 = vmatpush1.msra.mxu0 %v96
  %98 = vmatprep.subr.mxu0 0.0
  %v99 = vand.u32 %v41, 4294901760
  %100 = vmatpush1.msra.mxu0 %v99
  %101 = vmatprep.subr.mxu0 0.0
  %102 = vmatpush2.msra.mxu0 0.0
  %103 = vmatprep.subr.mxu0 0.0
  %104 = vmatpush2.msra.mxu0 0.0
  %105 = vmatprep.subr.mxu0 0.0
  %106 = vmatpush2.msra.mxu0 0.0
  %107 = vmatprep.subr.mxu0 0.0
  %108 = vmatpush2.msra.mxu0 0.0
  %109 = vmatprep.subr.mxu0 0.0
  %110 = vmatpush2.msra.mxu0 0.0
  %111 = vmatprep.subr.mxu0 0.0
  %112 = vmatpush2.msra.mxu0 0.0
  %113 = vmatprep.subr.mxu0 0.0
  %114 = vmatpush2.msra.mxu0 0.0
  %115 = vmatprep.subr.mxu0 0.0
  %116 = vmatpush2.msra.mxu0 0.0
  %117 = vmatprep.subr.mxu0 0.0
  %118 = vmatpush2.msra.mxu0 0.0
  %119 = vmatprep.subr.mxu0 0.0
  %120 = vmatpush2.msra.mxu0 0.0
  %121 = vmatprep.subr.mxu0 0.0
  %122 = vmatpush2.msra.mxu0 0.0
  %123 = vmatprep.subr.mxu0 0.0
  %124 = vmatpush2.msra.mxu0 0.0
  %125 = vmatprep.subr.mxu0 0.0
  %126 = vmatpush2.msra.mxu0 0.0
  %127 = vmatprep.subr.mxu0 0.0
  %128 = vmatpush2.msra.mxu0 0.0
  %129 = vmatprep.subr.mxu0 0.0
  %130 = vmatpush2.msra.mxu0 0.0
  %131 = vmatprep.subr.mxu0 0.0
  %132 = vmatpush2.msra.mxu0 0.0
  %133 = vmatprep.mubr.f32.mxu0 0.0
  %v134 = vand.u32 %v54, 4294901760
  %v135 = vsub.f32 %v54, %v134
  %v136 = vand.u32 %v135, 4294901760
  %v137 = vsub.f32 %v135, %v136
  %v138 = vand.u32 %v137, 4294901760
  %139 = vmatmul.mubr.f32.gmra.mxu0 %v138
  %v140 = vpop.f32.mrf.mxu0
  %v141 = vadd.f32 %v50, %v140
  %v142 = vpop.f32.mrf.mxu0
  %143 = vmatprep.mubr.f32.mxu0 0.0
  %v144 = vand.u32 %v57, 4294901760
  %v145 = vsub.f32 %v57, %v144
  %v146 = vand.u32 %v145, 4294901760
  %v147 = vsub.f32 %v145, %v146
  %v148 = vand.u32 %v147, 4294901760
  %149 = vmatmul.mubr.f32.gmra.mxu0 %v148
  %v150 = vpop.f32.mrf.mxu0
  %v151 = vadd.f32 %v50, %v150
  %v152 = vpop.f32.mrf.mxu0
  %153 = vmatprep.mubr.f32.mxu0 0.0
  %v154 = vand.u32 %v60, 4294901760
  %v155 = vsub.f32 %v60, %v154
  %v156 = vand.u32 %v155, 4294901760
  %v157 = vsub.f32 %v155, %v156
  %v158 = vand.u32 %v157, 4294901760
  %159 = vmatmul.mubr.f32.gmra.mxu0 %v158
  %v160 = vpop.f32.mrf.mxu0
  %v161 = vadd.f32 %v50, %v160
  %v162 = vpop.f32.mrf.mxu0
  %163 = vmatprep.mubr.f32.mxu0 0.0
  %v164 = vand.u32 %v63, 4294901760
  %v165 = vsub.f32 %v63, %v164
  %v166 = vand.u32 %v165, 4294901760
  %v167 = vsub.f32 %v165, %v166
  %v168 = vand.u32 %v167, 4294901760
  %169 = vmatmul.mubr.f32.gmra.mxu0 %v168
  %v170 = vpop.f32.mrf.mxu0
  %v171 = vadd.f32 %v50, %v170
  %v172 = vpop.f32.mrf.mxu0
  %173 = vdwg.mxu0
  %174 = vmatprep.subr.mxu0 0.0
  %175 = vmatpush1.msra.mxu0 0.0
  %176 = vmatprep.subr.mxu0 0.0
  %177 = vmatpush1.msra.mxu0 0.0
  %178 = vmatprep.subr.mxu0 0.0
  %179 = vmatpush1.msra.mxu0 0.0
  %180 = vmatprep.subr.mxu0 0.0
  %181 = vmatpush1.msra.mxu0 0.0
  %182 = vmatprep.subr.mxu0 0.0
  %183 = vmatpush1.msra.mxu0 0.0
  %184 = vmatprep.subr.mxu0 0.0
  %185 = vmatpush1.msra.mxu0 0.0
  %186 = vmatprep.subr.mxu0 0.0
  %187 = vmatpush1.msra.mxu0 0.0
  %188 = vmatprep.subr.mxu0 0.0
  %189 = vmatpush1.msra.mxu0 0.0
  %190 = vmatprep.subr.mxu0 0.0
  %191 = vmatpush1.msra.mxu0 0.0
  %192 = vmatprep.subr.mxu0 0.0
  %193 = vmatpush1.msra.mxu0 0.0
  %194 = vmatprep.subr.mxu0 0.0
  %195 = vmatpush1.msra.mxu0 0.0
  %196 = vmatprep.subr.mxu0 0.0
  %197 = vmatpush1.msra.mxu0 0.0
  %198 = vmatprep.subr.mxu0 0.0
  %v199 = vand.u32 %v44, 4294901760
  %v200 = vsub.f32 %v44, %v199
  %v201 = vand.u32 %v200, 4294901760
  %v202 = vsub.f32 %v200, %v201
  %v203 = vand.u32 %v202, 4294901760
  %204 = vmatpush1.msra.mxu0 %v203
  %205 = vmatprep.subr.mxu0 0.0
  %v206 = vand.u32 %v43, 4294901760
  %v207 = vsub.f32 %v43, %v206
  %v208 = vand.u32 %v207, 4294901760
  %v209 = vsub.f32 %v207, %v208
  %v210 = vand.u32 %v209, 4294901760
  %211 = vmatpush1.msra.mxu0 %v210
  %212 = vmatprep.subr.mxu0 0.0
  %v213 = vand.u32 %v42, 4294901760
  %v214 = vsub.f32 %v42, %v213
  %v215 = vand.u32 %v214, 4294901760
  %v216 = vsub.f32 %v214, %v215
  %v217 = vand.u32 %v216, 4294901760
  %218 = vmatpush1.msra.mxu0 %v217
  %219 = vmatprep.subr.mxu0 0.0
  %v220 = vand.u32 %v41, 4294901760
  %v221 = vsub.f32 %v41, %v220
  %v222 = vand.u32 %v221, 4294901760
  %v223 = vsub.f32 %v221, %v222
  %v224 = vand.u32 %v223, 4294901760
  %225 = vmatpush1.msra.mxu0 %v224
  %226 = vmatprep.subr.mxu0 0.0
  %227 = vmatpush2.msra.mxu0 0.0
  %228 = vmatprep.subr.mxu0 0.0
  %229 = vmatpush2.msra.mxu0 0.0
  %230 = vmatprep.subr.mxu0 0.0
  %231 = vmatpush2.msra.mxu0 0.0
  %232 = vmatprep.subr.mxu0 0.0
  %233 = vmatpush2.msra.mxu0 0.0
  %234 = vmatprep.subr.mxu0 0.0
  %235 = vmatpush2.msra.mxu0 0.0
  %236 = vmatprep.subr.mxu0 0.0
  %237 = vmatpush2.msra.mxu0 0.0
  %238 = vmatprep.subr.mxu0 0.0
  %239 = vmatpush2.msra.mxu0 0.0
  %240 = vmatprep.subr.mxu0 0.0
  %241 = vmatpush2.msra.mxu0 0.0
  %242 = vmatprep.subr.mxu0 0.0
  %243 = vmatpush2.msra.mxu0 0.0
  %244 = vmatprep.subr.mxu0 0.0
  %245 = vmatpush2.msra.mxu0 0.0
  %246 = vmatprep.subr.mxu0 0.0
  %247 = vmatpush2.msra.mxu0 0.0
  %248 = vmatprep.subr.mxu0 0.0
  %249 = vmatpush2.msra.mxu0 0.0
  %250 = vmatprep.subr.mxu0 0.0
  %251 = vmatpush2.msra.mxu0 0.0
  %252 = vmatprep.subr.mxu0 0.0
  %253 = vmatpush2.msra.mxu0 0.0
  %254 = vmatprep.subr.mxu0 0.0
  %255 = vmatpush2.msra.mxu0 0.0
  %256 = vmatprep.subr.mxu0 0.0
  %257 = vmatpush2.msra.mxu0 0.0
  %258 = vmatprep.mubr.f32.mxu0 0.0
  %v259 = vand.u32 %v54, 4294901760
  %260 = vmatmul.mubr.f32.gmra.mxu0 %v259
  %v261 = vpop.f32.mrf.mxu0
  %v262 = vadd.f32 %v141, %v261
  %v263 = vpop.f32.mrf.mxu0
  %264 = vmatprep.mubr.f32.mxu0 0.0
  %v265 = vand.u32 %v57, 4294901760
  %266 = vmatmul.mubr.f32.gmra.mxu0 %v265
  %v267 = vpop.f32.mrf.mxu0
  %v268 = vadd.f32 %v151, %v267
  %v269 = vpop.f32.mrf.mxu0
  %270 = vmatprep.mubr.f32.mxu0 0.0
  %v271 = vand.u32 %v60, 4294901760
  %272 = vmatmul.mubr.f32.gmra.mxu0 %v271
  %v273 = vpop.f32.mrf.mxu0
  %v274 = vadd.f32 %v161, %v273
  %v275 = vpop.f32.mrf.mxu0
  %276 = vmatprep.mubr.f32.mxu0 0.0
  %v277 = vand.u32 %v63, 4294901760
  %278 = vmatmul.mubr.f32.gmra.mxu0 %v277
  %v279 = vpop.f32.mrf.mxu0
  %v280 = vadd.f32 %v171, %v279
  %v281 = vpop.f32.mrf.mxu0
  %282 = vdwg.mxu0
  %283 = vmatprep.subr.mxu0 0.0
  %284 = vmatpush1.msra.mxu0 0.0
  %285 = vmatprep.subr.mxu0 0.0
  %286 = vmatpush1.msra.mxu0 0.0
  %287 = vmatprep.subr.mxu0 0.0
  %288 = vmatpush1.msra.mxu0 0.0
  %289 = vmatprep.subr.mxu0 0.0
  %290 = vmatpush1.msra.mxu0 0.0
  %291 = vmatprep.subr.mxu0 0.0
  %292 = vmatpush1.msra.mxu0 0.0
  %293 = vmatprep.subr.mxu0 0.0
  %294 = vmatpush1.msra.mxu0 0.0
  %295 = vmatprep.subr.mxu0 0.0
  %296 = vmatpush1.msra.mxu0 0.0
  %297 = vmatprep.subr.mxu0 0.0
  %298 = vmatpush1.msra.mxu0 0.0
  %299 = vmatprep.subr.mxu0 0.0
  %300 = vmatpush1.msra.mxu0 0.0
  %301 = vmatprep.subr.mxu0 0.0
  %302 = vmatpush1.msra.mxu0 0.0
  %303 = vmatprep.subr.mxu0 0.0
  %304 = vmatpush1.msra.mxu0 0.0
  %305 = vmatprep.subr.mxu0 0.0
  %306 = vmatpush1.msra.mxu0 0.0
  %307 = vmatprep.subr.mxu0 0.0
  %v308 = vand.u32 %v44, 4294901760
  %v309 = vsub.f32 %v44, %v308
  %310 = vmatpush1.msra.mxu0 %v309
  %311 = vmatprep.subr.mxu0 0.0
  %v312 = vand.u32 %v43, 4294901760
  %v313 = vsub.f32 %v43, %v312
  %314 = vmatpush1.msra.mxu0 %v313
  %315 = vmatprep.subr.mxu0 0.0
  %v316 = vand.u32 %v42, 4294901760
  %v317 = vsub.f32 %v42, %v316
  %318 = vmatpush1.msra.mxu0 %v317
  %319 = vmatprep.subr.mxu0 0.0
  %v320 = vand.u32 %v41, 4294901760
  %v321 = vsub.f32 %v41, %v320
  %322 = vmatpush1.msra.mxu0 %v321
  %323 = vmatprep.subr.mxu0 0.0
  %324 = vmatpush2.msra.mxu0 0.0
  %325 = vmatprep.subr.mxu0 0.0
  %326 = vmatpush2.msra.mxu0 0.0
  %327 = vmatprep.subr.mxu0 0.0
  %328 = vmatpush2.msra.mxu0 0.0
  %329 = vmatprep.subr.mxu0 0.0
  %330 = vmatpush2.msra.mxu0 0.0
  %331 = vmatprep.subr.mxu0 0.0
  %332 = vmatpush2.msra.mxu0 0.0
  %333 = vmatprep.subr.mxu0 0.0
  %334 = vmatpush2.msra.mxu0 0.0
  %335 = vmatprep.subr.mxu0 0.0
  %336 = vmatpush2.msra.mxu0 0.0
  %337 = vmatprep.subr.mxu0 0.0
  %338 = vmatpush2.msra.mxu0 0.0
  %339 = vmatprep.subr.mxu0 0.0
  %340 = vmatpush2.msra.mxu0 0.0
  %341 = vmatprep.subr.mxu0 0.0
  %342 = vmatpush2.msra.mxu0 0.0
  %343 = vmatprep.subr.mxu0 0.0
  %344 = vmatpush2.msra.mxu0 0.0
  %345 = vmatprep.subr.mxu0 0.0
  %346 = vmatpush2.msra.mxu0 0.0
  %347 = vmatprep.subr.mxu0 0.0
  %348 = vmatpush2.msra.mxu0 0.0
  %349 = vmatprep.subr.mxu0 0.0
  %350 = vmatpush2.msra.mxu0 0.0
  %351 = vmatprep.subr.mxu0 0.0
  %352 = vmatpush2.msra.mxu0 0.0
  %353 = vmatprep.subr.mxu0 0.0
  %354 = vmatpush2.msra.mxu0 0.0
  %355 = vmatprep.mubr.f32.mxu0 0.0
  %v356 = vand.u32 %v54, 4294901760
  %v357 = vsub.f32 %v54, %v356
  %358 = vmatmul.mubr.f32.gmra.mxu0 %v357
  %v359 = vpop.f32.mrf.mxu0
  %v360 = vadd.f32 %v262, %v359
  %v361 = vpop.f32.mrf.mxu0
  %362 = vmatprep.mubr.f32.mxu0 0.0
  %v363 = vand.u32 %v57, 4294901760
  %v364 = vsub.f32 %v57, %v363
  %365 = vmatmul.mubr.f32.gmra.mxu0 %v364
  %v366 = vpop.f32.mrf.mxu0
  %v367 = vadd.f32 %v268, %v366
  %v368 = vpop.f32.mrf.mxu0
  %369 = vmatprep.mubr.f32.mxu0 0.0
  %v370 = vand.u32 %v60, 4294901760
  %v371 = vsub.f32 %v60, %v370
  %372 = vmatmul.mubr.f32.gmra.mxu0 %v371
  %v373 = vpop.f32.mrf.mxu0
  %v374 = vadd.f32 %v274, %v373
  %v375 = vpop.f32.mrf.mxu0
  %376 = vmatprep.mubr.f32.mxu0 0.0
  %v377 = vand.u32 %v63, 4294901760
  %v378 = vsub.f32 %v63, %v377
  %379 = vmatmul.mubr.f32.gmra.mxu0 %v378
  %v380 = vpop.f32.mrf.mxu0
  %v381 = vadd.f32 %v280, %v380
  %v382 = vpop.f32.mrf.mxu0
  %383 = vdwg.mxu0
  %384 = vmatprep.subr.mxu0 0.0
  %385 = vmatpush1.msra.mxu0 0.0
  %386 = vmatprep.subr.mxu0 0.0
  %387 = vmatpush1.msra.mxu0 0.0
  %388 = vmatprep.subr.mxu0 0.0
  %389 = vmatpush1.msra.mxu0 0.0
  %390 = vmatprep.subr.mxu0 0.0
  %391 = vmatpush1.msra.mxu0 0.0
  %392 = vmatprep.subr.mxu0 0.0
  %393 = vmatpush1.msra.mxu0 0.0
  %394 = vmatprep.subr.mxu0 0.0
  %395 = vmatpush1.msra.mxu0 0.0
  %396 = vmatprep.subr.mxu0 0.0
  %397 = vmatpush1.msra.mxu0 0.0
  %398 = vmatprep.subr.mxu0 0.0
  %399 = vmatpush1.msra.mxu0 0.0
  %400 = vmatprep.subr.mxu0 0.0
  %401 = vmatpush1.msra.mxu0 0.0
  %402 = vmatprep.subr.mxu0 0.0
  %403 = vmatpush1.msra.mxu0 0.0
  %404 = vmatprep.subr.mxu0 0.0
  %405 = vmatpush1.msra.mxu0 0.0
  %406 = vmatprep.subr.mxu0 0.0
  %407 = vmatpush1.msra.mxu0 0.0
  %408 = vmatprep.subr.mxu0 0.0
  %v409 = vand.u32 %v44, 4294901760
  %410 = vmatpush1.msra.mxu0 %v409
  %411 = vmatprep.subr.mxu0 0.0
  %v412 = vand.u32 %v43, 4294901760
  %413 = vmatpush1.msra.mxu0 %v412
  %414 = vmatprep.subr.mxu0 0.0
  %v415 = vand.u32 %v42, 4294901760
  %416 = vmatpush1.msra.mxu0 %v415
  %417 = vmatprep.subr.mxu0 0.0
  %v418 = vand.u32 %v41, 4294901760
  %419 = vmatpush1.msra.mxu0 %v418
  %420 = vmatprep.subr.mxu0 0.0
  %421 = vmatpush2.msra.mxu0 0.0
  %422 = vmatprep.subr.mxu0 0.0
  %423 = vmatpush2.msra.mxu0 0.0
  %424 = vmatprep.subr.mxu0 0.0
  %425 = vmatpush2.msra.mxu0 0.0
  %426 = vmatprep.subr.mxu0 0.0
  %427 = vmatpush2.msra.mxu0 0.0
  %428 = vmatprep.subr.mxu0 0.0
  %429 = vmatpush2.msra.mxu0 0.0
  %430 = vmatprep.subr.mxu0 0.0
  %431 = vmatpush2.msra.mxu0 0.0
  %432 = vmatprep.subr.mxu0 0.0
  %433 = vmatpush2.msra.mxu0 0.0
  %434 = vmatprep.subr.mxu0 0.0
  %435 = vmatpush2.msra.mxu0 0.0
  %436 = vmatprep.subr.mxu0 0.0
  %437 = vmatpush2.msra.mxu0 0.0
  %438 = vmatprep.subr.mxu0 0.0
  %439 = vmatpush2.msra.mxu0 0.0
  %440 = vmatprep.subr.mxu0 0.0
  %441 = vmatpush2.msra.mxu0 0.0
  %442 = vmatprep.subr.mxu0 0.0
  %443 = vmatpush2.msra.mxu0 0.0
  %444 = vmatprep.subr.mxu0 0.0
  %445 = vmatpush2.msra.mxu0 0.0
  %446 = vmatprep.subr.mxu0 0.0
  %447 = vmatpush2.msra.mxu0 0.0
  %448 = vmatprep.subr.mxu0 0.0
  %449 = vmatpush2.msra.mxu0 0.0
  %450 = vmatprep.subr.mxu0 0.0
  %451 = vmatpush2.msra.mxu0 0.0
  %452 = vmatprep.mubr.f32.mxu0 0.0
  %v453 = vand.u32 %v54, 4294901760
  %v454 = vsub.f32 %v54, %v453
  %v455 = vand.u32 %v454, 4294901760
  %456 = vmatmul.mubr.f32.gmra.mxu0 %v455
  %v457 = vpop.f32.mrf.mxu0
  %v458 = vadd.f32 %v360, %v457
  %v459 = vpop.f32.mrf.mxu0
  %460 = vmatprep.mubr.f32.mxu0 0.0
  %v461 = vand.u32 %v57, 4294901760
  %v462 = vsub.f32 %v57, %v461
  %v463 = vand.u32 %v462, 4294901760
  %464 = vmatmul.mubr.f32.gmra.mxu0 %v463
  %v465 = vpop.f32.mrf.mxu0
  %v466 = vadd.f32 %v367, %v465
  %v467 = vpop.f32.mrf.mxu0
  %468 = vmatprep.mubr.f32.mxu0 0.0
  %v469 = vand.u32 %v60, 4294901760
  %v470 = vsub.f32 %v60, %v469
  %v471 = vand.u32 %v470, 4294901760
  %472 = vmatmul.mubr.f32.gmra.mxu0 %v471
  %v473 = vpop.f32.mrf.mxu0
  %v474 = vadd.f32 %v374, %v473
  %v475 = vpop.f32.mrf.mxu0
  %476 = vmatprep.mubr.f32.mxu0 0.0
  %v477 = vand.u32 %v63, 4294901760
  %v478 = vsub.f32 %v63, %v477
  %v479 = vand.u32 %v478, 4294901760
  %480 = vmatmul.mubr.f32.gmra.mxu0 %v479
  %v481 = vpop.f32.mrf.mxu0
  %v482 = vadd.f32 %v381, %v481
  %v483 = vpop.f32.mrf.mxu0
  %484 = vdwg.mxu0
  %485 = vmatprep.subr.mxu0 0.0
  %486 = vmatpush1.msra.mxu0 0.0
  %487 = vmatprep.subr.mxu0 0.0
  %488 = vmatpush1.msra.mxu0 0.0
  %489 = vmatprep.subr.mxu0 0.0
  %490 = vmatpush1.msra.mxu0 0.0
  %491 = vmatprep.subr.mxu0 0.0
  %492 = vmatpush1.msra.mxu0 0.0
  %493 = vmatprep.subr.mxu0 0.0
  %494 = vmatpush1.msra.mxu0 0.0
  %495 = vmatprep.subr.mxu0 0.0
  %496 = vmatpush1.msra.mxu0 0.0
  %497 = vmatprep.subr.mxu0 0.0
  %498 = vmatpush1.msra.mxu0 0.0
  %499 = vmatprep.subr.mxu0 0.0
  %500 = vmatpush1.msra.mxu0 0.0
  %501 = vmatprep.subr.mxu0 0.0
  %502 = vmatpush1.msra.mxu0 0.0
  %503 = vmatprep.subr.mxu0 0.0
  %504 = vmatpush1.msra.mxu0 0.0
  %505 = vmatprep.subr.mxu0 0.0
  %506 = vmatpush1.msra.mxu0 0.0
  %507 = vmatprep.subr.mxu0 0.0
  %508 = vmatpush1.msra.mxu0 0.0
  %509 = vmatprep.subr.mxu0 0.0
  %v510 = vand.u32 %v44, 4294901760
  %v511 = vsub.f32 %v44, %v510
  %v512 = vand.u32 %v511, 4294901760
  %513 = vmatpush1.msra.mxu0 %v512
  %514 = vmatprep.subr.mxu0 0.0
  %v515 = vand.u32 %v43, 4294901760
  %v516 = vsub.f32 %v43, %v515
  %v517 = vand.u32 %v516, 4294901760
  %518 = vmatpush1.msra.mxu0 %v517
  %519 = vmatprep.subr.mxu0 0.0
  %v520 = vand.u32 %v42, 4294901760
  %v521 = vsub.f32 %v42, %v520
  %v522 = vand.u32 %v521, 4294901760
  %523 = vmatpush1.msra.mxu0 %v522
  %524 = vmatprep.subr.mxu0 0.0
  %v525 = vand.u32 %v41, 4294901760
  %v526 = vsub.f32 %v41, %v525
  %v527 = vand.u32 %v526, 4294901760
  %528 = vmatpush1.msra.mxu0 %v527
  %529 = vmatprep.subr.mxu0 0.0
  %530 = vmatpush2.msra.mxu0 0.0
  %531 = vmatprep.subr.mxu0 0.0
  %532 = vmatpush2.msra.mxu0 0.0
  %533 = vmatprep.subr.mxu0 0.0
  %534 = vmatpush2.msra.mxu0 0.0
  %535 = vmatprep.subr.mxu0 0.0
  %536 = vmatpush2.msra.mxu0 0.0
  %537 = vmatprep.subr.mxu0 0.0
  %538 = vmatpush2.msra.mxu0 0.0
  %539 = vmatprep.subr.mxu0 0.0
  %540 = vmatpush2.msra.mxu0 0.0
  %541 = vmatprep.subr.mxu0 0.0
  %542 = vmatpush2.msra.mxu0 0.0
  %543 = vmatprep.subr.mxu0 0.0
  %544 = vmatpush2.msra.mxu0 0.0
  %545 = vmatprep.subr.mxu0 0.0
  %546 = vmatpush2.msra.mxu0 0.0
  %547 = vmatprep.subr.mxu0 0.0
  %548 = vmatpush2.msra.mxu0 0.0
  %549 = vmatprep.subr.mxu0 0.0
  %550 = vmatpush2.msra.mxu0 0.0
  %551 = vmatprep.subr.mxu0 0.0
  %552 = vmatpush2.msra.mxu0 0.0
  %553 = vmatprep.subr.mxu0 0.0
  %554 = vmatpush2.msra.mxu0 0.0
  %555 = vmatprep.subr.mxu0 0.0
  %556 = vmatpush2.msra.mxu0 0.0
  %557 = vmatprep.subr.mxu0 0.0
  %558 = vmatpush2.msra.mxu0 0.0
  %559 = vmatprep.subr.mxu0 0.0
  %560 = vmatpush2.msra.mxu0 0.0
  %561 = vmatprep.mubr.f32.mxu0 0.0
  %v562 = vand.u32 %v54, 4294901760
  %563 = vmatmul.mubr.f32.gmra.mxu0 %v562
  %v564 = vpop.f32.mrf.mxu0
  %v565 = vadd.f32 %v458, %v564
  %v566 = vpop.f32.mrf.mxu0
  %567 = vmatprep.mubr.f32.mxu0 0.0
  %v568 = vand.u32 %v57, 4294901760
  %569 = vmatmul.mubr.f32.gmra.mxu0 %v568
  %v570 = vpop.f32.mrf.mxu0
  %v571 = vadd.f32 %v466, %v570
  %v572 = vpop.f32.mrf.mxu0
  %573 = vmatprep.mubr.f32.mxu0 0.0
  %v574 = vand.u32 %v60, 4294901760
  %575 = vmatmul.mubr.f32.gmra.mxu0 %v574
  %v576 = vpop.f32.mrf.mxu0
  %v577 = vadd.f32 %v474, %v576
  %v578 = vpop.f32.mrf.mxu0
  %579 = vmatprep.mubr.f32.mxu0 0.0
  %v580 = vand.u32 %v63, 4294901760
  %581 = vmatmul.mubr.f32.gmra.mxu0 %v580
  %v582 = vpop.f32.mrf.mxu0
  %v583 = vadd.f32 %v482, %v582
  %v584 = vpop.f32.mrf.mxu0
  %585 = vdwg.mxu0
  %586 = vmatprep.subr.mxu0 0.0
  %587 = vmatpush1.msra.mxu0 0.0
  %588 = vmatprep.subr.mxu0 0.0
  %589 = vmatpush1.msra.mxu0 0.0
  %590 = vmatprep.subr.mxu0 0.0
  %591 = vmatpush1.msra.mxu0 0.0
  %592 = vmatprep.subr.mxu0 0.0
  %593 = vmatpush1.msra.mxu0 0.0
  %594 = vmatprep.subr.mxu0 0.0
  %595 = vmatpush1.msra.mxu0 0.0
  %596 = vmatprep.subr.mxu0 0.0
  %597 = vmatpush1.msra.mxu0 0.0
  %598 = vmatprep.subr.mxu0 0.0
  %599 = vmatpush1.msra.mxu0 0.0
  %600 = vmatprep.subr.mxu0 0.0
  %601 = vmatpush1.msra.mxu0 0.0
  %602 = vmatprep.subr.mxu0 0.0
  %603 = vmatpush1.msra.mxu0 0.0
  %604 = vmatprep.subr.mxu0 0.0
  %605 = vmatpush1.msra.mxu0 0.0
  %606 = vmatprep.subr.mxu0 0.0
  %607 = vmatpush1.msra.mxu0 0.0
  %608 = vmatprep.subr.mxu0 0.0
  %609 = vmatpush1.msra.mxu0 0.0
  %610 = vmatprep.subr.mxu0 0.0
  %v611 = vand.u32 %v44, 4294901760
  %612 = vmatpush1.msra.mxu0 %v611
  %613 = vmatprep.subr.mxu0 0.0
  %v614 = vand.u32 %v43, 4294901760
  %615 = vmatpush1.msra.mxu0 %v614
  %616 = vmatprep.subr.mxu0 0.0
  %v617 = vand.u32 %v42, 4294901760
  %618 = vmatpush1.msra.mxu0 %v617
  %619 = vmatprep.subr.mxu0 0.0
  %v620 = vand.u32 %v41, 4294901760
  %621 = vmatpush1.msra.mxu0 %v620
  %622 = vmatprep.subr.mxu0 0.0
  %623 = vmatpush2.msra.mxu0 0.0
  %624 = vmatprep.subr.mxu0 0.0
  %625 = vmatpush2.msra.mxu0 0.0
  %626 = vmatprep.subr.mxu0 0.0
  %627 = vmatpush2.msra.mxu0 0.0
  %628 = vmatprep.subr.mxu0 0.0
  %629 = vmatpush2.msra.mxu0 0.0
  %630 = vmatprep.subr.mxu0 0.0
  %631 = vmatpush2.msra.mxu0 0.0
  %632 = vmatprep.subr.mxu0 0.0
  %633 = vmatpush2.msra.mxu0 0.0
  %634 = vmatprep.subr.mxu0 0.0
  %635 = vmatpush2.msra.mxu0 0.0
  %636 = vmatprep.subr.mxu0 0.0
  %637 = vmatpush2.msra.mxu0 0.0
  %638 = vmatprep.subr.mxu0 0.0
  %639 = vmatpush2.msra.mxu0 0.0
  %640 = vmatprep.subr.mxu0 0.0
  %641 = vmatpush2.msra.mxu0 0.0
  %642 = vmatprep.subr.mxu0 0.0
  %643 = vmatpush2.msra.mxu0 0.0
  %644 = vmatprep.subr.mxu0 0.0
  %645 = vmatpush2.msra.mxu0 0.0
  %646 = vmatprep.subr.mxu0 0.0
  %647 = vmatpush2.msra.mxu0 0.0
  %648 = vmatprep.subr.mxu0 0.0
  %649 = vmatpush2.msra.mxu0 0.0
  %650 = vmatprep.subr.mxu0 0.0
  %651 = vmatpush2.msra.mxu0 0.0
  %652 = vmatprep.subr.mxu0 0.0
  %653 = vmatpush2.msra.mxu0 0.0
  %654 = vmatprep.mubr.f32.mxu0 0.0
  %v655 = vand.u32 %v54, 4294901760
  %656 = vmatmul.mubr.f32.gmra.mxu0 %v655
  %v657 = vpop.f32.mrf.mxu0
  %v658 = vadd.f32 %v565, %v657
  %v659 = vpop.f32.mrf.mxu0
  %660 = vmatprep.mubr.f32.mxu0 0.0
  %v661 = vand.u32 %v57, 4294901760
  %662 = vmatmul.mubr.f32.gmra.mxu0 %v661
  %v663 = vpop.f32.mrf.mxu0
  %v664 = vadd.f32 %v571, %v663
  %v665 = vpop.f32.mrf.mxu0
  %666 = vmatprep.mubr.f32.mxu0 0.0
  %v667 = vand.u32 %v60, 4294901760
  %668 = vmatmul.mubr.f32.gmra.mxu0 %v667
  %v669 = vpop.f32.mrf.mxu0
  %v670 = vadd.f32 %v577, %v669
  %v671 = vpop.f32.mrf.mxu0
  %672 = vmatprep.mubr.f32.mxu0 0.0
  %v673 = vand.u32 %v63, 4294901760
  %674 = vmatmul.mubr.f32.gmra.mxu0 %v673
  %v675 = vpop.f32.mrf.mxu0
  %v676 = vadd.f32 %v583, %v675
  %v677 = vpop.f32.mrf.mxu0
  %678 = vdwg.mxu0
  %v679 = vld [vmem:[%s1] sm:$0xff]
  %v680 = vld [vmem:[%s1 + $0x8] sm:$0xff]
  %v681 = vld [vmem:[%s1 + $0x10] sm:$0xff]
  %v682 = vld [vmem:[%s1 + $0x18] sm:$0xff]
  %v684 = vsel %vm52, %v679, 0
  %v687 = vsel %vm52, %v680, 0
  %v690 = vsel %vm52, %v681, 0
  %v693 = vsel %vm52, %v682, 0
  %695 = vmatprep.subr.mxu0 0.0
  %696 = vmatpush1.msra.mxu0 0.0
  %697 = vmatprep.subr.mxu0 0.0
  %698 = vmatpush1.msra.mxu0 0.0
  %699 = vmatprep.subr.mxu0 0.0
  %700 = vmatpush1.msra.mxu0 0.0
  %701 = vmatprep.subr.mxu0 0.0
  %702 = vmatpush1.msra.mxu0 0.0
  %703 = vmatprep.subr.mxu0 0.0
  %704 = vmatpush1.msra.mxu0 0.0
  %705 = vmatprep.subr.mxu0 0.0
  %706 = vmatpush1.msra.mxu0 0.0
  %707 = vmatprep.subr.mxu0 0.0
  %708 = vmatpush1.msra.mxu0 0.0
  %709 = vmatprep.subr.mxu0 0.0
  %710 = vmatpush1.msra.mxu0 0.0
  %711 = vmatprep.subr.mxu0 0.0
  %712 = vmatpush1.msra.mxu0 0.0
  %713 = vmatprep.subr.mxu0 0.0
  %714 = vmatpush1.msra.mxu0 0.0
  %715 = vmatprep.subr.mxu0 0.0
  %716 = vmatpush1.msra.mxu0 0.0
  %717 = vmatprep.subr.mxu0 0.0
  %718 = vmatpush1.msra.mxu0 0.0
  %719 = vmatprep.subr.mxu0 0.0
  %v720 = vand.u32 %v44, 4294901760
  %721 = vmatpush1.msra.mxu0 %v720
  %722 = vmatprep.subr.mxu0 0.0
  %v723 = vand.u32 %v43, 4294901760
  %724 = vmatpush1.msra.mxu0 %v723
  %725 = vmatprep.subr.mxu0 0.0
  %v726 = vand.u32 %v42, 4294901760
  %727 = vmatpush1.msra.mxu0 %v726
  %728 = vmatprep.subr.mxu0 0.0
  %v729 = vand.u32 %v41, 4294901760
  %730 = vmatpush1.msra.mxu0 %v729
  %731 = vmatprep.subr.mxu0 0.0
  %732 = vmatpush2.msra.mxu0 0.0
  %733 = vmatprep.subr.mxu0 0.0
  %734 = vmatpush2.msra.mxu0 0.0
  %735 = vmatprep.subr.mxu0 0.0
  %736 = vmatpush2.msra.mxu0 0.0
  %737 = vmatprep.subr.mxu0 0.0
  %738 = vmatpush2.msra.mxu0 0.0
  %739 = vmatprep.subr.mxu0 0.0
  %740 = vmatpush2.msra.mxu0 0.0
  %741 = vmatprep.subr.mxu0 0.0
  %742 = vmatpush2.msra.mxu0 0.0
  %743 = vmatprep.subr.mxu0 0.0
  %744 = vmatpush2.msra.mxu0 0.0
  %745 = vmatprep.subr.mxu0 0.0
  %746 = vmatpush2.msra.mxu0 0.0
  %747 = vmatprep.subr.mxu0 0.0
  %748 = vmatpush2.msra.mxu0 0.0
  %749 = vmatprep.subr.mxu0 0.0
  %750 = vmatpush2.msra.mxu0 0.0
  %751 = vmatprep.subr.mxu0 0.0
  %752 = vmatpush2.msra.mxu0 0.0
  %753 = vmatprep.subr.mxu0 0.0
  %754 = vmatpush2.msra.mxu0 0.0
  %755 = vmatprep.subr.mxu0 0.0
  %756 = vmatpush2.msra.mxu0 0.0
  %757 = vmatprep.subr.mxu0 0.0
  %758 = vmatpush2.msra.mxu0 0.0
  %759 = vmatprep.subr.mxu0 0.0
  %760 = vmatpush2.msra.mxu0 0.0
  %761 = vmatprep.subr.mxu0 0.0
  %762 = vmatpush2.msra.mxu0 0.0
  %763 = vmatprep.mubr.f32.mxu0 0.0
  %v764 = vand.u32 %v684, 4294901760
  %v765 = vsub.f32 %v684, %v764
  %v766 = vand.u32 %v765, 4294901760
  %v767 = vsub.f32 %v765, %v766
  %v768 = vand.u32 %v767, 4294901760
  %769 = vmatmul.mubr.f32.gmra.mxu0 %v768
  %v770 = vpop.f32.mrf.mxu0
  %v771 = vadd.f32 %v50, %v770
  %v772 = vpop.f32.mrf.mxu0
  %773 = vmatprep.mubr.f32.mxu0 0.0
  %v774 = vand.u32 %v687, 4294901760
  %v775 = vsub.f32 %v687, %v774
  %v776 = vand.u32 %v775, 4294901760
  %v777 = vsub.f32 %v775, %v776
  %v778 = vand.u32 %v777, 4294901760
  %779 = vmatmul.mubr.f32.gmra.mxu0 %v778
  %v780 = vpop.f32.mrf.mxu0
  %v781 = vadd.f32 %v50, %v780
  %v782 = vpop.f32.mrf.mxu0
  %783 = vmatprep.mubr.f32.mxu0 0.0
  %v784 = vand.u32 %v690, 4294901760
  %v785 = vsub.f32 %v690, %v784
  %v786 = vand.u32 %v785, 4294901760
  %v787 = vsub.f32 %v785, %v786
  %v788 = vand.u32 %v787, 4294901760
  %789 = vmatmul.mubr.f32.gmra.mxu0 %v788
  %v790 = vpop.f32.mrf.mxu0
  %v791 = vadd.f32 %v50, %v790
  %v792 = vpop.f32.mrf.mxu0
  %793 = vmatprep.mubr.f32.mxu0 0.0
  %v794 = vand.u32 %v693, 4294901760
  %v795 = vsub.f32 %v693, %v794
  %v796 = vand.u32 %v795, 4294901760
  %v797 = vsub.f32 %v795, %v796
  %v798 = vand.u32 %v797, 4294901760
  %799 = vmatmul.mubr.f32.gmra.mxu0 %v798
  %v800 = vpop.f32.mrf.mxu0
  %v801 = vadd.f32 %v50, %v800
  %v802 = vpop.f32.mrf.mxu0
  %803 = vdwg.mxu0
  %804 = vmatprep.subr.mxu0 0.0
  %805 = vmatpush1.msra.mxu0 0.0
  %806 = vmatprep.subr.mxu0 0.0
  %807 = vmatpush1.msra.mxu0 0.0
  %808 = vmatprep.subr.mxu0 0.0
  %809 = vmatpush1.msra.mxu0 0.0
  %810 = vmatprep.subr.mxu0 0.0
  %811 = vmatpush1.msra.mxu0 0.0
  %812 = vmatprep.subr.mxu0 0.0
  %813 = vmatpush1.msra.mxu0 0.0
  %814 = vmatprep.subr.mxu0 0.0
  %815 = vmatpush1.msra.mxu0 0.0
  %816 = vmatprep.subr.mxu0 0.0
  %817 = vmatpush1.msra.mxu0 0.0
  %818 = vmatprep.subr.mxu0 0.0
  %819 = vmatpush1.msra.mxu0 0.0
  %820 = vmatprep.subr.mxu0 0.0
  %821 = vmatpush1.msra.mxu0 0.0
  %822 = vmatprep.subr.mxu0 0.0
  %823 = vmatpush1.msra.mxu0 0.0
  %824 = vmatprep.subr.mxu0 0.0
  %825 = vmatpush1.msra.mxu0 0.0
  %826 = vmatprep.subr.mxu0 0.0
  %827 = vmatpush1.msra.mxu0 0.0
  %828 = vmatprep.subr.mxu0 0.0
  %v829 = vand.u32 %v44, 4294901760
  %v830 = vsub.f32 %v44, %v829
  %v831 = vand.u32 %v830, 4294901760
  %v832 = vsub.f32 %v830, %v831
  %v833 = vand.u32 %v832, 4294901760
  %834 = vmatpush1.msra.mxu0 %v833
  %835 = vmatprep.subr.mxu0 0.0
  %v836 = vand.u32 %v43, 4294901760
  %v837 = vsub.f32 %v43, %v836
  %v838 = vand.u32 %v837, 4294901760
  %v839 = vsub.f32 %v837, %v838
  %v840 = vand.u32 %v839, 4294901760
  %841 = vmatpush1.msra.mxu0 %v840
  %842 = vmatprep.subr.mxu0 0.0
  %v843 = vand.u32 %v42, 4294901760
  %v844 = vsub.f32 %v42, %v843
  %v845 = vand.u32 %v844, 4294901760
  %v846 = vsub.f32 %v844, %v845
  %v847 = vand.u32 %v846, 4294901760
  %848 = vmatpush1.msra.mxu0 %v847
  %849 = vmatprep.subr.mxu0 0.0
  %v850 = vand.u32 %v41, 4294901760
  %v851 = vsub.f32 %v41, %v850
  %v852 = vand.u32 %v851, 4294901760
  %v853 = vsub.f32 %v851, %v852
  %v854 = vand.u32 %v853, 4294901760
  %855 = vmatpush1.msra.mxu0 %v854
  %856 = vmatprep.subr.mxu0 0.0
  %857 = vmatpush2.msra.mxu0 0.0
  %858 = vmatprep.subr.mxu0 0.0
  %859 = vmatpush2.msra.mxu0 0.0
  %860 = vmatprep.subr.mxu0 0.0
  %861 = vmatpush2.msra.mxu0 0.0
  %862 = vmatprep.subr.mxu0 0.0
  %863 = vmatpush2.msra.mxu0 0.0
  %864 = vmatprep.subr.mxu0 0.0
  %865 = vmatpush2.msra.mxu0 0.0
  %866 = vmatprep.subr.mxu0 0.0
  %867 = vmatpush2.msra.mxu0 0.0
  %868 = vmatprep.subr.mxu0 0.0
  %869 = vmatpush2.msra.mxu0 0.0
  %870 = vmatprep.subr.mxu0 0.0
  %871 = vmatpush2.msra.mxu0 0.0
  %872 = vmatprep.subr.mxu0 0.0
  %873 = vmatpush2.msra.mxu0 0.0
  %874 = vmatprep.subr.mxu0 0.0
  %875 = vmatpush2.msra.mxu0 0.0
  %876 = vmatprep.subr.mxu0 0.0
  %877 = vmatpush2.msra.mxu0 0.0
  %878 = vmatprep.subr.mxu0 0.0
  %879 = vmatpush2.msra.mxu0 0.0
  %880 = vmatprep.subr.mxu0 0.0
  %881 = vmatpush2.msra.mxu0 0.0
  %882 = vmatprep.subr.mxu0 0.0
  %883 = vmatpush2.msra.mxu0 0.0
  %884 = vmatprep.subr.mxu0 0.0
  %885 = vmatpush2.msra.mxu0 0.0
  %886 = vmatprep.subr.mxu0 0.0
  %887 = vmatpush2.msra.mxu0 0.0
  %888 = vmatprep.mubr.f32.mxu0 0.0
  %v889 = vand.u32 %v684, 4294901760
  %890 = vmatmul.mubr.f32.gmra.mxu0 %v889
  %v891 = vpop.f32.mrf.mxu0
  %v892 = vadd.f32 %v771, %v891
  %v893 = vpop.f32.mrf.mxu0
  %894 = vmatprep.mubr.f32.mxu0 0.0
  %v895 = vand.u32 %v687, 4294901760
  %896 = vmatmul.mubr.f32.gmra.mxu0 %v895
  %v897 = vpop.f32.mrf.mxu0
  %v898 = vadd.f32 %v781, %v897
  %v899 = vpop.f32.mrf.mxu0
  %900 = vmatprep.mubr.f32.mxu0 0.0
  %v901 = vand.u32 %v690, 4294901760
  %902 = vmatmul.mubr.f32.gmra.mxu0 %v901
  %v903 = vpop.f32.mrf.mxu0
  %v904 = vadd.f32 %v791, %v903
  %v905 = vpop.f32.mrf.mxu0
  %906 = vmatprep.mubr.f32.mxu0 0.0
  %v907 = vand.u32 %v693, 4294901760
  %908 = vmatmul.mubr.f32.gmra.mxu0 %v907
  %v909 = vpop.f32.mrf.mxu0
  %v910 = vadd.f32 %v801, %v909
  %v911 = vpop.f32.mrf.mxu0
  %912 = vdwg.mxu0
  %913 = vmatprep.subr.mxu0 0.0
  %914 = vmatpush1.msra.mxu0 0.0
  %915 = vmatprep.subr.mxu0 0.0
  %916 = vmatpush1.msra.mxu0 0.0
  %917 = vmatprep.subr.mxu0 0.0
  %918 = vmatpush1.msra.mxu0 0.0
  %919 = vmatprep.subr.mxu0 0.0
  %920 = vmatpush1.msra.mxu0 0.0
  %921 = vmatprep.subr.mxu0 0.0
  %922 = vmatpush1.msra.mxu0 0.0
  %923 = vmatprep.subr.mxu0 0.0
  %924 = vmatpush1.msra.mxu0 0.0
  %925 = vmatprep.subr.mxu0 0.0
  %926 = vmatpush1.msra.mxu0 0.0
  %927 = vmatprep.subr.mxu0 0.0
  %928 = vmatpush1.msra.mxu0 0.0
  %929 = vmatprep.subr.mxu0 0.0
  %930 = vmatpush1.msra.mxu0 0.0
  %931 = vmatprep.subr.mxu0 0.0
  %932 = vmatpush1.msra.mxu0 0.0
  %933 = vmatprep.subr.mxu0 0.0
  %934 = vmatpush1.msra.mxu0 0.0
  %935 = vmatprep.subr.mxu0 0.0
  %936 = vmatpush1.msra.mxu0 0.0
  %937 = vmatprep.subr.mxu0 0.0
  %v938 = vand.u32 %v44, 4294901760
  %v939 = vsub.f32 %v44, %v938
  %940 = vmatpush1.msra.mxu0 %v939
  %941 = vmatprep.subr.mxu0 0.0
  %v942 = vand.u32 %v43, 4294901760
  %v943 = vsub.f32 %v43, %v942
  %944 = vmatpush1.msra.mxu0 %v943
  %945 = vmatprep.subr.mxu0 0.0
  %v946 = vand.u32 %v42, 4294901760
  %v947 = vsub.f32 %v42, %v946
  %948 = vmatpush1.msra.mxu0 %v947
  %949 = vmatprep.subr.mxu0 0.0
  %v950 = vand.u32 %v41, 4294901760
  %v951 = vsub.f32 %v41, %v950
  %952 = vmatpush1.msra.mxu0 %v951
  %953 = vmatprep.subr.mxu0 0.0
  %954 = vmatpush2.msra.mxu0 0.0
  %955 = vmatprep.subr.mxu0 0.0
  %956 = vmatpush2.msra.mxu0 0.0
  %957 = vmatprep.subr.mxu0 0.0
  %958 = vmatpush2.msra.mxu0 0.0
  %959 = vmatprep.subr.mxu0 0.0
  %960 = vmatpush2.msra.mxu0 0.0
  %961 = vmatprep.subr.mxu0 0.0
  %962 = vmatpush2.msra.mxu0 0.0
  %963 = vmatprep.subr.mxu0 0.0
  %964 = vmatpush2.msra.mxu0 0.0
  %965 = vmatprep.subr.mxu0 0.0
  %966 = vmatpush2.msra.mxu0 0.0
  %967 = vmatprep.subr.mxu0 0.0
  %968 = vmatpush2.msra.mxu0 0.0
  %969 = vmatprep.subr.mxu0 0.0
  %970 = vmatpush2.msra.mxu0 0.0
  %971 = vmatprep.subr.mxu0 0.0
  %972 = vmatpush2.msra.mxu0 0.0
  %973 = vmatprep.subr.mxu0 0.0
  %974 = vmatpush2.msra.mxu0 0.0
  %975 = vmatprep.subr.mxu0 0.0
  %976 = vmatpush2.msra.mxu0 0.0
  %977 = vmatprep.subr.mxu0 0.0
  %978 = vmatpush2.msra.mxu0 0.0
  %979 = vmatprep.subr.mxu0 0.0
  %980 = vmatpush2.msra.mxu0 0.0
  %981 = vmatprep.subr.mxu0 0.0
  %982 = vmatpush2.msra.mxu0 0.0
  %983 = vmatprep.subr.mxu0 0.0
  %984 = vmatpush2.msra.mxu0 0.0
  %985 = vmatprep.mubr.f32.mxu0 0.0
  %v986 = vand.u32 %v684, 4294901760
  %v987 = vsub.f32 %v684, %v986
  %988 = vmatmul.mubr.f32.gmra.mxu0 %v987
  %v989 = vpop.f32.mrf.mxu0
  %v990 = vadd.f32 %v892, %v989
  %v991 = vpop.f32.mrf.mxu0
  %992 = vmatprep.mubr.f32.mxu0 0.0
  %v993 = vand.u32 %v687, 4294901760
  %v994 = vsub.f32 %v687, %v993
  %995 = vmatmul.mubr.f32.gmra.mxu0 %v994
  %v996 = vpop.f32.mrf.mxu0
  %v997 = vadd.f32 %v898, %v996
  %v998 = vpop.f32.mrf.mxu0
  %999 = vmatprep.mubr.f32.mxu0 0.0
  %v1000 = vand.u32 %v690, 4294901760
  %v1001 = vsub.f32 %v690, %v1000
  %1002 = vmatmul.mubr.f32.gmra.mxu0 %v1001
  %v1003 = vpop.f32.mrf.mxu0
  %v1004 = vadd.f32 %v904, %v1003
  %v1005 = vpop.f32.mrf.mxu0
  %1006 = vmatprep.mubr.f32.mxu0 0.0
  %v1007 = vand.u32 %v693, 4294901760
  %v1008 = vsub.f32 %v693, %v1007
  %1009 = vmatmul.mubr.f32.gmra.mxu0 %v1008
  %v1010 = vpop.f32.mrf.mxu0
  %v1011 = vadd.f32 %v910, %v1010
  %v1012 = vpop.f32.mrf.mxu0
  %1013 = vdwg.mxu0
  %1014 = vmatprep.subr.mxu0 0.0
  %1015 = vmatpush1.msra.mxu0 0.0
  %1016 = vmatprep.subr.mxu0 0.0
  %1017 = vmatpush1.msra.mxu0 0.0
  %1018 = vmatprep.subr.mxu0 0.0
  %1019 = vmatpush1.msra.mxu0 0.0
  %1020 = vmatprep.subr.mxu0 0.0
  %1021 = vmatpush1.msra.mxu0 0.0
  %1022 = vmatprep.subr.mxu0 0.0
  %1023 = vmatpush1.msra.mxu0 0.0
  %1024 = vmatprep.subr.mxu0 0.0
  %1025 = vmatpush1.msra.mxu0 0.0
  %1026 = vmatprep.subr.mxu0 0.0
  %1027 = vmatpush1.msra.mxu0 0.0
  %1028 = vmatprep.subr.mxu0 0.0
  %1029 = vmatpush1.msra.mxu0 0.0
  %1030 = vmatprep.subr.mxu0 0.0
  %1031 = vmatpush1.msra.mxu0 0.0
  %1032 = vmatprep.subr.mxu0 0.0
  %1033 = vmatpush1.msra.mxu0 0.0
  %1034 = vmatprep.subr.mxu0 0.0
  %1035 = vmatpush1.msra.mxu0 0.0
  %1036 = vmatprep.subr.mxu0 0.0
  %1037 = vmatpush1.msra.mxu0 0.0
  %1038 = vmatprep.subr.mxu0 0.0
  %v1039 = vand.u32 %v44, 4294901760
  %1040 = vmatpush1.msra.mxu0 %v1039
  %1041 = vmatprep.subr.mxu0 0.0
  %v1042 = vand.u32 %v43, 4294901760
  %1043 = vmatpush1.msra.mxu0 %v1042
  %1044 = vmatprep.subr.mxu0 0.0
  %v1045 = vand.u32 %v42, 4294901760
  %1046 = vmatpush1.msra.mxu0 %v1045
  %1047 = vmatprep.subr.mxu0 0.0
  %v1048 = vand.u32 %v41, 4294901760
  %1049 = vmatpush1.msra.mxu0 %v1048
  %1050 = vmatprep.subr.mxu0 0.0
  %1051 = vmatpush2.msra.mxu0 0.0
  %1052 = vmatprep.subr.mxu0 0.0
  %1053 = vmatpush2.msra.mxu0 0.0
  %1054 = vmatprep.subr.mxu0 0.0
  %1055 = vmatpush2.msra.mxu0 0.0
  %1056 = vmatprep.subr.mxu0 0.0
  %1057 = vmatpush2.msra.mxu0 0.0
  %1058 = vmatprep.subr.mxu0 0.0
  %1059 = vmatpush2.msra.mxu0 0.0
  %1060 = vmatprep.subr.mxu0 0.0
  %1061 = vmatpush2.msra.mxu0 0.0
  %1062 = vmatprep.subr.mxu0 0.0
  %1063 = vmatpush2.msra.mxu0 0.0
  %1064 = vmatprep.subr.mxu0 0.0
  %1065 = vmatpush2.msra.mxu0 0.0
  %1066 = vmatprep.subr.mxu0 0.0
  %1067 = vmatpush2.msra.mxu0 0.0
  %1068 = vmatprep.subr.mxu0 0.0
  %1069 = vmatpush2.msra.mxu0 0.0
  %1070 = vmatprep.subr.mxu0 0.0
  %1071 = vmatpush2.msra.mxu0 0.0
  %1072 = vmatprep.subr.mxu0 0.0
  %1073 = vmatpush2.msra.mxu0 0.0
  %1074 = vmatprep.subr.mxu0 0.0
  %1075 = vmatpush2.msra.mxu0 0.0
  %1076 = vmatprep.subr.mxu0 0.0
  %1077 = vmatpush2.msra.mxu0 0.0
  %1078 = vmatprep.subr.mxu0 0.0
  %1079 = vmatpush2.msra.mxu0 0.0
  %1080 = vmatprep.subr.mxu0 0.0
  %1081 = vmatpush2.msra.mxu0 0.0
  %1082 = vmatprep.mubr.f32.mxu0 0.0
  %v1083 = vand.u32 %v684, 4294901760
  %v1084 = vsub.f32 %v684, %v1083
  %v1085 = vand.u32 %v1084, 4294901760
  %1086 = vmatmul.mubr.f32.gmra.mxu0 %v1085
  %v1087 = vpop.f32.mrf.mxu0
  %v1088 = vadd.f32 %v990, %v1087
  %v1089 = vpop.f32.mrf.mxu0
  %1090 = vmatprep.mubr.f32.mxu0 0.0
  %v1091 = vand.u32 %v687, 4294901760
  %v1092 = vsub.f32 %v687, %v1091
  %v1093 = vand.u32 %v1092, 4294901760
  %1094 = vmatmul.mubr.f32.gmra.mxu0 %v1093
  %v1095 = vpop.f32.mrf.mxu0
  %v1096 = vadd.f32 %v997, %v1095
  %v1097 = vpop.f32.mrf.mxu0
  %1098 = vmatprep.mubr.f32.mxu0 0.0
  %v1099 = vand.u32 %v690, 4294901760
  %v1100 = vsub.f32 %v690, %v1099
  %v1101 = vand.u32 %v1100, 4294901760
  %1102 = vmatmul.mubr.f32.gmra.mxu0 %v1101
  %v1103 = vpop.f32.mrf.mxu0
  %v1104 = vadd.f32 %v1004, %v1103
  %v1105 = vpop.f32.mrf.mxu0
  %1106 = vmatprep.mubr.f32.mxu0 0.0
  %v1107 = vand.u32 %v693, 4294901760
  %v1108 = vsub.f32 %v693, %v1107
  %v1109 = vand.u32 %v1108, 4294901760
  %1110 = vmatmul.mubr.f32.gmra.mxu0 %v1109
  %v1111 = vpop.f32.mrf.mxu0
  %v1112 = vadd.f32 %v1011, %v1111
  %v1113 = vpop.f32.mrf.mxu0
  %1114 = vdwg.mxu0
  %1115 = vmatprep.subr.mxu0 0.0
  %1116 = vmatpush1.msra.mxu0 0.0
  %1117 = vmatprep.subr.mxu0 0.0
  %1118 = vmatpush1.msra.mxu0 0.0
  %1119 = vmatprep.subr.mxu0 0.0
  %1120 = vmatpush1.msra.mxu0 0.0
  %1121 = vmatprep.subr.mxu0 0.0
  %1122 = vmatpush1.msra.mxu0 0.0
  %1123 = vmatprep.subr.mxu0 0.0
  %1124 = vmatpush1.msra.mxu0 0.0
  %1125 = vmatprep.subr.mxu0 0.0
  %1126 = vmatpush1.msra.mxu0 0.0
  %1127 = vmatprep.subr.mxu0 0.0
  %1128 = vmatpush1.msra.mxu0 0.0
  %1129 = vmatprep.subr.mxu0 0.0
  %1130 = vmatpush1.msra.mxu0 0.0
  %1131 = vmatprep.subr.mxu0 0.0
  %1132 = vmatpush1.msra.mxu0 0.0
  %1133 = vmatprep.subr.mxu0 0.0
  %1134 = vmatpush1.msra.mxu0 0.0
  %1135 = vmatprep.subr.mxu0 0.0
  %1136 = vmatpush1.msra.mxu0 0.0
  %1137 = vmatprep.subr.mxu0 0.0
  %1138 = vmatpush1.msra.mxu0 0.0
  %1139 = vmatprep.subr.mxu0 0.0
  %v1140 = vand.u32 %v44, 4294901760
  %v1141 = vsub.f32 %v44, %v1140
  %v1142 = vand.u32 %v1141, 4294901760
  %1143 = vmatpush1.msra.mxu0 %v1142
  %1144 = vmatprep.subr.mxu0 0.0
  %v1145 = vand.u32 %v43, 4294901760
  %v1146 = vsub.f32 %v43, %v1145
  %v1147 = vand.u32 %v1146, 4294901760
  %1148 = vmatpush1.msra.mxu0 %v1147
  %1149 = vmatprep.subr.mxu0 0.0
  %v1150 = vand.u32 %v42, 4294901760
  %v1151 = vsub.f32 %v42, %v1150
  %v1152 = vand.u32 %v1151, 4294901760
  %1153 = vmatpush1.msra.mxu0 %v1152
  %1154 = vmatprep.subr.mxu0 0.0
  %v1155 = vand.u32 %v41, 4294901760
  %v1156 = vsub.f32 %v41, %v1155
  %v1157 = vand.u32 %v1156, 4294901760
  %1158 = vmatpush1.msra.mxu0 %v1157
  %1159 = vmatprep.subr.mxu0 0.0
  %1160 = vmatpush2.msra.mxu0 0.0
  %1161 = vmatprep.subr.mxu0 0.0
  %1162 = vmatpush2.msra.mxu0 0.0
  %1163 = vmatprep.subr.mxu0 0.0
  %1164 = vmatpush2.msra.mxu0 0.0
  %1165 = vmatprep.subr.mxu0 0.0
  %1166 = vmatpush2.msra.mxu0 0.0
  %1167 = vmatprep.subr.mxu0 0.0
  %1168 = vmatpush2.msra.mxu0 0.0
  %1169 = vmatprep.subr.mxu0 0.0
  %1170 = vmatpush2.msra.mxu0 0.0
  %1171 = vmatprep.subr.mxu0 0.0
  %1172 = vmatpush2.msra.mxu0 0.0
  %1173 = vmatprep.subr.mxu0 0.0
  %1174 = vmatpush2.msra.mxu0 0.0
  %1175 = vmatprep.subr.mxu0 0.0
  %1176 = vmatpush2.msra.mxu0 0.0
  %1177 = vmatprep.subr.mxu0 0.0
  %1178 = vmatpush2.msra.mxu0 0.0
  %1179 = vmatprep.subr.mxu0 0.0
  %1180 = vmatpush2.msra.mxu0 0.0
  %1181 = vmatprep.subr.mxu0 0.0
  %1182 = vmatpush2.msra.mxu0 0.0
  %1183 = vmatprep.subr.mxu0 0.0
  %1184 = vmatpush2.msra.mxu0 0.0
  %1185 = vmatprep.subr.mxu0 0.0
  %1186 = vmatpush2.msra.mxu0 0.0
  %1187 = vmatprep.subr.mxu0 0.0
  %1188 = vmatpush2.msra.mxu0 0.0
  %1189 = vmatprep.subr.mxu0 0.0
  %1190 = vmatpush2.msra.mxu0 0.0
  %1191 = vmatprep.mubr.f32.mxu0 0.0
  %v1192 = vand.u32 %v684, 4294901760
  %1193 = vmatmul.mubr.f32.gmra.mxu0 %v1192
  %v1194 = vpop.f32.mrf.mxu0
  %v1195 = vadd.f32 %v1088, %v1194
  %v1196 = vpop.f32.mrf.mxu0
  %1197 = vmatprep.mubr.f32.mxu0 0.0
  %v1198 = vand.u32 %v687, 4294901760
  %1199 = vmatmul.mubr.f32.gmra.mxu0 %v1198
  %v1200 = vpop.f32.mrf.mxu0
  %v1201 = vadd.f32 %v1096, %v1200
  %v1202 = vpop.f32.mrf.mxu0
  %1203 = vmatprep.mubr.f32.mxu0 0.0
  %v1204 = vand.u32 %v690, 4294901760
  %1205 = vmatmul.mubr.f32.gmra.mxu0 %v1204
  %v1206 = vpop.f32.mrf.mxu0
  %v1207 = vadd.f32 %v1104, %v1206
  %v1208 = vpop.f32.mrf.mxu0
  %1209 = vmatprep.mubr.f32.mxu0 0.0
  %v1210 = vand.u32 %v693, 4294901760
  %1211 = vmatmul.mubr.f32.gmra.mxu0 %v1210
  %v1212 = vpop.f32.mrf.mxu0
  %v1213 = vadd.f32 %v1112, %v1212
  %v1214 = vpop.f32.mrf.mxu0
  %1215 = vdwg.mxu0
  %1216 = vmatprep.subr.mxu0 0.0
  %1217 = vmatpush1.msra.mxu0 0.0
  %1218 = vmatprep.subr.mxu0 0.0
  %1219 = vmatpush1.msra.mxu0 0.0
  %1220 = vmatprep.subr.mxu0 0.0
  %1221 = vmatpush1.msra.mxu0 0.0
  %1222 = vmatprep.subr.mxu0 0.0
  %1223 = vmatpush1.msra.mxu0 0.0
  %1224 = vmatprep.subr.mxu0 0.0
  %1225 = vmatpush1.msra.mxu0 0.0
  %1226 = vmatprep.subr.mxu0 0.0
  %1227 = vmatpush1.msra.mxu0 0.0
  %1228 = vmatprep.subr.mxu0 0.0
  %1229 = vmatpush1.msra.mxu0 0.0
  %1230 = vmatprep.subr.mxu0 0.0
  %1231 = vmatpush1.msra.mxu0 0.0
  %1232 = vmatprep.subr.mxu0 0.0
  %1233 = vmatpush1.msra.mxu0 0.0
  %1234 = vmatprep.subr.mxu0 0.0
  %1235 = vmatpush1.msra.mxu0 0.0
  %1236 = vmatprep.subr.mxu0 0.0
  %1237 = vmatpush1.msra.mxu0 0.0
  %1238 = vmatprep.subr.mxu0 0.0
  %1239 = vmatpush1.msra.mxu0 0.0
  %1240 = vmatprep.subr.mxu0 0.0
  %v1241 = vand.u32 %v44, 4294901760
  %1242 = vmatpush1.msra.mxu0 %v1241
  %1243 = vmatprep.subr.mxu0 0.0
  %v1244 = vand.u32 %v43, 4294901760
  %1245 = vmatpush1.msra.mxu0 %v1244
  %1246 = vmatprep.subr.mxu0 0.0
  %v1247 = vand.u32 %v42, 4294901760
  %1248 = vmatpush1.msra.mxu0 %v1247
  %1249 = vmatprep.subr.mxu0 0.0
  %v1250 = vand.u32 %v41, 4294901760
  %1251 = vmatpush1.msra.mxu0 %v1250
  %1252 = vmatprep.subr.mxu0 0.0
  %1253 = vmatpush2.msra.mxu0 0.0
  %1254 = vmatprep.subr.mxu0 0.0
  %1255 = vmatpush2.msra.mxu0 0.0
  %1256 = vmatprep.subr.mxu0 0.0
  %1257 = vmatpush2.msra.mxu0 0.0
  %1258 = vmatprep.subr.mxu0 0.0
  %1259 = vmatpush2.msra.mxu0 0.0
  %1260 = vmatprep.subr.mxu0 0.0
  %1261 = vmatpush2.msra.mxu0 0.0
  %1262 = vmatprep.subr.mxu0 0.0
  %1263 = vmatpush2.msra.mxu0 0.0
  %1264 = vmatprep.subr.mxu0 0.0
  %1265 = vmatpush2.msra.mxu0 0.0
  %1266 = vmatprep.subr.mxu0 0.0
  %1267 = vmatpush2.msra.mxu0 0.0
  %1268 = vmatprep.subr.mxu0 0.0
  %1269 = vmatpush2.msra.mxu0 0.0
  %1270 = vmatprep.subr.mxu0 0.0
  %1271 = vmatpush2.msra.mxu0 0.0
  %1272 = vmatprep.subr.mxu0 0.0
  %1273 = vmatpush2.msra.mxu0 0.0
  %1274 = vmatprep.subr.mxu0 0.0
  %1275 = vmatpush2.msra.mxu0 0.0
  %1276 = vmatprep.subr.mxu0 0.0
  %1277 = vmatpush2.msra.mxu0 0.0
  %1278 = vmatprep.subr.mxu0 0.0
  %1279 = vmatpush2.msra.mxu0 0.0
  %1280 = vmatprep.subr.mxu0 0.0
  %1281 = vmatpush2.msra.mxu0 0.0
  %1282 = vmatprep.subr.mxu0 0.0
  %1283 = vmatpush2.msra.mxu0 0.0
  %1284 = vmatprep.mubr.f32.mxu0 0.0
  %v1285 = vand.u32 %v684, 4294901760
  %1286 = vmatmul.mubr.f32.gmra.mxu0 %v1285
  %v1287 = vpop.f32.mrf.mxu0
  %v1288 = vadd.f32 %v1195, %v1287
  %v1289 = vpop.f32.mrf.mxu0
  %1290 = vmatprep.mubr.f32.mxu0 0.0
  %v1291 = vand.u32 %v687, 4294901760
  %1292 = vmatmul.mubr.f32.gmra.mxu0 %v1291
  %v1293 = vpop.f32.mrf.mxu0
  %v1294 = vadd.f32 %v1201, %v1293
  %v1295 = vpop.f32.mrf.mxu0
  %1296 = vmatprep.mubr.f32.mxu0 0.0
  %v1297 = vand.u32 %v690, 4294901760
  %1298 = vmatmul.mubr.f32.gmra.mxu0 %v1297
  %v1299 = vpop.f32.mrf.mxu0
  %v1300 = vadd.f32 %v1207, %v1299
  %v1301 = vpop.f32.mrf.mxu0
  %1302 = vmatprep.mubr.f32.mxu0 0.0
  %v1303 = vand.u32 %v693, 4294901760
  %1304 = vmatmul.mubr.f32.gmra.mxu0 %v1303
  %v1305 = vpop.f32.mrf.mxu0
  %v1306 = vadd.f32 %v1213, %v1305
  %v1307 = vpop.f32.mrf.mxu0
  %1308 = vdwg.mxu0
  %vm1309 = vcmask 64512
  %v1310 = vsel %vm1309, %v658, 0.0
  %v1311 = vsel %vm1309, %v664, 0.0
  %v1312 = vadd.f32 %v1310, %v1311
  %v1313 = vsel %vm1309, %v670, 0.0
  %v1314 = vadd.f32 %v1312, %v1313
  %v1315 = vsel %vm1309, %v676, 0.0
  %v1316 = vadd.f32 %v1314, %v1315
  %v1317 = vrot.slane %v1316, 4
  %v1318 = vadd.f32 %v1316, %v1317
  %v1319 = vrot.slane %v1318, 2
  %v1320 = vadd.f32 %v1318, %v1319
  %v1321 = vrot.slane %v1320, 1
  %v1322 = vadd.f32 %v1320, %v1321
  %v1323 = vsel %vm1309, %v1288, 0.0
  %v1324 = vsel %vm1309, %v1294, 0.0
  %v1325 = vadd.f32 %v1323, %v1324
  %v1326 = vsel %vm1309, %v1300, 0.0
  %v1327 = vadd.f32 %v1325, %v1326
  %v1328 = vsel %vm1309, %v1306, 0.0
  %v1329 = vadd.f32 %v1327, %v1328
  %v1330 = vrot.slane %v1329, 4
  %v1331 = vadd.f32 %v1329, %v1330
  %v1332 = vrot.slane %v1331, 2
  %v1333 = vadd.f32 %v1331, %v1332
  %v1334 = vrot.slane %v1333, 1
  %v1335 = vadd.f32 %v1333, %v1334
  %v1336 = vadd.f32 %v1322, %v1335
  %v1337 = vrcp.pop 64.0
  %v1338 = vmul.f32 %v1336, %v1337
  %v1339 = vsub.f32 %v658, %v1338
  %v1340 = vsub.f32 %v664, %v1338
  %v1341 = vsub.f32 %v670, %v1338
  %v1342 = vsub.f32 %v676, %v1338
  %v1343 = vmul.f32 %v1339, %v1339
  %v1344 = vmul.f32 %v1340, %v1340
  %v1345 = vmul.f32 %v1341, %v1341
  %v1346 = vmul.f32 %v1342, %v1342
  %v1347 = vsel %vm1309, %v1343, 0.0
  %v1348 = vsel %vm1309, %v1344, 0.0
  %v1349 = vadd.f32 %v1347, %v1348
  %v1350 = vsel %vm1309, %v1345, 0.0
  %v1351 = vadd.f32 %v1349, %v1350
  %v1352 = vsel %vm1309, %v1346, 0.0
  %v1353 = vadd.f32 %v1351, %v1352
  %v1354 = vrot.slane %v1353, 4
  %v1355 = vadd.f32 %v1353, %v1354
  %v1356 = vrot.slane %v1355, 2
  %v1357 = vadd.f32 %v1355, %v1356
  %v1358 = vrot.slane %v1357, 1
  %v1359 = vadd.f32 %v1357, %v1358
  %v1360 = vsub.f32 %v1288, %v1338
  %v1361 = vsub.f32 %v1294, %v1338
  %v1362 = vsub.f32 %v1300, %v1338
  %v1363 = vsub.f32 %v1306, %v1338
  %v1364 = vmul.f32 %v1360, %v1360
  %v1365 = vmul.f32 %v1361, %v1361
  %v1366 = vmul.f32 %v1362, %v1362
  %v1367 = vmul.f32 %v1363, %v1363
  %v1368 = vsel %vm1309, %v1364, 0.0
  %v1369 = vsel %vm1309, %v1365, 0.0
  %v1370 = vadd.f32 %v1368, %v1369
  %v1371 = vsel %vm1309, %v1366, 0.0
  %v1372 = vadd.f32 %v1370, %v1371
  %v1373 = vsel %vm1309, %v1367, 0.0
  %v1374 = vadd.f32 %v1372, %v1373
  %v1375 = vrot.slane %v1374, 4
  %v1376 = vadd.f32 %v1374, %v1375
  %v1377 = vrot.slane %v1376, 2
  %v1378 = vadd.f32 %v1376, %v1377
  %v1379 = vrot.slane %v1378, 1
  %v1380 = vadd.f32 %v1378, %v1379
  %v1381 = vadd.f32 %v1359, %v1380
  %v1382 = vmul.f32 %v1381, %v1337
  %v1383 = vadd.f32 %v1382, 1e-05
  %v1384 = vrsqrt.pop %v1383
  %v1385 = vmul.f32 %v1339, %v1384
  %v1386 = vmul.f32 %v1340, %v1384
  %v1387 = vmul.f32 %v1341, %v1384
  %v1388 = vmul.f32 %v1342, %v1384
  %v1389 = vld [vmem:[%s4] sm:$0x1]
  %v1391 = vlaneseq
  %v1392 = vshrl.u32 %v1391, 7
  %v1393 = vsub.s32 0, %v1392
  %v1394 = vrot.slane %v1389, %v1393
  %v1396 = vmul.f32 %v1385, %v1394
  %v1397 = vmul.f32 %v1386, %v1394
  %v1398 = vmul.f32 %v1387, %v1394
  %v1399 = vmul.f32 %v1388, %v1394
  %v1400 = vld [vmem:[%s5] sm:$0x1]
  %v1402 = vlaneseq
  %v1403 = vshrl.u32 %v1402, 7
  %v1404 = vsub.s32 0, %v1403
  %v1405 = vrot.slane %v1400, %v1404
  %v1407 = vadd.f32 %v1396, %v1405
  %v1408 = vadd.f32 %v1397, %v1405
  %v1409 = vadd.f32 %v1398, %v1405
  %v1410 = vadd.f32 %v1399, %v1405
  %v1411 = vadd.f32 %v1407, 3.0
  %v1412 = vadd.f32 %v1408, 3.0
  %v1413 = vadd.f32 %v1409, 3.0
  %v1414 = vadd.f32 %v1410, 3.0
  %v1415 = vmax.f32 %v1411, 0.0
  %v1416 = vmax.f32 %v1412, 0.0
  %v1417 = vmax.f32 %v1413, 0.0
  %v1418 = vmax.f32 %v1414, 0.0
  %v1419 = vmin.f32 %v1415, 6.0
  %v1420 = vmin.f32 %v1416, 6.0
  %v1421 = vmin.f32 %v1417, 6.0
  %v1422 = vmin.f32 %v1418, 6.0
  %v1423 = vmul.f32 %v1407, %v1419
  %v1424 = vmul.f32 %v1408, %v1420
  %v1425 = vmul.f32 %v1409, %v1421
  %v1426 = vmul.f32 %v1410, %v1422
  %v1427 = vmul.f32 %v1423, 0.16666667
  %v1428 = vmul.f32 %v1424, 0.16666667
  %v1429 = vmul.f32 %v1425, 0.16666667
  %v1430 = vmul.f32 %v1426, 0.16666667
  %v1431 = vmul.f32 %v1360, %v1384
  %v1432 = vmul.f32 %v1361, %v1384
  %v1433 = vmul.f32 %v1362, %v1384
  %v1434 = vmul.f32 %v1363, %v1384
  %v1435 = vmul.f32 %v1431, %v1394
  %v1436 = vmul.f32 %v1432, %v1394
  %v1437 = vmul.f32 %v1433, %v1394
  %v1438 = vmul.f32 %v1434, %v1394
  %v1439 = vadd.f32 %v1435, %v1405
  %v1440 = vadd.f32 %v1436, %v1405
  %v1441 = vadd.f32 %v1437, %v1405
  %v1442 = vadd.f32 %v1438, %v1405
  %v1443 = vadd.f32 %v1439, 3.0
  %v1444 = vadd.f32 %v1440, 3.0
  %v1445 = vadd.f32 %v1441, 3.0
  %v1446 = vadd.f32 %v1442, 3.0
  %v1447 = vmax.f32 %v1443, 0.0
  %v1448 = vmax.f32 %v1444, 0.0
  %v1449 = vmax.f32 %v1445, 0.0
  %v1450 = vmax.f32 %v1446, 0.0
  %v1451 = vmin.f32 %v1447, 6.0
  %v1452 = vmin.f32 %v1448, 6.0
  %v1453 = vmin.f32 %v1449, 6.0
  %v1454 = vmin.f32 %v1450, 6.0
  %v1455 = vmul.f32 %v1439, %v1451
  %v1456 = vmul.f32 %v1440, %v1452
  %v1457 = vmul.f32 %v1441, %v1453
  %v1458 = vmul.f32 %v1442, %v1454
  %v1459 = vmul.f32 %v1455, 0.16666667
  %v1460 = vmul.f32 %v1456, 0.16666667
  %v1461 = vmul.f32 %v1457, 0.16666667
  %v1462 = vmul.f32 %v1458, 0.16666667
  %v1463 = vld [vmem:[%s6] sm:$0xff]
  %v1464 = vld [vmem:[%s7] sm:$0x1]
  %v1466 = vlaneseq
  %v1467 = vshrl.u32 %v1466, 7
  %v1468 = vsub.s32 0, %v1467
  %v1469 = vrot.slane %v1464, %v1468
  %v1472 = vsel %vm1309, %v1427, 0
  %v1475 = vsel %vm1309, %v1428, 0
  %v1478 = vsel %vm1309, %v1429, 0
  %v1481 = vsel %vm1309, %v1430, 0
  %1483 = vmatprep.subr.mxu0 0.0
  %1484 = vmatpush1.msra.mxu0 0.0
  %1485 = vmatprep.subr.mxu0 0.0
  %1486 = vmatpush1.msra.mxu0 0.0
  %1487 = vmatprep.subr.mxu0 0.0
  %1488 = vmatpush1.msra.mxu0 0.0
  %1489 = vmatprep.subr.mxu0 0.0
  %1490 = vmatpush1.msra.mxu0 0.0
  %1491 = vmatprep.subr.mxu0 0.0
  %1492 = vmatpush1.msra.mxu0 0.0
  %1493 = vmatprep.subr.mxu0 0.0
  %1494 = vmatpush1.msra.mxu0 0.0
  %1495 = vmatprep.subr.mxu0 0.0
  %1496 = vmatpush1.msra.mxu0 0.0
  %1497 = vmatprep.subr.mxu0 0.0
  %1498 = vmatpush1.msra.mxu0 0.0
  %1499 = vmatprep.subr.mxu0 0.0
  %1500 = vmatpush1.msra.mxu0 0.0
  %1501 = vmatprep.subr.mxu0 0.0
  %1502 = vmatpush1.msra.mxu0 0.0
  %1503 = vmatprep.subr.mxu0 0.0
  %1504 = vmatpush1.msra.mxu0 0.0
  %1505 = vmatprep.subr.mxu0 0.0
  %1506 = vmatpush1.msra.mxu0 0.0
  %1507 = vmatprep.subr.mxu0 0.0
  %1508 = vmatpush1.msra.mxu0 0.0
  %1509 = vmatprep.subr.mxu0 0.0
  %1510 = vmatpush1.msra.mxu0 0.0
  %1511 = vmatprep.subr.mxu0 0.0
  %1512 = vmatpush1.msra.mxu0 0.0
  %1513 = vmatprep.subr.mxu0 0.0
  %v1514 = vand.u32 %v1463, 4294901760
  %1515 = vmatpush1.msra.mxu0 %v1514
  %1516 = vmatprep.subr.mxu0 0.0
  %1517 = vmatpush2.msra.mxu0 0.0
  %1518 = vmatprep.subr.mxu0 0.0
  %1519 = vmatpush2.msra.mxu0 0.0
  %1520 = vmatprep.subr.mxu0 0.0
  %1521 = vmatpush2.msra.mxu0 0.0
  %1522 = vmatprep.subr.mxu0 0.0
  %1523 = vmatpush2.msra.mxu0 0.0
  %1524 = vmatprep.subr.mxu0 0.0
  %1525 = vmatpush2.msra.mxu0 0.0
  %1526 = vmatprep.subr.mxu0 0.0
  %1527 = vmatpush2.msra.mxu0 0.0
  %1528 = vmatprep.subr.mxu0 0.0
  %1529 = vmatpush2.msra.mxu0 0.0
  %1530 = vmatprep.subr.mxu0 0.0
  %1531 = vmatpush2.msra.mxu0 0.0
  %1532 = vmatprep.subr.mxu0 0.0
  %1533 = vmatpush2.msra.mxu0 0.0
  %1534 = vmatprep.subr.mxu0 0.0
  %1535 = vmatpush2.msra.mxu0 0.0
  %1536 = vmatprep.subr.mxu0 0.0
  %1537 = vmatpush2.msra.mxu0 0.0
  %1538 = vmatprep.subr.mxu0 0.0
  %1539 = vmatpush2.msra.mxu0 0.0
  %1540 = vmatprep.subr.mxu0 0.0
  %1541 = vmatpush2.msra.mxu0 0.0
  %1542 = vmatprep.subr.mxu0 0.0
  %1543 = vmatpush2.msra.mxu0 0.0
  %1544 = vmatprep.subr.mxu0 0.0
  %1545 = vmatpush2.msra.mxu0 0.0
  %1546 = vmatprep.subr.mxu0 0.0
  %1547 = vmatpush2.msra.mxu0 0.0
  %1548 = vmatprep.mubr.f32.mxu0 0.0
  %v1549 = vand.u32 %v1472, 4294901760
  %v1550 = vsub.f32 %v1472, %v1549
  %v1551 = vand.u32 %v1550, 4294901760
  %v1552 = vsub.f32 %v1550, %v1551
  %v1553 = vand.u32 %v1552, 4294901760
  %1554 = vmatmul.mubr.f32.gmra.mxu0 %v1553
  %v1555 = vpop.f32.mrf.mxu0
  %v1556 = vadd.f32 %v1469, %v1555
  %v1557 = vpop.f32.mrf.mxu0
  %1558 = vmatprep.mubr.f32.mxu0 0.0
  %v1559 = vand.u32 %v1475, 4294901760
  %v1560 = vsub.f32 %v1475, %v1559
  %v1561 = vand.u32 %v1560, 4294901760
  %v1562 = vsub.f32 %v1560, %v1561
  %v1563 = vand.u32 %v1562, 4294901760
  %1564 = vmatmul.mubr.f32.gmra.mxu0 %v1563
  %v1565 = vpop.f32.mrf.mxu0
  %v1566 = vadd.f32 %v1469, %v1565
  %v1567 = vpop.f32.mrf.mxu0
  %1568 = vmatprep.mubr.f32.mxu0 0.0
  %v1569 = vand.u32 %v1478, 4294901760
  %v1570 = vsub.f32 %v1478, %v1569
  %v1571 = vand.u32 %v1570, 4294901760
  %v1572 = vsub.f32 %v1570, %v1571
  %v1573 = vand.u32 %v1572, 4294901760
  %1574 = vmatmul.mubr.f32.gmra.mxu0 %v1573
  %v1575 = vpop.f32.mrf.mxu0
  %v1576 = vadd.f32 %v1469, %v1575
  %v1577 = vpop.f32.mrf.mxu0
  %1578 = vmatprep.mubr.f32.mxu0 0.0
  %v1579 = vand.u32 %v1481, 4294901760
  %v1580 = vsub.f32 %v1481, %v1579
  %v1581 = vand.u32 %v1580, 4294901760
  %v1582 = vsub.f32 %v1580, %v1581
  %v1583 = vand.u32 %v1582, 4294901760
  %1584 = vmatmul.mubr.f32.gmra.mxu0 %v1583
  %v1585 = vpop.f32.mrf.mxu0
  %v1586 = vadd.f32 %v1469, %v1585
  %v1587 = vpop.f32.mrf.mxu0
  %1588 = vdwg.mxu0
  %1589 = vmatprep.subr.mxu0 0.0
  %1590 = vmatpush1.msra.mxu0 0.0
  %1591 = vmatprep.subr.mxu0 0.0
  %1592 = vmatpush1.msra.mxu0 0.0
  %1593 = vmatprep.subr.mxu0 0.0
  %1594 = vmatpush1.msra.mxu0 0.0
  %1595 = vmatprep.subr.mxu0 0.0
  %1596 = vmatpush1.msra.mxu0 0.0
  %1597 = vmatprep.subr.mxu0 0.0
  %1598 = vmatpush1.msra.mxu0 0.0
  %1599 = vmatprep.subr.mxu0 0.0
  %1600 = vmatpush1.msra.mxu0 0.0
  %1601 = vmatprep.subr.mxu0 0.0
  %1602 = vmatpush1.msra.mxu0 0.0
  %1603 = vmatprep.subr.mxu0 0.0
  %1604 = vmatpush1.msra.mxu0 0.0
  %1605 = vmatprep.subr.mxu0 0.0
  %1606 = vmatpush1.msra.mxu0 0.0
  %1607 = vmatprep.subr.mxu0 0.0
  %1608 = vmatpush1.msra.mxu0 0.0
  %1609 = vmatprep.subr.mxu0 0.0
  %1610 = vmatpush1.msra.mxu0 0.0
  %1611 = vmatprep.subr.mxu0 0.0
  %1612 = vmatpush1.msra.mxu0 0.0
  %1613 = vmatprep.subr.mxu0 0.0
  %1614 = vmatpush1.msra.mxu0 0.0
  %1615 = vmatprep.subr.mxu0 0.0
  %1616 = vmatpush1.msra.mxu0 0.0
  %1617 = vmatprep.subr.mxu0 0.0
  %1618 = vmatpush1.msra.mxu0 0.0
  %1619 = vmatprep.subr.mxu0 0.0
  %v1620 = vand.u32 %v1463, 4294901760
  %v1621 = vsub.f32 %v1463, %v1620
  %v1622 = vand.u32 %v1621, 4294901760
  %v1623 = vsub.f32 %v1621, %v1622
  %v1624 = vand.u32 %v1623, 4294901760
  %1625 = vmatpush1.msra.mxu0 %v1624
  %1626 = vmatprep.subr.mxu0 0.0
  %1627 = vmatpush2.msra.mxu0 0.0
  %1628 = vmatprep.subr.mxu0 0.0
  %1629 = vmatpush2.msra.mxu0 0.0
  %1630 = vmatprep.subr.mxu0 0.0
  %1631 = vmatpush2.msra.mxu0 0.0
  %1632 = vmatprep.subr.mxu0 0.0
  %1633 = vmatpush2.msra.mxu0 0.0
  %1634 = vmatprep.subr.mxu0 0.0
  %1635 = vmatpush2.msra.mxu0 0.0
  %1636 = vmatprep.subr.mxu0 0.0
  %1637 = vmatpush2.msra.mxu0 0.0
  %1638 = vmatprep.subr.mxu0 0.0
  %1639 = vmatpush2.msra.mxu0 0.0
  %1640 = vmatprep.subr.mxu0 0.0
  %1641 = vmatpush2.msra.mxu0 0.0
  %1642 = vmatprep.subr.mxu0 0.0
  %1643 = vmatpush2.msra.mxu0 0.0
  %1644 = vmatprep.subr.mxu0 0.0
  %1645 = vmatpush2.msra.mxu0 0.0
  %1646 = vmatprep.subr.mxu0 0.0
  %1647 = vmatpush2.msra.mxu0 0.0
  %1648 = vmatprep.subr.mxu0 0.0
  %1649 = vmatpush2.msra.mxu0 0.0
  %1650 = vmatprep.subr.mxu0 0.0
  %1651 = vmatpush2.msra.mxu0 0.0
  %1652 = vmatprep.subr.mxu0 0.0
  %1653 = vmatpush2.msra.mxu0 0.0
  %1654 = vmatprep.subr.mxu0 0.0
  %1655 = vmatpush2.msra.mxu0 0.0
  %1656 = vmatprep.subr.mxu0 0.0
  %1657 = vmatpush2.msra.mxu0 0.0
  %1658 = vmatprep.mubr.f32.mxu0 0.0
  %v1659 = vand.u32 %v1472, 4294901760
  %1660 = vmatmul.mubr.f32.gmra.mxu0 %v1659
  %v1661 = vpop.f32.mrf.mxu0
  %v1662 = vadd.f32 %v1556, %v1661
  %v1663 = vpop.f32.mrf.mxu0
  %1664 = vmatprep.mubr.f32.mxu0 0.0
  %v1665 = vand.u32 %v1475, 4294901760
  %1666 = vmatmul.mubr.f32.gmra.mxu0 %v1665
  %v1667 = vpop.f32.mrf.mxu0
  %v1668 = vadd.f32 %v1566, %v1667
  %v1669 = vpop.f32.mrf.mxu0
  %1670 = vmatprep.mubr.f32.mxu0 0.0
  %v1671 = vand.u32 %v1478, 4294901760
  %1672 = vmatmul.mubr.f32.gmra.mxu0 %v1671
  %v1673 = vpop.f32.mrf.mxu0
  %v1674 = vadd.f32 %v1576, %v1673
  %v1675 = vpop.f32.mrf.mxu0
  %1676 = vmatprep.mubr.f32.mxu0 0.0
  %v1677 = vand.u32 %v1481, 4294901760
  %1678 = vmatmul.mubr.f32.gmra.mxu0 %v1677
  %v1679 = vpop.f32.mrf.mxu0
  %v1680 = vadd.f32 %v1586, %v1679
  %v1681 = vpop.f32.mrf.mxu0
  %1682 = vdwg.mxu0
  %1683 = vmatprep.subr.mxu0 0.0
  %1684 = vmatpush1.msra.mxu0 0.0
  %1685 = vmatprep.subr.mxu0 0.0
  %1686 = vmatpush1.msra.mxu0 0.0
  %1687 = vmatprep.subr.mxu0 0.0
  %1688 = vmatpush1.msra.mxu0 0.0
  %1689 = vmatprep.subr.mxu0 0.0
  %1690 = vmatpush1.msra.mxu0 0.0
  %1691 = vmatprep.subr.mxu0 0.0
  %1692 = vmatpush1.msra.mxu0 0.0
  %1693 = vmatprep.subr.mxu0 0.0
  %1694 = vmatpush1.msra.mxu0 0.0
  %1695 = vmatprep.subr.mxu0 0.0
  %1696 = vmatpush1.msra.mxu0 0.0
  %1697 = vmatprep.subr.mxu0 0.0
  %1698 = vmatpush1.msra.mxu0 0.0
  %1699 = vmatprep.subr.mxu0 0.0
  %1700 = vmatpush1.msra.mxu0 0.0
  %1701 = vmatprep.subr.mxu0 0.0
  %1702 = vmatpush1.msra.mxu0 0.0
  %1703 = vmatprep.subr.mxu0 0.0
  %1704 = vmatpush1.msra.mxu0 0.0
  %1705 = vmatprep.subr.mxu0 0.0
  %1706 = vmatpush1.msra.mxu0 0.0
  %1707 = vmatprep.subr.mxu0 0.0
  %1708 = vmatpush1.msra.mxu0 0.0
  %1709 = vmatprep.subr.mxu0 0.0
  %1710 = vmatpush1.msra.mxu0 0.0
  %1711 = vmatprep.subr.mxu0 0.0
  %1712 = vmatpush1.msra.mxu0 0.0
  %1713 = vmatprep.subr.mxu0 0.0
  %v1714 = vand.u32 %v1463, 4294901760
  %v1715 = vsub.f32 %v1463, %v1714
  %1716 = vmatpush1.msra.mxu0 %v1715
  %1717 = vmatprep.subr.mxu0 0.0
  %1718 = vmatpush2.msra.mxu0 0.0
  %1719 = vmatprep.subr.mxu0 0.0
  %1720 = vmatpush2.msra.mxu0 0.0
  %1721 = vmatprep.subr.mxu0 0.0
  %1722 = vmatpush2.msra.mxu0 0.0
  %1723 = vmatprep.subr.mxu0 0.0
  %1724 = vmatpush2.msra.mxu0 0.0
  %1725 = vmatprep.subr.mxu0 0.0
  %1726 = vmatpush2.msra.mxu0 0.0
  %1727 = vmatprep.subr.mxu0 0.0
  %1728 = vmatpush2.msra.mxu0 0.0
  %1729 = vmatprep.subr.mxu0 0.0
  %1730 = vmatpush2.msra.mxu0 0.0
  %1731 = vmatprep.subr.mxu0 0.0
  %1732 = vmatpush2.msra.mxu0 0.0
  %1733 = vmatprep.subr.mxu0 0.0
  %1734 = vmatpush2.msra.mxu0 0.0
  %1735 = vmatprep.subr.mxu0 0.0
  %1736 = vmatpush2.msra.mxu0 0.0
  %1737 = vmatprep.subr.mxu0 0.0
  %1738 = vmatpush2.msra.mxu0 0.0
  %1739 = vmatprep.subr.mxu0 0.0
  %1740 = vmatpush2.msra.mxu0 0.0
  %1741 = vmatprep.subr.mxu0 0.0
  %1742 = vmatpush2.msra.mxu0 0.0
  %1743 = vmatprep.subr.mxu0 0.0
  %1744 = vmatpush2.msra.mxu0 0.0
  %1745 = vmatprep.subr.mxu0 0.0
  %1746 = vmatpush2.msra.mxu0 0.0
  %1747 = vmatprep.subr.mxu0 0.0
  %1748 = vmatpush2.msra.mxu0 0.0
  %1749 = vmatprep.mubr.f32.mxu0 0.0
  %v1750 = vand.u32 %v1472, 4294901760
  %v1751 = vsub.f32 %v1472, %v1750
  %1752 = vmatmul.mubr.f32.gmra.mxu0 %v1751
  %v1753 = vpop.f32.mrf.mxu0
  %v1754 = vadd.f32 %v1662, %v1753
  %v1755 = vpop.f32.mrf.mxu0
  %1756 = vmatprep.mubr.f32.mxu0 0.0
  %v1757 = vand.u32 %v1475, 4294901760
  %v1758 = vsub.f32 %v1475, %v1757
  %1759 = vmatmul.mubr.f32.gmra.mxu0 %v1758
  %v1760 = vpop.f32.mrf.mxu0
  %v1761 = vadd.f32 %v1668, %v1760
  %v1762 = vpop.f32.mrf.mxu0
  %1763 = vmatprep.mubr.f32.mxu0 0.0
  %v1764 = vand.u32 %v1478, 4294901760
  %v1765 = vsub.f32 %v1478, %v1764
  %1766 = vmatmul.mubr.f32.gmra.mxu0 %v1765
  %v1767 = vpop.f32.mrf.mxu0
  %v1768 = vadd.f32 %v1674, %v1767
  %v1769 = vpop.f32.mrf.mxu0
  %1770 = vmatprep.mubr.f32.mxu0 0.0
  %v1771 = vand.u32 %v1481, 4294901760
  %v1772 = vsub.f32 %v1481, %v1771
  %1773 = vmatmul.mubr.f32.gmra.mxu0 %v1772
  %v1774 = vpop.f32.mrf.mxu0
  %v1775 = vadd.f32 %v1680, %v1774
  %v1776 = vpop.f32.mrf.mxu0
  %1777 = vdwg.mxu0
  %1778 = vmatprep.subr.mxu0 0.0
  %1779 = vmatpush1.msra.mxu0 0.0
  %1780 = vmatprep.subr.mxu0 0.0
  %1781 = vmatpush1.msra.mxu0 0.0
  %1782 = vmatprep.subr.mxu0 0.0
  %1783 = vmatpush1.msra.mxu0 0.0
  %1784 = vmatprep.subr.mxu0 0.0
  %1785 = vmatpush1.msra.mxu0 0.0
  %1786 = vmatprep.subr.mxu0 0.0
  %1787 = vmatpush1.msra.mxu0 0.0
  %1788 = vmatprep.subr.mxu0 0.0
  %1789 = vmatpush1.msra.mxu0 0.0
  %1790 = vmatprep.subr.mxu0 0.0
  %1791 = vmatpush1.msra.mxu0 0.0
  %1792 = vmatprep.subr.mxu0 0.0
  %1793 = vmatpush1.msra.mxu0 0.0
  %1794 = vmatprep.subr.mxu0 0.0
  %1795 = vmatpush1.msra.mxu0 0.0
  %1796 = vmatprep.subr.mxu0 0.0
  %1797 = vmatpush1.msra.mxu0 0.0
  %1798 = vmatprep.subr.mxu0 0.0
  %1799 = vmatpush1.msra.mxu0 0.0
  %1800 = vmatprep.subr.mxu0 0.0
  %1801 = vmatpush1.msra.mxu0 0.0
  %1802 = vmatprep.subr.mxu0 0.0
  %1803 = vmatpush1.msra.mxu0 0.0
  %1804 = vmatprep.subr.mxu0 0.0
  %1805 = vmatpush1.msra.mxu0 0.0
  %1806 = vmatprep.subr.mxu0 0.0
  %1807 = vmatpush1.msra.mxu0 0.0
  %1808 = vmatprep.subr.mxu0 0.0
  %v1809 = vand.u32 %v1463, 4294901760
  %1810 = vmatpush1.msra.mxu0 %v1809
  %1811 = vmatprep.subr.mxu0 0.0
  %1812 = vmatpush2.msra.mxu0 0.0
  %1813 = vmatprep.subr.mxu0 0.0
  %1814 = vmatpush2.msra.mxu0 0.0
  %1815 = vmatprep.subr.mxu0 0.0
  %1816 = vmatpush2.msra.mxu0 0.0
  %1817 = vmatprep.subr.mxu0 0.0
  %1818 = vmatpush2.msra.mxu0 0.0
  %1819 = vmatprep.subr.mxu0 0.0
  %1820 = vmatpush2.msra.mxu0 0.0
  %1821 = vmatprep.subr.mxu0 0.0
  %1822 = vmatpush2.msra.mxu0 0.0
  %1823 = vmatprep.subr.mxu0 0.0
  %1824 = vmatpush2.msra.mxu0 0.0
  %1825 = vmatprep.subr.mxu0 0.0
  %1826 = vmatpush2.msra.mxu0 0.0
  %1827 = vmatprep.subr.mxu0 0.0
  %1828 = vmatpush2.msra.mxu0 0.0
  %1829 = vmatprep.subr.mxu0 0.0
  %1830 = vmatpush2.msra.mxu0 0.0
  %1831 = vmatprep.subr.mxu0 0.0
  %1832 = vmatpush2.msra.mxu0 0.0
  %1833 = vmatprep.subr.mxu0 0.0
  %1834 = vmatpush2.msra.mxu0 0.0
  %1835 = vmatprep.subr.mxu0 0.0
  %1836 = vmatpush2.msra.mxu0 0.0
  %1837 = vmatprep.subr.mxu0 0.0
  %1838 = vmatpush2.msra.mxu0 0.0
  %1839 = vmatprep.subr.mxu0 0.0
  %1840 = vmatpush2.msra.mxu0 0.0
  %1841 = vmatprep.subr.mxu0 0.0
  %1842 = vmatpush2.msra.mxu0 0.0
  %1843 = vmatprep.mubr.f32.mxu0 0.0
  %v1844 = vand.u32 %v1472, 4294901760
  %v1845 = vsub.f32 %v1472, %v1844
  %v1846 = vand.u32 %v1845, 4294901760
  %1847 = vmatmul.mubr.f32.gmra.mxu0 %v1846
  %v1848 = vpop.f32.mrf.mxu0
  %v1849 = vadd.f32 %v1754, %v1848
  %v1850 = vpop.f32.mrf.mxu0
  %1851 = vmatprep.mubr.f32.mxu0 0.0
  %v1852 = vand.u32 %v1475, 4294901760
  %v1853 = vsub.f32 %v1475, %v1852
  %v1854 = vand.u32 %v1853, 4294901760
  %1855 = vmatmul.mubr.f32.gmra.mxu0 %v1854
  %v1856 = vpop.f32.mrf.mxu0
  %v1857 = vadd.f32 %v1761, %v1856
  %v1858 = vpop.f32.mrf.mxu0
  %1859 = vmatprep.mubr.f32.mxu0 0.0
  %v1860 = vand.u32 %v1478, 4294901760
  %v1861 = vsub.f32 %v1478, %v1860
  %v1862 = vand.u32 %v1861, 4294901760
  %1863 = vmatmul.mubr.f32.gmra.mxu0 %v1862
  %v1864 = vpop.f32.mrf.mxu0
  %v1865 = vadd.f32 %v1768, %v1864
  %v1866 = vpop.f32.mrf.mxu0
  %1867 = vmatprep.mubr.f32.mxu0 0.0
  %v1868 = vand.u32 %v1481, 4294901760
  %v1869 = vsub.f32 %v1481, %v1868
  %v1870 = vand.u32 %v1869, 4294901760
  %1871 = vmatmul.mubr.f32.gmra.mxu0 %v1870
  %v1872 = vpop.f32.mrf.mxu0
  %v1873 = vadd.f32 %v1775, %v1872
  %v1874 = vpop.f32.mrf.mxu0
  %1875 = vdwg.mxu0
  %1876 = vmatprep.subr.mxu0 0.0
  %1877 = vmatpush1.msra.mxu0 0.0
  %1878 = vmatprep.subr.mxu0 0.0
  %1879 = vmatpush1.msra.mxu0 0.0
  %1880 = vmatprep.subr.mxu0 0.0
  %1881 = vmatpush1.msra.mxu0 0.0
  %1882 = vmatprep.subr.mxu0 0.0
  %1883 = vmatpush1.msra.mxu0 0.0
  %1884 = vmatprep.subr.mxu0 0.0
  %1885 = vmatpush1.msra.mxu0 0.0
  %1886 = vmatprep.subr.mxu0 0.0
  %1887 = vmatpush1.msra.mxu0 0.0
  %1888 = vmatprep.subr.mxu0 0.0
  %1889 = vmatpush1.msra.mxu0 0.0
  %1890 = vmatprep.subr.mxu0 0.0
  %1891 = vmatpush1.msra.mxu0 0.0
  %1892 = vmatprep.subr.mxu0 0.0
  %1893 = vmatpush1.msra.mxu0 0.0
  %1894 = vmatprep.subr.mxu0 0.0
  %1895 = vmatpush1.msra.mxu0 0.0
  %1896 = vmatprep.subr.mxu0 0.0
  %1897 = vmatpush1.msra.mxu0 0.0
  %1898 = vmatprep.subr.mxu0 0.0
  %1899 = vmatpush1.msra.mxu0 0.0
  %1900 = vmatprep.subr.mxu0 0.0
  %1901 = vmatpush1.msra.mxu0 0.0
  %1902 = vmatprep.subr.mxu0 0.0
  %1903 = vmatpush1.msra.mxu0 0.0
  %1904 = vmatprep.subr.mxu0 0.0
  %1905 = vmatpush1.msra.mxu0 0.0
  %1906 = vmatprep.subr.mxu0 0.0
  %v1907 = vand.u32 %v1463, 4294901760
  %v1908 = vsub.f32 %v1463, %v1907
  %v1909 = vand.u32 %v1908, 4294901760
  %1910 = vmatpush1.msra.mxu0 %v1909
  %1911 = vmatprep.subr.mxu0 0.0
  %1912 = vmatpush2.msra.mxu0 0.0
  %1913 = vmatprep.subr.mxu0 0.0
  %1914 = vmatpush2.msra.mxu0 0.0
  %1915 = vmatprep.subr.mxu0 0.0
  %1916 = vmatpush2.msra.mxu0 0.0
  %1917 = vmatprep.subr.mxu0 0.0
  %1918 = vmatpush2.msra.mxu0 0.0
  %1919 = vmatprep.subr.mxu0 0.0
  %1920 = vmatpush2.msra.mxu0 0.0
  %1921 = vmatprep.subr.mxu0 0.0
  %1922 = vmatpush2.msra.mxu0 0.0
  %1923 = vmatprep.subr.mxu0 0.0
  %1924 = vmatpush2.msra.mxu0 0.0
  %1925 = vmatprep.subr.mxu0 0.0
  %1926 = vmatpush2.msra.mxu0 0.0
  %1927 = vmatprep.subr.mxu0 0.0
  %1928 = vmatpush2.msra.mxu0 0.0
  %1929 = vmatprep.subr.mxu0 0.0
  %1930 = vmatpush2.msra.mxu0 0.0
  %1931 = vmatprep.subr.mxu0 0.0
  %1932 = vmatpush2.msra.mxu0 0.0
  %1933 = vmatprep.subr.mxu0 0.0
  %1934 = vmatpush2.msra.mxu0 0.0
  %1935 = vmatprep.subr.mxu0 0.0
  %1936 = vmatpush2.msra.mxu0 0.0
  %1937 = vmatprep.subr.mxu0 0.0
  %1938 = vmatpush2.msra.mxu0 0.0
  %1939 = vmatprep.subr.mxu0 0.0
  %1940 = vmatpush2.msra.mxu0 0.0
  %1941 = vmatprep.subr.mxu0 0.0
  %1942 = vmatpush2.msra.mxu0 0.0
  %1943 = vmatprep.mubr.f32.mxu0 0.0
  %v1944 = vand.u32 %v1472, 4294901760
  %1945 = vmatmul.mubr.f32.gmra.mxu0 %v1944
  %v1946 = vpop.f32.mrf.mxu0
  %v1947 = vadd.f32 %v1849, %v1946
  %v1948 = vpop.f32.mrf.mxu0
  %1949 = vmatprep.mubr.f32.mxu0 0.0
  %v1950 = vand.u32 %v1475, 4294901760
  %1951 = vmatmul.mubr.f32.gmra.mxu0 %v1950
  %v1952 = vpop.f32.mrf.mxu0
  %v1953 = vadd.f32 %v1857, %v1952
  %v1954 = vpop.f32.mrf.mxu0
  %1955 = vmatprep.mubr.f32.mxu0 0.0
  %v1956 = vand.u32 %v1478, 4294901760
  %1957 = vmatmul.mubr.f32.gmra.mxu0 %v1956
  %v1958 = vpop.f32.mrf.mxu0
  %v1959 = vadd.f32 %v1865, %v1958
  %v1960 = vpop.f32.mrf.mxu0
  %1961 = vmatprep.mubr.f32.mxu0 0.0
  %v1962 = vand.u32 %v1481, 4294901760
  %1963 = vmatmul.mubr.f32.gmra.mxu0 %v1962
  %v1964 = vpop.f32.mrf.mxu0
  %v1965 = vadd.f32 %v1873, %v1964
  %v1966 = vpop.f32.mrf.mxu0
  %1967 = vdwg.mxu0
  %1968 = vmatprep.subr.mxu0 0.0
  %1969 = vmatpush1.msra.mxu0 0.0
  %1970 = vmatprep.subr.mxu0 0.0
  %1971 = vmatpush1.msra.mxu0 0.0
  %1972 = vmatprep.subr.mxu0 0.0
  %1973 = vmatpush1.msra.mxu0 0.0
  %1974 = vmatprep.subr.mxu0 0.0
  %1975 = vmatpush1.msra.mxu0 0.0
  %1976 = vmatprep.subr.mxu0 0.0
  %1977 = vmatpush1.msra.mxu0 0.0
  %1978 = vmatprep.subr.mxu0 0.0
  %1979 = vmatpush1.msra.mxu0 0.0
  %1980 = vmatprep.subr.mxu0 0.0
  %1981 = vmatpush1.msra.mxu0 0.0
  %1982 = vmatprep.subr.mxu0 0.0
  %1983 = vmatpush1.msra.mxu0 0.0
  %1984 = vmatprep.subr.mxu0 0.0
  %1985 = vmatpush1.msra.mxu0 0.0
  %1986 = vmatprep.subr.mxu0 0.0
  %1987 = vmatpush1.msra.mxu0 0.0
  %1988 = vmatprep.subr.mxu0 0.0
  %1989 = vmatpush1.msra.mxu0 0.0
  %1990 = vmatprep.subr.mxu0 0.0
  %1991 = vmatpush1.msra.mxu0 0.0
  %1992 = vmatprep.subr.mxu0 0.0
  %1993 = vmatpush1.msra.mxu0 0.0
  %1994 = vmatprep.subr.mxu0 0.0
  %1995 = vmatpush1.msra.mxu0 0.0
  %1996 = vmatprep.subr.mxu0 0.0
  %1997 = vmatpush1.msra.mxu0 0.0
  %1998 = vmatprep.subr.mxu0 0.0
  %v1999 = vand.u32 %v1463, 4294901760
  %2000 = vmatpush1.msra.mxu0 %v1999
  %2001 = vmatprep.subr.mxu0 0.0
  %2002 = vmatpush2.msra.mxu0 0.0
  %2003 = vmatprep.subr.mxu0 0.0
  %2004 = vmatpush2.msra.mxu0 0.0
  %2005 = vmatprep.subr.mxu0 0.0
  %2006 = vmatpush2.msra.mxu0 0.0
  %2007 = vmatprep.subr.mxu0 0.0
  %2008 = vmatpush2.msra.mxu0 0.0
  %2009 = vmatprep.subr.mxu0 0.0
  %2010 = vmatpush2.msra.mxu0 0.0
  %2011 = vmatprep.subr.mxu0 0.0
  %2012 = vmatpush2.msra.mxu0 0.0
  %2013 = vmatprep.subr.mxu0 0.0
  %2014 = vmatpush2.msra.mxu0 0.0
  %2015 = vmatprep.subr.mxu0 0.0
  %2016 = vmatpush2.msra.mxu0 0.0
  %2017 = vmatprep.subr.mxu0 0.0
  %2018 = vmatpush2.msra.mxu0 0.0
  %2019 = vmatprep.subr.mxu0 0.0
  %2020 = vmatpush2.msra.mxu0 0.0
  %2021 = vmatprep.subr.mxu0 0.0
  %2022 = vmatpush2.msra.mxu0 0.0
  %2023 = vmatprep.subr.mxu0 0.0
  %2024 = vmatpush2.msra.mxu0 0.0
  %2025 = vmatprep.subr.mxu0 0.0
  %2026 = vmatpush2.msra.mxu0 0.0
  %2027 = vmatprep.subr.mxu0 0.0
  %2028 = vmatpush2.msra.mxu0 0.0
  %2029 = vmatprep.subr.mxu0 0.0
  %2030 = vmatpush2.msra.mxu0 0.0
  %2031 = vmatprep.subr.mxu0 0.0
  %2032 = vmatpush2.msra.mxu0 0.0
  %2033 = vmatprep.mubr.f32.mxu0 0.0
  %v2034 = vand.u32 %v1472, 4294901760
  %2035 = vmatmul.mubr.f32.gmra.mxu0 %v2034
  %v2036 = vpop.f32.mrf.mxu0
  %v2037 = vadd.f32 %v1947, %v2036
  %v2038 = vpop.f32.mrf.mxu0
  %2039 = vmatprep.mubr.f32.mxu0 0.0
  %v2040 = vand.u32 %v1475, 4294901760
  %2041 = vmatmul.mubr.f32.gmra.mxu0 %v2040
  %v2042 = vpop.f32.mrf.mxu0
  %v2043 = vadd.f32 %v1953, %v2042
  %v2044 = vpop.f32.mrf.mxu0
  %2045 = vmatprep.mubr.f32.mxu0 0.0
  %v2046 = vand.u32 %v1478, 4294901760
  %2047 = vmatmul.mubr.f32.gmra.mxu0 %v2046
  %v2048 = vpop.f32.mrf.mxu0
  %v2049 = vadd.f32 %v1959, %v2048
  %v2050 = vpop.f32.mrf.mxu0
  %2051 = vmatprep.mubr.f32.mxu0 0.0
  %v2052 = vand.u32 %v1481, 4294901760
  %2053 = vmatmul.mubr.f32.gmra.mxu0 %v2052
  %v2054 = vpop.f32.mrf.mxu0
  %v2055 = vadd.f32 %v1965, %v2054
  %v2056 = vpop.f32.mrf.mxu0
  %2057 = vdwg.mxu0
  %v2058 = vxor.u32 %v2037, 2147483648
  %v2059 = vxor.u32 %v2043, 2147483648
  %v2060 = vxor.u32 %v2049, 2147483648
  %v2061 = vxor.u32 %v2055, 2147483648
  %v2062 = vmul.f32 %v2058, 1.442695
  %v2063 = vpow.pop %v2062
  %v2064 = vmul.f32 %v2059, 1.442695
  %v2065 = vpow.pop %v2064
  %v2066 = vmul.f32 %v2060, 1.442695
  %v2067 = vpow.pop %v2066
  %v2068 = vmul.f32 %v2061, 1.442695
  %v2069 = vpow.pop %v2068
  %v2070 = vadd.f32 %v2063, 1.0
  %v2071 = vadd.f32 %v2065, 1.0
  %v2072 = vadd.f32 %v2067, 1.0
  %v2073 = vadd.f32 %v2069, 1.0
  %v2074 = vrcp.pop %v2070
  %v2075 = vmul.f32 1.0, %v2074
  %v2076 = vrcp.pop %v2071
  %v2077 = vmul.f32 1.0, %v2076
  %v2078 = vrcp.pop %v2072
  %v2079 = vmul.f32 1.0, %v2078
  %v2080 = vrcp.pop %v2073
  %v2081 = vmul.f32 1.0, %v2080
  %2082 = vst.msk [vmem:[%s10] sm:$0xff] %vm52, %v2075
  %2083 = vst.msk [vmem:[%s10 + $0x8] sm:$0xff] %vm52, %v2077
  %2084 = vst.msk [vmem:[%s10 + $0x10] sm:$0xff] %vm52, %v2079
  %2085 = vst.msk [vmem:[%s10 + $0x18] sm:$0xff] %vm52, %v2081
  %v2086 = vld [vmem:[%s8] sm:$0xff]
  %v2087 = vld [vmem:[%s9] sm:$0x1]
  %v2089 = vlaneseq
  %v2090 = vshrl.u32 %v2089, 7
  %v2091 = vsub.s32 0, %v2090
  %v2092 = vrot.slane %v2087, %v2091
  %v2095 = vsel %vm1309, %v1459, 0
  %v2098 = vsel %vm1309, %v1460, 0
  %v2101 = vsel %vm1309, %v1461, 0
  %v2104 = vsel %vm1309, %v1462, 0
  %2106 = vmatprep.subr.mxu0 0.0
  %2107 = vmatpush1.msra.mxu0 0.0
  %2108 = vmatprep.subr.mxu0 0.0
  %2109 = vmatpush1.msra.mxu0 0.0
  %2110 = vmatprep.subr.mxu0 0.0
  %2111 = vmatpush1.msra.mxu0 0.0
  %2112 = vmatprep.subr.mxu0 0.0
  %2113 = vmatpush1.msra.mxu0 0.0
  %2114 = vmatprep.subr.mxu0 0.0
  %2115 = vmatpush1.msra.mxu0 0.0
  %2116 = vmatprep.subr.mxu0 0.0
  %2117 = vmatpush1.msra.mxu0 0.0
  %2118 = vmatprep.subr.mxu0 0.0
  %2119 = vmatpush1.msra.mxu0 0.0
  %2120 = vmatprep.subr.mxu0 0.0
  %2121 = vmatpush1.msra.mxu0 0.0
  %2122 = vmatprep.subr.mxu0 0.0
  %2123 = vmatpush1.msra.mxu0 0.0
  %2124 = vmatprep.subr.mxu0 0.0
  %2125 = vmatpush1.msra.mxu0 0.0
  %2126 = vmatprep.subr.mxu0 0.0
  %2127 = vmatpush1.msra.mxu0 0.0
  %2128 = vmatprep.subr.mxu0 0.0
  %2129 = vmatpush1.msra.mxu0 0.0
  %2130 = vmatprep.subr.mxu0 0.0
  %2131 = vmatpush1.msra.mxu0 0.0
  %2132 = vmatprep.subr.mxu0 0.0
  %2133 = vmatpush1.msra.mxu0 0.0
  %2134 = vmatprep.subr.mxu0 0.0
  %2135 = vmatpush1.msra.mxu0 0.0
  %2136 = vmatprep.subr.mxu0 0.0
  %v2137 = vand.u32 %v2086, 4294901760
  %2138 = vmatpush1.msra.mxu0 %v2137
  %2139 = vmatprep.subr.mxu0 0.0
  %2140 = vmatpush2.msra.mxu0 0.0
  %2141 = vmatprep.subr.mxu0 0.0
  %2142 = vmatpush2.msra.mxu0 0.0
  %2143 = vmatprep.subr.mxu0 0.0
  %2144 = vmatpush2.msra.mxu0 0.0
  %2145 = vmatprep.subr.mxu0 0.0
  %2146 = vmatpush2.msra.mxu0 0.0
  %2147 = vmatprep.subr.mxu0 0.0
  %2148 = vmatpush2.msra.mxu0 0.0
  %2149 = vmatprep.subr.mxu0 0.0
  %2150 = vmatpush2.msra.mxu0 0.0
  %2151 = vmatprep.subr.mxu0 0.0
  %2152 = vmatpush2.msra.mxu0 0.0
  %2153 = vmatprep.subr.mxu0 0.0
  %2154 = vmatpush2.msra.mxu0 0.0
  %2155 = vmatprep.subr.mxu0 0.0
  %2156 = vmatpush2.msra.mxu0 0.0
  %2157 = vmatprep.subr.mxu0 0.0
  %2158 = vmatpush2.msra.mxu0 0.0
  %2159 = vmatprep.subr.mxu0 0.0
  %2160 = vmatpush2.msra.mxu0 0.0
  %2161 = vmatprep.subr.mxu0 0.0
  %2162 = vmatpush2.msra.mxu0 0.0
  %2163 = vmatprep.subr.mxu0 0.0
  %2164 = vmatpush2.msra.mxu0 0.0
  %2165 = vmatprep.subr.mxu0 0.0
  %2166 = vmatpush2.msra.mxu0 0.0
  %2167 = vmatprep.subr.mxu0 0.0
  %2168 = vmatpush2.msra.mxu0 0.0
  %2169 = vmatprep.subr.mxu0 0.0
  %2170 = vmatpush2.msra.mxu0 0.0
  %2171 = vmatprep.mubr.f32.mxu0 0.0
  %v2172 = vand.u32 %v2095, 4294901760
  %v2173 = vsub.f32 %v2095, %v2172
  %v2174 = vand.u32 %v2173, 4294901760
  %v2175 = vsub.f32 %v2173, %v2174
  %v2176 = vand.u32 %v2175, 4294901760
  %2177 = vmatmul.mubr.f32.gmra.mxu0 %v2176
  %v2178 = vpop.f32.mrf.mxu0
  %v2179 = vadd.f32 %v2092, %v2178
  %v2180 = vpop.f32.mrf.mxu0
  %2181 = vmatprep.mubr.f32.mxu0 0.0
  %v2182 = vand.u32 %v2098, 4294901760
  %v2183 = vsub.f32 %v2098, %v2182
  %v2184 = vand.u32 %v2183, 4294901760
  %v2185 = vsub.f32 %v2183, %v2184
  %v2186 = vand.u32 %v2185, 4294901760
  %2187 = vmatmul.mubr.f32.gmra.mxu0 %v2186
  %v2188 = vpop.f32.mrf.mxu0
  %v2189 = vadd.f32 %v2092, %v2188
  %v2190 = vpop.f32.mrf.mxu0
  %2191 = vmatprep.mubr.f32.mxu0 0.0
  %v2192 = vand.u32 %v2101, 4294901760
  %v2193 = vsub.f32 %v2101, %v2192
  %v2194 = vand.u32 %v2193, 4294901760
  %v2195 = vsub.f32 %v2193, %v2194
  %v2196 = vand.u32 %v2195, 4294901760
  %2197 = vmatmul.mubr.f32.gmra.mxu0 %v2196
  %v2198 = vpop.f32.mrf.mxu0
  %v2199 = vadd.f32 %v2092, %v2198
  %v2200 = vpop.f32.mrf.mxu0
  %2201 = vmatprep.mubr.f32.mxu0 0.0
  %v2202 = vand.u32 %v2104, 4294901760
  %v2203 = vsub.f32 %v2104, %v2202
  %v2204 = vand.u32 %v2203, 4294901760
  %v2205 = vsub.f32 %v2203, %v2204
  %v2206 = vand.u32 %v2205, 4294901760
  %2207 = vmatmul.mubr.f32.gmra.mxu0 %v2206
  %v2208 = vpop.f32.mrf.mxu0
  %v2209 = vadd.f32 %v2092, %v2208
  %v2210 = vpop.f32.mrf.mxu0
  %2211 = vdwg.mxu0
  %2212 = vmatprep.subr.mxu0 0.0
  %2213 = vmatpush1.msra.mxu0 0.0
  %2214 = vmatprep.subr.mxu0 0.0
  %2215 = vmatpush1.msra.mxu0 0.0
  %2216 = vmatprep.subr.mxu0 0.0
  %2217 = vmatpush1.msra.mxu0 0.0
  %2218 = vmatprep.subr.mxu0 0.0
  %2219 = vmatpush1.msra.mxu0 0.0
  %2220 = vmatprep.subr.mxu0 0.0
  %2221 = vmatpush1.msra.mxu0 0.0
  %2222 = vmatprep.subr.mxu0 0.0
  %2223 = vmatpush1.msra.mxu0 0.0
  %2224 = vmatprep.subr.mxu0 0.0
  %2225 = vmatpush1.msra.mxu0 0.0
  %2226 = vmatprep.subr.mxu0 0.0
  %2227 = vmatpush1.msra.mxu0 0.0
  %2228 = vmatprep.subr.mxu0 0.0
  %2229 = vmatpush1.msra.mxu0 0.0
  %2230 = vmatprep.subr.mxu0 0.0
  %2231 = vmatpush1.msra.mxu0 0.0
  %2232 = vmatprep.subr.mxu0 0.0
  %2233 = vmatpush1.msra.mxu0 0.0
  %2234 = vmatprep.subr.mxu0 0.0
  %2235 = vmatpush1.msra.mxu0 0.0
  %2236 = vmatprep.subr.mxu0 0.0
  %2237 = vmatpush1.msra.mxu0 0.0
  %2238 = vmatprep.subr.mxu0 0.0
  %2239 = vmatpush1.msra.mxu0 0.0
  %2240 = vmatprep.subr.mxu0 0.0
  %2241 = vmatpush1.msra.mxu0 0.0
  %2242 = vmatprep.subr.mxu0 0.0
  %v2243 = vand.u32 %v2086, 4294901760
  %v2244 = vsub.f32 %v2086, %v2243
  %v2245 = vand.u32 %v2244, 4294901760
  %v2246 = vsub.f32 %v2244, %v2245
  %v2247 = vand.u32 %v2246, 4294901760
  %2248 = vmatpush1.msra.mxu0 %v2247
  %2249 = vmatprep.subr.mxu0 0.0
  %2250 = vmatpush2.msra.mxu0 0.0
  %2251 = vmatprep.subr.mxu0 0.0
  %2252 = vmatpush2.msra.mxu0 0.0
  %2253 = vmatprep.subr.mxu0 0.0
  %2254 = vmatpush2.msra.mxu0 0.0
  %2255 = vmatprep.subr.mxu0 0.0
  %2256 = vmatpush2.msra.mxu0 0.0
  %2257 = vmatprep.subr.mxu0 0.0
  %2258 = vmatpush2.msra.mxu0 0.0
  %2259 = vmatprep.subr.mxu0 0.0
  %2260 = vmatpush2.msra.mxu0 0.0
  %2261 = vmatprep.subr.mxu0 0.0
  %2262 = vmatpush2.msra.mxu0 0.0
  %2263 = vmatprep.subr.mxu0 0.0
  %2264 = vmatpush2.msra.mxu0 0.0
  %2265 = vmatprep.subr.mxu0 0.0
  %2266 = vmatpush2.msra.mxu0 0.0
  %2267 = vmatprep.subr.mxu0 0.0
  %2268 = vmatpush2.msra.mxu0 0.0
  %2269 = vmatprep.subr.mxu0 0.0
  %2270 = vmatpush2.msra.mxu0 0.0
  %2271 = vmatprep.subr.mxu0 0.0
  %2272 = vmatpush2.msra.mxu0 0.0
  %2273 = vmatprep.subr.mxu0 0.0
  %2274 = vmatpush2.msra.mxu0 0.0
  %2275 = vmatprep.subr.mxu0 0.0
  %2276 = vmatpush2.msra.mxu0 0.0
  %2277 = vmatprep.subr.mxu0 0.0
  %2278 = vmatpush2.msra.mxu0 0.0
  %2279 = vmatprep.subr.mxu0 0.0
  %2280 = vmatpush2.msra.mxu0 0.0
  %2281 = vmatprep.mubr.f32.mxu0 0.0
  %v2282 = vand.u32 %v2095, 4294901760
  %2283 = vmatmul.mubr.f32.gmra.mxu0 %v2282
  %v2284 = vpop.f32.mrf.mxu0
  %v2285 = vadd.f32 %v2179, %v2284
  %v2286 = vpop.f32.mrf.mxu0
  %2287 = vmatprep.mubr.f32.mxu0 0.0
  %v2288 = vand.u32 %v2098, 4294901760
  %2289 = vmatmul.mubr.f32.gmra.mxu0 %v2288
  %v2290 = vpop.f32.mrf.mxu0
  %v2291 = vadd.f32 %v2189, %v2290
  %v2292 = vpop.f32.mrf.mxu0
  %2293 = vmatprep.mubr.f32.mxu0 0.0
  %v2294 = vand.u32 %v2101, 4294901760
  %2295 = vmatmul.mubr.f32.gmra.mxu0 %v2294
  %v2296 = vpop.f32.mrf.mxu0
  %v2297 = vadd.f32 %v2199, %v2296
  %v2298 = vpop.f32.mrf.mxu0
  %2299 = vmatprep.mubr.f32.mxu0 0.0
  %v2300 = vand.u32 %v2104, 4294901760
  %2301 = vmatmul.mubr.f32.gmra.mxu0 %v2300
  %v2302 = vpop.f32.mrf.mxu0
  %v2303 = vadd.f32 %v2209, %v2302
  %v2304 = vpop.f32.mrf.mxu0
  %2305 = vdwg.mxu0
  %2306 = vmatprep.subr.mxu0 0.0
  %2307 = vmatpush1.msra.mxu0 0.0
  %2308 = vmatprep.subr.mxu0 0.0
  %2309 = vmatpush1.msra.mxu0 0.0
  %2310 = vmatprep.subr.mxu0 0.0
  %2311 = vmatpush1.msra.mxu0 0.0
  %2312 = vmatprep.subr.mxu0 0.0
  %2313 = vmatpush1.msra.mxu0 0.0
  %2314 = vmatprep.subr.mxu0 0.0
  %2315 = vmatpush1.msra.mxu0 0.0
  %2316 = vmatprep.subr.mxu0 0.0
  %2317 = vmatpush1.msra.mxu0 0.0
  %2318 = vmatprep.subr.mxu0 0.0
  %2319 = vmatpush1.msra.mxu0 0.0
  %2320 = vmatprep.subr.mxu0 0.0
  %2321 = vmatpush1.msra.mxu0 0.0
  %2322 = vmatprep.subr.mxu0 0.0
  %2323 = vmatpush1.msra.mxu0 0.0
  %2324 = vmatprep.subr.mxu0 0.0
  %2325 = vmatpush1.msra.mxu0 0.0
  %2326 = vmatprep.subr.mxu0 0.0
  %2327 = vmatpush1.msra.mxu0 0.0
  %2328 = vmatprep.subr.mxu0 0.0
  %2329 = vmatpush1.msra.mxu0 0.0
  %2330 = vmatprep.subr.mxu0 0.0
  %2331 = vmatpush1.msra.mxu0 0.0
  %2332 = vmatprep.subr.mxu0 0.0
  %2333 = vmatpush1.msra.mxu0 0.0
  %2334 = vmatprep.subr.mxu0 0.0
  %2335 = vmatpush1.msra.mxu0 0.0
  %2336 = vmatprep.subr.mxu0 0.0
  %v2337 = vand.u32 %v2086, 4294901760
  %v2338 = vsub.f32 %v2086, %v2337
  %2339 = vmatpush1.msra.mxu0 %v2338
  %2340 = vmatprep.subr.mxu0 0.0
  %2341 = vmatpush2.msra.mxu0 0.0
  %2342 = vmatprep.subr.mxu0 0.0
  %2343 = vmatpush2.msra.mxu0 0.0
  %2344 = vmatprep.subr.mxu0 0.0
  %2345 = vmatpush2.msra.mxu0 0.0
  %2346 = vmatprep.subr.mxu0 0.0
  %2347 = vmatpush2.msra.mxu0 0.0
  %2348 = vmatprep.subr.mxu0 0.0
  %2349 = vmatpush2.msra.mxu0 0.0
  %2350 = vmatprep.subr.mxu0 0.0
  %2351 = vmatpush2.msra.mxu0 0.0
  %2352 = vmatprep.subr.mxu0 0.0
  %2353 = vmatpush2.msra.mxu0 0.0
  %2354 = vmatprep.subr.mxu0 0.0
  %2355 = vmatpush2.msra.mxu0 0.0
  %2356 = vmatprep.subr.mxu0 0.0
  %2357 = vmatpush2.msra.mxu0 0.0
  %2358 = vmatprep.subr.mxu0 0.0
  %2359 = vmatpush2.msra.mxu0 0.0
  %2360 = vmatprep.subr.mxu0 0.0
  %2361 = vmatpush2.msra.mxu0 0.0
  %2362 = vmatprep.subr.mxu0 0.0
  %2363 = vmatpush2.msra.mxu0 0.0
  %2364 = vmatprep.subr.mxu0 0.0
  %2365 = vmatpush2.msra.mxu0 0.0
  %2366 = vmatprep.subr.mxu0 0.0
  %2367 = vmatpush2.msra.mxu0 0.0
  %2368 = vmatprep.subr.mxu0 0.0
  %2369 = vmatpush2.msra.mxu0 0.0
  %2370 = vmatprep.subr.mxu0 0.0
  %2371 = vmatpush2.msra.mxu0 0.0
  %2372 = vmatprep.mubr.f32.mxu0 0.0
  %v2373 = vand.u32 %v2095, 4294901760
  %v2374 = vsub.f32 %v2095, %v2373
  %2375 = vmatmul.mubr.f32.gmra.mxu0 %v2374
  %v2376 = vpop.f32.mrf.mxu0
  %v2377 = vadd.f32 %v2285, %v2376
  %v2378 = vpop.f32.mrf.mxu0
  %2379 = vmatprep.mubr.f32.mxu0 0.0
  %v2380 = vand.u32 %v2098, 4294901760
  %v2381 = vsub.f32 %v2098, %v2380
  %2382 = vmatmul.mubr.f32.gmra.mxu0 %v2381
  %v2383 = vpop.f32.mrf.mxu0
  %v2384 = vadd.f32 %v2291, %v2383
  %v2385 = vpop.f32.mrf.mxu0
  %2386 = vmatprep.mubr.f32.mxu0 0.0
  %v2387 = vand.u32 %v2101, 4294901760
  %v2388 = vsub.f32 %v2101, %v2387
  %2389 = vmatmul.mubr.f32.gmra.mxu0 %v2388
  %v2390 = vpop.f32.mrf.mxu0
  %v2391 = vadd.f32 %v2297, %v2390
  %v2392 = vpop.f32.mrf.mxu0
  %2393 = vmatprep.mubr.f32.mxu0 0.0
  %v2394 = vand.u32 %v2104, 4294901760
  %v2395 = vsub.f32 %v2104, %v2394
  %2396 = vmatmul.mubr.f32.gmra.mxu0 %v2395
  %v2397 = vpop.f32.mrf.mxu0
  %v2398 = vadd.f32 %v2303, %v2397
  %v2399 = vpop.f32.mrf.mxu0
  %2400 = vdwg.mxu0
  %2401 = vmatprep.subr.mxu0 0.0
  %2402 = vmatpush1.msra.mxu0 0.0
  %2403 = vmatprep.subr.mxu0 0.0
  %2404 = vmatpush1.msra.mxu0 0.0
  %2405 = vmatprep.subr.mxu0 0.0
  %2406 = vmatpush1.msra.mxu0 0.0
  %2407 = vmatprep.subr.mxu0 0.0
  %2408 = vmatpush1.msra.mxu0 0.0
  %2409 = vmatprep.subr.mxu0 0.0
  %2410 = vmatpush1.msra.mxu0 0.0
  %2411 = vmatprep.subr.mxu0 0.0
  %2412 = vmatpush1.msra.mxu0 0.0
  %2413 = vmatprep.subr.mxu0 0.0
  %2414 = vmatpush1.msra.mxu0 0.0
  %2415 = vmatprep.subr.mxu0 0.0
  %2416 = vmatpush1.msra.mxu0 0.0
  %2417 = vmatprep.subr.mxu0 0.0
  %2418 = vmatpush1.msra.mxu0 0.0
  %2419 = vmatprep.subr.mxu0 0.0
  %2420 = vmatpush1.msra.mxu0 0.0
  %2421 = vmatprep.subr.mxu0 0.0
  %2422 = vmatpush1.msra.mxu0 0.0
  %2423 = vmatprep.subr.mxu0 0.0
  %2424 = vmatpush1.msra.mxu0 0.0
  %2425 = vmatprep.subr.mxu0 0.0
  %2426 = vmatpush1.msra.mxu0 0.0
  %2427 = vmatprep.subr.mxu0 0.0
  %2428 = vmatpush1.msra.mxu0 0.0
  %2429 = vmatprep.subr.mxu0 0.0
  %2430 = vmatpush1.msra.mxu0 0.0
  %2431 = vmatprep.subr.mxu0 0.0
  %v2432 = vand.u32 %v2086, 4294901760
  %2433 = vmatpush1.msra.mxu0 %v2432
  %2434 = vmatprep.subr.mxu0 0.0
  %2435 = vmatpush2.msra.mxu0 0.0
  %2436 = vmatprep.subr.mxu0 0.0
  %2437 = vmatpush2.msra.mxu0 0.0
  %2438 = vmatprep.subr.mxu0 0.0
  %2439 = vmatpush2.msra.mxu0 0.0
  %2440 = vmatprep.subr.mxu0 0.0
  %2441 = vmatpush2.msra.mxu0 0.0
  %2442 = vmatprep.subr.mxu0 0.0
  %2443 = vmatpush2.msra.mxu0 0.0
  %2444 = vmatprep.subr.mxu0 0.0
  %2445 = vmatpush2.msra.mxu0 0.0
  %2446 = vmatprep.subr.mxu0 0.0
  %2447 = vmatpush2.msra.mxu0 0.0
  %2448 = vmatprep.subr.mxu0 0.0
  %2449 = vmatpush2.msra.mxu0 0.0
  %2450 = vmatprep.subr.mxu0 0.0
  %2451 = vmatpush2.msra.mxu0 0.0
  %2452 = vmatprep.subr.mxu0 0.0
  %2453 = vmatpush2.msra.mxu0 0.0
  %2454 = vmatprep.subr.mxu0 0.0
  %2455 = vmatpush2.msra.mxu0 0.0
  %2456 = vmatprep.subr.mxu0 0.0
  %2457 = vmatpush2.msra.mxu0 0.0
  %2458 = vmatprep.subr.mxu0 0.0
  %2459 = vmatpush2.msra.mxu0 0.0
  %2460 = vmatprep.subr.mxu0 0.0
  %2461 = vmatpush2.msra.mxu0 0.0
  %2462 = vmatprep.subr.mxu0 0.0
  %2463 = vmatpush2.msra.mxu0 0.0
  %2464 = vmatprep.subr.mxu0 0.0
  %2465 = vmatpush2.msra.mxu0 0.0
  %2466 = vmatprep.mubr.f32.mxu0 0.0
  %v2467 = vand.u32 %v2095, 4294901760
  %v2468 = vsub.f32 %v2095, %v2467
  %v2469 = vand.u32 %v2468, 4294901760
  %2470 = vmatmul.mubr.f32.gmra.mxu0 %v2469
  %v2471 = vpop.f32.mrf.mxu0
  %v2472 = vadd.f32 %v2377, %v2471
  %v2473 = vpop.f32.mrf.mxu0
  %2474 = vmatprep.mubr.f32.mxu0 0.0
  %v2475 = vand.u32 %v2098, 4294901760
  %v2476 = vsub.f32 %v2098, %v2475
  %v2477 = vand.u32 %v2476, 4294901760
  %2478 = vmatmul.mubr.f32.gmra.mxu0 %v2477
  %v2479 = vpop.f32.mrf.mxu0
  %v2480 = vadd.f32 %v2384, %v2479
  %v2481 = vpop.f32.mrf.mxu0
  %2482 = vmatprep.mubr.f32.mxu0 0.0
  %v2483 = vand.u32 %v2101, 4294901760
  %v2484 = vsub.f32 %v2101, %v2483
  %v2485 = vand.u32 %v2484, 4294901760
  %2486 = vmatmul.mubr.f32.gmra.mxu0 %v2485
  %v2487 = vpop.f32.mrf.mxu0
  %v2488 = vadd.f32 %v2391, %v2487
  %v2489 = vpop.f32.mrf.mxu0
  %2490 = vmatprep.mubr.f32.mxu0 0.0
  %v2491 = vand.u32 %v2104, 4294901760
  %v2492 = vsub.f32 %v2104, %v2491
  %v2493 = vand.u32 %v2492, 4294901760
  %2494 = vmatmul.mubr.f32.gmra.mxu0 %v2493
  %v2495 = vpop.f32.mrf.mxu0
  %v2496 = vadd.f32 %v2398, %v2495
  %v2497 = vpop.f32.mrf.mxu0
  %2498 = vdwg.mxu0
  %2499 = vmatprep.subr.mxu0 0.0
  %2500 = vmatpush1.msra.mxu0 0.0
  %2501 = vmatprep.subr.mxu0 0.0
  %2502 = vmatpush1.msra.mxu0 0.0
  %2503 = vmatprep.subr.mxu0 0.0
  %2504 = vmatpush1.msra.mxu0 0.0
  %2505 = vmatprep.subr.mxu0 0.0
  %2506 = vmatpush1.msra.mxu0 0.0
  %2507 = vmatprep.subr.mxu0 0.0
  %2508 = vmatpush1.msra.mxu0 0.0
  %2509 = vmatprep.subr.mxu0 0.0
  %2510 = vmatpush1.msra.mxu0 0.0
  %2511 = vmatprep.subr.mxu0 0.0
  %2512 = vmatpush1.msra.mxu0 0.0
  %2513 = vmatprep.subr.mxu0 0.0
  %2514 = vmatpush1.msra.mxu0 0.0
  %2515 = vmatprep.subr.mxu0 0.0
  %2516 = vmatpush1.msra.mxu0 0.0
  %2517 = vmatprep.subr.mxu0 0.0
  %2518 = vmatpush1.msra.mxu0 0.0
  %2519 = vmatprep.subr.mxu0 0.0
  %2520 = vmatpush1.msra.mxu0 0.0
  %2521 = vmatprep.subr.mxu0 0.0
  %2522 = vmatpush1.msra.mxu0 0.0
  %2523 = vmatprep.subr.mxu0 0.0
  %2524 = vmatpush1.msra.mxu0 0.0
  %2525 = vmatprep.subr.mxu0 0.0
  %2526 = vmatpush1.msra.mxu0 0.0
  %2527 = vmatprep.subr.mxu0 0.0
  %2528 = vmatpush1.msra.mxu0 0.0
  %2529 = vmatprep.subr.mxu0 0.0
  %v2530 = vand.u32 %v2086, 4294901760
  %v2531 = vsub.f32 %v2086, %v2530
  %v2532 = vand.u32 %v2531, 4294901760
  %2533 = vmatpush1.msra.mxu0 %v2532
  %2534 = vmatprep.subr.mxu0 0.0
  %2535 = vmatpush2.msra.mxu0 0.0
  %2536 = vmatprep.subr.mxu0 0.0
  %2537 = vmatpush2.msra.mxu0 0.0
  %2538 = vmatprep.subr.mxu0 0.0
  %2539 = vmatpush2.msra.mxu0 0.0
  %2540 = vmatprep.subr.mxu0 0.0
  %2541 = vmatpush2.msra.mxu0 0.0
  %2542 = vmatprep.subr.mxu0 0.0
  %2543 = vmatpush2.msra.mxu0 0.0
  %2544 = vmatprep.subr.mxu0 0.0
  %2545 = vmatpush2.msra.mxu0 0.0
  %2546 = vmatprep.subr.mxu0 0.0
  %2547 = vmatpush2.msra.mxu0 0.0
  %2548 = vmatprep.subr.mxu0 0.0
  %2549 = vmatpush2.msra.mxu0 0.0
  %2550 = vmatprep.subr.mxu0 0.0
  %2551 = vmatpush2.msra.mxu0 0.0
  %2552 = vmatprep.subr.mxu0 0.0
  %2553 = vmatpush2.msra.mxu0 0.0
  %2554 = vmatprep.subr.mxu0 0.0
  %2555 = vmatpush2.msra.mxu0 0.0
  %2556 = vmatprep.subr.mxu0 0.0
  %2557 = vmatpush2.msra.mxu0 0.0
  %2558 = vmatprep.subr.mxu0 0.0
  %2559 = vmatpush2.msra.mxu0 0.0
  %2560 = vmatprep.subr.mxu0 0.0
  %2561 = vmatpush2.msra.mxu0 0.0
  %2562 = vmatprep.subr.mxu0 0.0
  %2563 = vmatpush2.msra.mxu0 0.0
  %2564 = vmatprep.subr.mxu0 0.0
  %2565 = vmatpush2.msra.mxu0 0.0
  %2566 = vmatprep.mubr.f32.mxu0 0.0
  %v2567 = vand.u32 %v2095, 4294901760
  %2568 = vmatmul.mubr.f32.gmra.mxu0 %v2567
  %v2569 = vpop.f32.mrf.mxu0
  %v2570 = vadd.f32 %v2472, %v2569
  %v2571 = vpop.f32.mrf.mxu0
  %2572 = vmatprep.mubr.f32.mxu0 0.0
  %v2573 = vand.u32 %v2098, 4294901760
  %2574 = vmatmul.mubr.f32.gmra.mxu0 %v2573
  %v2575 = vpop.f32.mrf.mxu0
  %v2576 = vadd.f32 %v2480, %v2575
  %v2577 = vpop.f32.mrf.mxu0
  %2578 = vmatprep.mubr.f32.mxu0 0.0
  %v2579 = vand.u32 %v2101, 4294901760
  %2580 = vmatmul.mubr.f32.gmra.mxu0 %v2579
  %v2581 = vpop.f32.mrf.mxu0
  %v2582 = vadd.f32 %v2488, %v2581
  %v2583 = vpop.f32.mrf.mxu0
  %2584 = vmatprep.mubr.f32.mxu0 0.0
  %v2585 = vand.u32 %v2104, 4294901760
  %2586 = vmatmul.mubr.f32.gmra.mxu0 %v2585
  %v2587 = vpop.f32.mrf.mxu0
  %v2588 = vadd.f32 %v2496, %v2587
  %v2589 = vpop.f32.mrf.mxu0
  %2590 = vdwg.mxu0
  %2591 = vmatprep.subr.mxu0 0.0
  %2592 = vmatpush1.msra.mxu0 0.0
  %2593 = vmatprep.subr.mxu0 0.0
  %2594 = vmatpush1.msra.mxu0 0.0
  %2595 = vmatprep.subr.mxu0 0.0
  %2596 = vmatpush1.msra.mxu0 0.0
  %2597 = vmatprep.subr.mxu0 0.0
  %2598 = vmatpush1.msra.mxu0 0.0
  %2599 = vmatprep.subr.mxu0 0.0
  %2600 = vmatpush1.msra.mxu0 0.0
  %2601 = vmatprep.subr.mxu0 0.0
  %2602 = vmatpush1.msra.mxu0 0.0
  %2603 = vmatprep.subr.mxu0 0.0
  %2604 = vmatpush1.msra.mxu0 0.0
  %2605 = vmatprep.subr.mxu0 0.0
  %2606 = vmatpush1.msra.mxu0 0.0
  %2607 = vmatprep.subr.mxu0 0.0
  %2608 = vmatpush1.msra.mxu0 0.0
  %2609 = vmatprep.subr.mxu0 0.0
  %2610 = vmatpush1.msra.mxu0 0.0
  %2611 = vmatprep.subr.mxu0 0.0
  %2612 = vmatpush1.msra.mxu0 0.0
  %2613 = vmatprep.subr.mxu0 0.0
  %2614 = vmatpush1.msra.mxu0 0.0
  %2615 = vmatprep.subr.mxu0 0.0
  %2616 = vmatpush1.msra.mxu0 0.0
  %2617 = vmatprep.subr.mxu0 0.0
  %2618 = vmatpush1.msra.mxu0 0.0
  %2619 = vmatprep.subr.mxu0 0.0
  %2620 = vmatpush1.msra.mxu0 0.0
  %2621 = vmatprep.subr.mxu0 0.0
  %v2622 = vand.u32 %v2086, 4294901760
  %2623 = vmatpush1.msra.mxu0 %v2622
  %2624 = vmatprep.subr.mxu0 0.0
  %2625 = vmatpush2.msra.mxu0 0.0
  %2626 = vmatprep.subr.mxu0 0.0
  %2627 = vmatpush2.msra.mxu0 0.0
  %2628 = vmatprep.subr.mxu0 0.0
  %2629 = vmatpush2.msra.mxu0 0.0
  %2630 = vmatprep.subr.mxu0 0.0
  %2631 = vmatpush2.msra.mxu0 0.0
  %2632 = vmatprep.subr.mxu0 0.0
  %2633 = vmatpush2.msra.mxu0 0.0
  %2634 = vmatprep.subr.mxu0 0.0
  %2635 = vmatpush2.msra.mxu0 0.0
  %2636 = vmatprep.subr.mxu0 0.0
  %2637 = vmatpush2.msra.mxu0 0.0
  %2638 = vmatprep.subr.mxu0 0.0
  %2639 = vmatpush2.msra.mxu0 0.0
  %2640 = vmatprep.subr.mxu0 0.0
  %2641 = vmatpush2.msra.mxu0 0.0
  %2642 = vmatprep.subr.mxu0 0.0
  %2643 = vmatpush2.msra.mxu0 0.0
  %2644 = vmatprep.subr.mxu0 0.0
  %2645 = vmatpush2.msra.mxu0 0.0
  %2646 = vmatprep.subr.mxu0 0.0
  %2647 = vmatpush2.msra.mxu0 0.0
  %2648 = vmatprep.subr.mxu0 0.0
  %2649 = vmatpush2.msra.mxu0 0.0
  %2650 = vmatprep.subr.mxu0 0.0
  %2651 = vmatpush2.msra.mxu0 0.0
  %2652 = vmatprep.subr.mxu0 0.0
  %2653 = vmatpush2.msra.mxu0 0.0
  %2654 = vmatprep.subr.mxu0 0.0
  %2655 = vmatpush2.msra.mxu0 0.0
  %2656 = vmatprep.mubr.f32.mxu0 0.0
  %v2657 = vand.u32 %v2095, 4294901760
  %2658 = vmatmul.mubr.f32.gmra.mxu0 %v2657
  %v2659 = vpop.f32.mrf.mxu0
  %v2660 = vadd.f32 %v2570, %v2659
  %v2661 = vpop.f32.mrf.mxu0
  %2662 = vmatprep.mubr.f32.mxu0 0.0
  %v2663 = vand.u32 %v2098, 4294901760
  %2664 = vmatmul.mubr.f32.gmra.mxu0 %v2663
  %v2665 = vpop.f32.mrf.mxu0
  %v2666 = vadd.f32 %v2576, %v2665
  %v2667 = vpop.f32.mrf.mxu0
  %2668 = vmatprep.mubr.f32.mxu0 0.0
  %v2669 = vand.u32 %v2101, 4294901760
  %2670 = vmatmul.mubr.f32.gmra.mxu0 %v2669
  %v2671 = vpop.f32.mrf.mxu0
  %v2672 = vadd.f32 %v2582, %v2671
  %v2673 = vpop.f32.mrf.mxu0
  %2674 = vmatprep.mubr.f32.mxu0 0.0
  %v2675 = vand.u32 %v2104, 4294901760
  %2676 = vmatmul.mubr.f32.gmra.mxu0 %v2675
  %v2677 = vpop.f32.mrf.mxu0
  %v2678 = vadd.f32 %v2588, %v2677
  %v2679 = vpop.f32.mrf.mxu0
  %2680 = vdwg.mxu0
  %v2681 = vxor.u32 %v2660, 2147483648
  %v2682 = vxor.u32 %v2666, 2147483648
  %v2683 = vxor.u32 %v2672, 2147483648
  %v2684 = vxor.u32 %v2678, 2147483648
  %v2685 = vmul.f32 %v2681, 1.442695
  %v2686 = vpow.pop %v2685
  %v2687 = vmul.f32 %v2682, 1.442695
  %v2688 = vpow.pop %v2687
  %v2689 = vmul.f32 %v2683, 1.442695
  %v2690 = vpow.pop %v2689
  %v2691 = vmul.f32 %v2684, 1.442695
  %v2692 = vpow.pop %v2691
  %v2693 = vadd.f32 %v2686, 1.0
  %v2694 = vadd.f32 %v2688, 1.0
  %v2695 = vadd.f32 %v2690, 1.0
  %v2696 = vadd.f32 %v2692, 1.0
  %v2697 = vrcp.pop %v2693
  %v2698 = vmul.f32 1.0, %v2697
  %v2699 = vrcp.pop %v2694
  %v2700 = vmul.f32 1.0, %v2699
  %v2701 = vrcp.pop %v2695
  %v2702 = vmul.f32 1.0, %v2701
  %v2703 = vrcp.pop %v2696
  %v2704 = vmul.f32 1.0, %v2703
  %2705 = vst.msk [vmem:[%s11] sm:$0xff] %vm52, %v2698
  %2706 = vst.msk [vmem:[%s11 + $0x8] sm:$0xff] %vm52, %v2700
  %2707 = vst.msk [vmem:[%s11 + $0x10] sm:$0xff] %vm52, %v2702
  %2708 = vst.msk [vmem:[%s11 + $0x18] sm:$0xff] %vm52, %v2704
  // Predicated region
  $region42: #{ca_att_block.4} parent=0 // pred_check
    _
  $region43: #{ca_att_block.4} parent=0 // pred_check_branch
    %2710 = sbr.rel (0) target = $region45
  $region44: #{ca_att_block.4} parent=0 // pred_region
    _
  $region45: #{ca_att_block.4} parent=0 // pred_fallthru
    _
  // Predicated region
  $region46: #{ca_att_block.4} parent=0 // pred_check
    _
  $region47: #{ca_att_block.4} parent=0 // pred_check_branch
    %2712 = sbr.rel (0) target = $region49
  $region48: #{ca_att_block.4} parent=0 // pred_region
    _
  $region49: #{ca_att_block.4} parent=0 // pred_fallthru
    _
  // Predicated region
  $region50: #{ca_att_block.4} parent=0 // pred_check
    _
  $region51: #{ca_att_block.4} parent=0 // pred_check_branch
    %2714 = sbr.rel (0) target = $region53
  $region52: #{ca_att_block.4} parent=0 // pred_region
    _
  $region53: #{ca_att_block.4} parent=0 // pred_fallthru
    _
  // Predicated region
  $region54: #{ca_att_block.4} parent=0 // pred_check
    _
  $region55: #{ca_att_block.4} parent=0 // pred_check_branch
    %2716 = sbr.rel (0) target = $region57
  $region56: #{ca_att_block.4} parent=0 // pred_region
    _
  $region57: #{ca_att_block.4} parent=0 // pred_fallthru
    _

</llo_original>
